<compile_context>
chip_gen: v7x
topology: tpu7x:2x2x1
jax: 0.10.0
libtpu: 0.0.40
codegen_flags: <defaults>
</compile_context>

<pallas_src>
import functools

import jax
import jax.numpy as jnp
import numpy as np
from jax.experimental import pallas as pl
from jax.experimental.pallas import tpu as pltpu

OUT_SEQ_LENGTH = 5
SUBLANE = 8  # f32 sublane multiple


# ----------------------------------------------------------------------------
# Pallas kernel: fused 2-layer LSTM recurrence + batched linear head.
# All operands are VMEM-resident (tiny shapes); the recurrence is fully
# unrolled inside one kernel invocation with state kept in vregs.
# ----------------------------------------------------------------------------
def _lstm_stack_kernel(
    gx1_ref,            # (T, Bp, 4*H1)  precomputed x @ W_ih1^T + (b_ih1+b_hh1)
    h01_ref, c01_ref,   # (Bp, H1)       initial state, layer 1
    h02_ref, c02_ref,   # (Bp, H2)       initial state, layer 2
    whh1_ref,           # (H1, 4*H1)     W_hh1^T
    w2_ref,             # (H1+H2, 4*H2)  fused [W_ih2; W_hh2]^T
    b2_ref,             # (1, 4*H2)      b_ih2 + b_hh2
    wlin_ref,           # (H2, out_dim)  W_lin^T
    blin_ref,           # (1, out_dim)
    o_ref,              # (T_out*Bp, out_dim)
    h2all_ref,          # VMEM scratch: (T_out*Bp, H2)
):
    T, Bp, _ = gx1_ref.shape
    H1 = h01_ref.shape[1]
    H2 = h02_ref.shape[1]

    # Hoist all weight/bias loads out of the recurrence (whole set fits in
    # the register file) and pre-broadcast the layer-2 bias once.
    whh1 = whh1_ref[...]
    w2 = w2_ref[...]
    b2 = jnp.broadcast_to(b2_ref[...], (Bp, 4 * H2))

    # State carried in registers across the unrolled loop (no VMEM scratch).
    h1 = h01_ref[...]
    c1 = c01_ref[...]
    h2 = h02_ref[...]
    c2 = c02_ref[...]

    def cell(z, c_prev, H):
        # Whole-tile activations (2 EUP pushes per cell), slice afterwards.
        sig = jax.nn.sigmoid(z)
        tnh = jnp.tanh(z)
        i = sig[:, 0 * H:1 * H]
        f = sig[:, 1 * H:2 * H]
        g = tnh[:, 2 * H:3 * H]
        o = sig[:, 3 * H:4 * H]
        c = f * c_prev + i * g
        h = o * jnp.tanh(c)
        return h, c

    # Fully unrolled time loop: T is static and small, so there is no
    # per-iteration branch and indices below are static.
    for t in range(T):
        # ---- layer 1: input projection was hoisted; one recurrent matmul ----
        z1 = gx1_ref[t] + jnp.dot(h1, whh1, preferred_element_type=jnp.float32)
        h1, c1 = cell(z1, c1, H1)

        # ---- (dropout2d with p == 0 is the identity) ----

        # ---- layer 2: fused [x; h] @ [W_ih; W_hh] -> one matmul per step ----
        z2 = jnp.dot(jnp.concatenate([h1, h2], axis=1), w2,
                     preferred_element_type=jnp.float32) + b2
        h2, c2 = cell(z2, c2, H2)

        if t >= OUT_SEQ_LENGTH:
            row = (t - OUT_SEQ_LENGTH) * Bp       # static, 8-aligned
            h2all_ref[pl.ds(row, Bp), :] = h2

    # Batched linear head after the recurrence: one matmul + one dense store
    # instead of T tiny masked stores.
    y = (jnp.dot(h2all_ref[...], wlin_ref[...],
                 preferred_element_type=jnp.float32) + blin_ref[...])
    o_ref[...] = y.astype(o_ref.dtype)


def lstm_stack_forward(x_btd, h01, c01, h02, c02, params, drop_mask=0.0):
    """Runs the fused LSTM stack.

    x_btd: (B, T, inp_dim) batch-first, as in the PyTorch module.
    Returns: (B, T - OUT_SEQ_LENGTH, out_dim).
    """
    del drop_mask  # identity path (p == 0); see TODO at top of file.
    (wih1_t, whh1_t, b1, wih2_t, whh2_t, b2, wlin_t, blin) = params

    B, T, D = x_btd.shape
    H1 = h01.shape[1]
    H2 = h02.shape[1]
    out_dim = wlin_t.shape[1]
    T_out = T - OUT_SEQ_LENGTH
    assert T_out > 0

    # Pad batch to the f32 sublane multiple so every vreg row carries data
    # and loads/stores are unmasked.  Padding is sliced off afterwards.
    Bp = ((B + SUBLANE - 1) // SUBLANE) * SUBLANE
    pad = Bp - B
    x_p = jnp.pad(x_btd, ((0, pad), (0, 0), (0, 0)))
    h01p = jnp.pad(h01, ((0, pad), (0, 0)))
    c01p = jnp.pad(c01, ((0, pad), (0, 0)))
    h02p = jnp.pad(h02, ((0, pad), (0, 0)))
    c02p = jnp.pad(c02, ((0, pad), (0, 0)))

    # Hoist the time-parallel layer-1 input projection (with bias pre-summed)
    # out of the recurrence: one (T*Bp, D) @ (D, 4*H1) matmul, time-major.
    gx1 = jnp.einsum("btd,dg->tbg", x_p, wih1_t) + b1       # (T, Bp, 4*H1)

    # Fuse layer-2 input & recurrent weights into one (H1+H2, 4*H2) matrix.
    w2 = jnp.concatenate([wih2_t, whh2_t], axis=0)

    vmem_spec = pl.BlockSpec(memory_space=pltpu.MemorySpace.VMEM)

    out_flat = pl.pallas_call(
        _lstm_stack_kernel,
        out_shape=jax.ShapeDtypeStruct((T_out * Bp, out_dim), jnp.float32),
        in_specs=[vmem_spec] * 10,
        out_specs=vmem_spec,
        scratch_shapes=[pltpu.VMEM((T_out * Bp, H2), jnp.float32)],
    )(gx1, h01p, c01p, h02p, c02p, whh1_t, w2, b2, wlin_t, blin)

    out_tbo = out_flat.reshape(T_out, Bp, out_dim)[:, :B, :]
    return jnp.transpose(out_tbo, (1, 0, 2))                # (B, T_out, out_dim)


# ----------------------------------------------------------------------------
# Deterministic parameter construction (mirrors torch.nn.LSTM / nn.Linear init
# ranges) and a pure-JAX reference for a correctness check.
# ----------------------------------------------------------------------------
def make_params(key, inp_dim, h1, h2, out_dim):
    ks = jax.random.split(key, 10)

    def unif(k, shape, bound):
        return jax.random.uniform(k, shape, jnp.float32, -bound, bound)

    s1 = 1.0 / np.sqrt(h1)
    s2 = 1.0 / np.sqrt(h2)
    wih1 = unif(ks[0], (4 * h1, inp_dim), s1)
    whh1 = unif(ks[1], (4 * h1, h1), s1)
    b1 = unif(ks[2], (4 * h1,), s1) + unif(ks[3], (4 * h1,), s1)  # b_ih + b_hh
    wih2 = unif(ks[4], (4 * h2, h1), s2)
    whh2 = unif(ks[5], (4 * h2, h2), s2)
    b2 = unif(ks[6], (4 * h2,), s2) + unif(ks[7], (4 * h2,), s2)
    slin = 1.0 / np.sqrt(h2)
    wlin = unif(ks[8], (out_dim, h2), slin)
    blin = unif(ks[9], (out_dim,), slin)

    # Kernel-ready (pre-transposed, 2-D biases).
    kernel_params = (wih1.T, whh1.T, b1[None, :],
                     wih2.T, whh2.T, b2[None, :],
                     wlin.T, blin[None, :])
    raw_params = (wih1, whh1, b1, wih2, whh2, b2, wlin, blin)
    return kernel_params, raw_params


def xavier_normal_state(key, batch, hidden):
    # torch.nn.init.xavier_normal_ on a (1, batch, hidden) tensor:
    #   fan_in = batch * hidden, fan_out = 1 * hidden
    std = np.sqrt(2.0 / (batch * hidden + hidden)).astype(np.float32)
    return std * jax.random.normal(key, (batch, hidden), jnp.float32)


def lstm_layer_ref(x, h0, c0, wih, whh, b):
    """Pure-JAX reference for one batch-first LSTM layer (torch gate order)."""
    B, T, _ = x.shape
    H = h0.shape[1]
    h, c = h0, c0
    outs = []
    for t in range(T):
        g = x[:, t, :] @ wih.T + h @ whh.T + b
        i = jax.nn.sigmoid(g[:, 0 * H:1 * H])
        f = jax.nn.sigmoid(g[:, 1 * H:2 * H])
        gg = jnp.tanh(g[:, 2 * H:3 * H])
        o = jax.nn.sigmoid(g[:, 3 * H:4 * H])
        c = f * c + i * gg
        h = o * jnp.tanh(c)
        outs.append(h)
    return jnp.stack(outs, axis=1)


def model_ref(x, h01, c01, h02, c02, raw_params):
    (wih1, whh1, b1, wih2, whh2, b2, wlin, blin) = raw_params
    y1 = lstm_layer_ref(x, h01, c01, wih1, whh1, b1)
    y2 = lstm_layer_ref(y1, h02, c02, wih2, whh2, b2)
    return y2[:, OUT_SEQ_LENGTH:, :] @ wlin.T + blin


if __name__ == "__main__":
    # Small shapes consistent with the module's forward.
    B, T = 2, 12
    INP_DIM, H1, H2, OUT_DIM = 4, 32, 32, 2
    DROP_MASK = 0.0  # dropout probability -> identity path

    key = jax.random.PRNGKey(0)
    k_x, k_p, k_h1, k_c1, k_h2, k_c2 = jax.random.split(key, 6)

    x = jax.random.normal(k_x, (B, T, INP_DIM), jnp.float32)
    kernel_params, raw_params = make_params(k_p, INP_DIM, H1, H2, OUT_DIM)

    # Deterministic stand-in for init_hidden's xavier_normal hidden states.
    h01 = xavier_normal_state(k_h1, B, H1)
    c01 = xavier_normal_state(k_c1, B, H1)
    h02 = xavier_normal_state(k_h2, B, H2)
    c02 = xavier_normal_state(k_c2, B, H2)

    fwd = jax.jit(functools.partial(lstm_stack_forward, drop_mask=DROP_MASK))
    out = fwd(x, h01, c01, h02, c02, kernel_params)
    out = jax.block_until_ready(out)

    assert out.shape == (B, T - OUT_SEQ_LENGTH, OUT_DIM), out.shape

    ref = model_ref(x, h01, c01, h02, c02, raw_params)
    np.testing.assert_allclose(np.asarray(out), np.asarray(ref),
                               rtol=1e-5, atol=1e-5)

    print("KERNEL_OK")
</pallas_src>

<mosaic_0001>
module attributes {stable_mosaic.version = 11 : i64} {
  func.func @_lstm_stack_kernel(%arg0: memref<12x8x128xf32, #tpu.memory_space<vmem>>, %arg1: memref<8x32xf32, #tpu.memory_space<vmem>>, %arg2: memref<8x32xf32, #tpu.memory_space<vmem>>, %arg3: memref<8x32xf32, #tpu.memory_space<vmem>>, %arg4: memref<8x32xf32, #tpu.memory_space<vmem>>, %arg5: memref<32x128xf32, #tpu.memory_space<vmem>>, %arg6: memref<64x128xf32, #tpu.memory_space<vmem>>, %arg7: memref<1x128xf32, #tpu.memory_space<vmem>>, %arg8: memref<32x2xf32, #tpu.memory_space<vmem>>, %arg9: memref<1x2xf32, #tpu.memory_space<vmem>>, %arg10: memref<56x2xf32, #tpu.memory_space<vmem>>, %arg11: memref<56x32xf32, #tpu.memory_space<vmem>>) attributes {dimension_semantics = [], scalar_prefetch = 0 : i64, scratch_operands = 1 : i64, tpu.core_type = #tpu.core_type<tc>} {
    %c0 = arith.constant 0 : index
    %c0_0 = arith.constant 0 : index
    %0 = vector.load %arg5[%c0, %c0_0] : memref<32x128xf32, #tpu.memory_space<vmem>>, vector<32x128xf32>
    %c0_1 = arith.constant 0 : index
    %c0_2 = arith.constant 0 : index
    %1 = vector.load %arg6[%c0_1, %c0_2] : memref<64x128xf32, #tpu.memory_space<vmem>>, vector<64x128xf32>
    %c0_3 = arith.constant 0 : index
    %c0_4 = arith.constant 0 : index
    %2 = vector.load %arg7[%c0_3, %c0_4] : memref<1x128xf32, #tpu.memory_space<vmem>>, vector<1x128xf32>
    %3 = vector.shape_cast %2 : vector<1x128xf32> to vector<1x128xf32>
    %4 = vector.broadcast %3 : vector<1x128xf32> to vector<8x128xf32>
    %c0_5 = arith.constant 0 : index
    %c0_6 = arith.constant 0 : index
    %5 = vector.load %arg1[%c0_5, %c0_6] : memref<8x32xf32, #tpu.memory_space<vmem>>, vector<8x32xf32>
    %c0_7 = arith.constant 0 : index
    %c0_8 = arith.constant 0 : index
    %6 = vector.load %arg2[%c0_7, %c0_8] : memref<8x32xf32, #tpu.memory_space<vmem>>, vector<8x32xf32>
    %c0_9 = arith.constant 0 : index
    %c0_10 = arith.constant 0 : index
    %7 = vector.load %arg3[%c0_9, %c0_10] : memref<8x32xf32, #tpu.memory_space<vmem>>, vector<8x32xf32>
    %c0_11 = arith.constant 0 : index
    %c0_12 = arith.constant 0 : index
    %8 = vector.load %arg4[%c0_11, %c0_12] : memref<8x32xf32, #tpu.memory_space<vmem>>, vector<8x32xf32>
    %c0_13 = arith.constant 0 : index
    %c0_14 = arith.constant 0 : index
    %c0_15 = arith.constant 0 : index
    %9 = vector.load %arg0[%c0_13, %c0_14, %c0_15] : memref<12x8x128xf32, #tpu.memory_space<vmem>>, vector<1x8x128xf32>
    %10 = vector.shape_cast %9 : vector<1x8x128xf32> to vector<8x128xf32>
    %cst = arith.constant dense<0.000000e+00> : vector<8x128xf32>
    %11 = tpu.matmul %5, %0, %cst {dimension_numbers = #tpu.dot_dimension_numbers<[1], [0], [0], [1], [0, 0, 1, 1], [], []>} : vector<8x32xf32>, vector<32x128xf32>, vector<8x128xf32> -> vector<8x128xf32>
    %12 = arith.addf %10, %11 : vector<8x128xf32>
    %13 = arith.negf %12 : vector<8x128xf32>
    %14 = math.exp %13 : vector<8x128xf32>
    %cst_16 = arith.constant 1.000000e+00 : f32
    %15 = vector.broadcast %cst_16 : f32 to vector<8x128xf32>
    %16 = arith.addf %15, %14 : vector<8x128xf32>
    %17 = arith.divf %15, %16 : vector<8x128xf32>
    %18 = math.tanh %12 : vector<8x128xf32>
    %19 = vector.extract_strided_slice %17 {offsets = [0, 0], sizes = [8, 32], strides = [1, 1]} : vector<8x128xf32> to vector<8x32xf32>
    %20 = vector.extract_strided_slice %17 {offsets = [0, 32], sizes = [8, 32], strides = [1, 1]} : vector<8x128xf32> to vector<8x32xf32>
    %21 = vector.extract_strided_slice %18 {offsets = [0, 64], sizes = [8, 32], strides = [1, 1]} : vector<8x128xf32> to vector<8x32xf32>
    %22 = vector.extract_strided_slice %17 {offsets = [0, 96], sizes = [8, 32], strides = [1, 1]} : vector<8x128xf32> to vector<8x32xf32>
    %23 = arith.mulf %20, %6 : vector<8x32xf32>
    %24 = arith.mulf %19, %21 : vector<8x32xf32>
    %25 = arith.addf %23, %24 : vector<8x32xf32>
    %26 = math.tanh %25 : vector<8x32xf32>
    %27 = arith.mulf %22, %26 : vector<8x32xf32>
    %28 = tpu.concatenate %27, %7 in 1 : vector<8x32xf32>, vector<8x32xf32> -> vector<8x64xf32>
    %cst_17 = arith.constant dense<0.000000e+00> : vector<8x128xf32>
    %29 = tpu.matmul %28, %1, %cst_17 {dimension_numbers = #tpu.dot_dimension_numbers<[1], [0], [0], [1], [0, 0, 1, 1], [], []>} : vector<8x64xf32>, vector<64x128xf32>, vector<8x128xf32> -> vector<8x128xf32>
    %30 = arith.addf %29, %4 : vector<8x128xf32>
    %31 = arith.negf %30 : vector<8x128xf32>
    %32 = math.exp %31 : vector<8x128xf32>
    %cst_18 = arith.constant 1.000000e+00 : f32
    %33 = vector.broadcast %cst_18 : f32 to vector<8x128xf32>
    %34 = arith.addf %33, %32 : vector<8x128xf32>
    %35 = arith.divf %33, %34 : vector<8x128xf32>
    %36 = math.tanh %30 : vector<8x128xf32>
    %37 = vector.extract_strided_slice %35 {offsets = [0, 0], sizes = [8, 32], strides = [1, 1]} : vector<8x128xf32> to vector<8x32xf32>
    %38 = vector.extract_strided_slice %35 {offsets = [0, 32], sizes = [8, 32], strides = [1, 1]} : vector<8x128xf32> to vector<8x32xf32>
    %39 = vector.extract_strided_slice %36 {offsets = [0, 64], sizes = [8, 32], strides = [1, 1]} : vector<8x128xf32> to vector<8x32xf32>
    %40 = vector.extract_strided_slice %35 {offsets = [0, 96], sizes = [8, 32], strides = [1, 1]} : vector<8x128xf32> to vector<8x32xf32>
    %41 = arith.mulf %38, %8 : vector<8x32xf32>
    %42 = arith.mulf %37, %39 : vector<8x32xf32>
    %43 = arith.addf %41, %42 : vector<8x32xf32>
    %44 = math.tanh %43 : vector<8x32xf32>
    %45 = arith.mulf %40, %44 : vector<8x32xf32>
    %c1 = arith.constant 1 : index
    %c0_19 = arith.constant 0 : index
    %c0_20 = arith.constant 0 : index
    %46 = vector.load %arg0[%c1, %c0_19, %c0_20] : memref<12x8x128xf32, #tpu.memory_space<vmem>>, vector<1x8x128xf32>
    %47 = vector.shape_cast %46 : vector<1x8x128xf32> to vector<8x128xf32>
    %cst_21 = arith.constant dense<0.000000e+00> : vector<8x128xf32>
    %48 = tpu.matmul %27, %0, %cst_21 {dimension_numbers = #tpu.dot_dimension_numbers<[1], [0], [0], [1], [0, 0, 1, 1], [], []>} : vector<8x32xf32>, vector<32x128xf32>, vector<8x128xf32> -> vector<8x128xf32>
    %49 = arith.addf %47, %48 : vector<8x128xf32>
    %50 = arith.negf %49 : vector<8x128xf32>
    %51 = math.exp %50 : vector<8x128xf32>
    %cst_22 = arith.constant 1.000000e+00 : f32
    %52 = vector.broadcast %cst_22 : f32 to vector<8x128xf32>
    %53 = arith.addf %52, %51 : vector<8x128xf32>
    %54 = arith.divf %52, %53 : vector<8x128xf32>
    %55 = math.tanh %49 : vector<8x128xf32>
    %56 = vector.extract_strided_slice %54 {offsets = [0, 0], sizes = [8, 32], strides = [1, 1]} : vector<8x128xf32> to vector<8x32xf32>
    %57 = vector.extract_strided_slice %54 {offsets = [0, 32], sizes = [8, 32], strides = [1, 1]} : vector<8x128xf32> to vector<8x32xf32>
    %58 = vector.extract_strided_slice %55 {offsets = [0, 64], sizes = [8, 32], strides = [1, 1]} : vector<8x128xf32> to vector<8x32xf32>
    %59 = vector.extract_strided_slice %54 {offsets = [0, 96], sizes = [8, 32], strides = [1, 1]} : vector<8x128xf32> to vector<8x32xf32>
    %60 = arith.mulf %57, %25 : vector<8x32xf32>
    %61 = arith.mulf %56, %58 : vector<8x32xf32>
    %62 = arith.addf %60, %61 : vector<8x32xf32>
    %63 = math.tanh %62 : vector<8x32xf32>
    %64 = arith.mulf %59, %63 : vector<8x32xf32>
    %65 = tpu.concatenate %64, %45 in 1 : vector<8x32xf32>, vector<8x32xf32> -> vector<8x64xf32>
    %cst_23 = arith.constant dense<0.000000e+00> : vector<8x128xf32>
    %66 = tpu.matmul %65, %1, %cst_23 {dimension_numbers = #tpu.dot_dimension_numbers<[1], [0], [0], [1], [0, 0, 1, 1], [], []>} : vector<8x64xf32>, vector<64x128xf32>, vector<8x128xf32> -> vector<8x128xf32>
    %67 = arith.addf %66, %4 : vector<8x128xf32>
    %68 = arith.negf %67 : vector<8x128xf32>
    %69 = math.exp %68 : vector<8x128xf32>
    %cst_24 = arith.constant 1.000000e+00 : f32
    %70 = vector.broadcast %cst_24 : f32 to vector<8x128xf32>
    %71 = arith.addf %70, %69 : vector<8x128xf32>
    %72 = arith.divf %70, %71 : vector<8x128xf32>
    %73 = math.tanh %67 : vector<8x128xf32>
    %74 = vector.extract_strided_slice %72 {offsets = [0, 0], sizes = [8, 32], strides = [1, 1]} : vector<8x128xf32> to vector<8x32xf32>
    %75 = vector.extract_strided_slice %72 {offsets = [0, 32], sizes = [8, 32], strides = [1, 1]} : vector<8x128xf32> to vector<8x32xf32>
    %76 = vector.extract_strided_slice %73 {offsets = [0, 64], sizes = [8, 32], strides = [1, 1]} : vector<8x128xf32> to vector<8x32xf32>
    %77 = vector.extract_strided_slice %72 {offsets = [0, 96], sizes = [8, 32], strides = [1, 1]} : vector<8x128xf32> to vector<8x32xf32>
    %78 = arith.mulf %75, %43 : vector<8x32xf32>
    %79 = arith.mulf %74, %76 : vector<8x32xf32>
    %80 = arith.addf %78, %79 : vector<8x32xf32>
    %81 = math.tanh %80 : vector<8x32xf32>
    %82 = arith.mulf %77, %81 : vector<8x32xf32>
    %c2 = arith.constant 2 : index
    %c0_25 = arith.constant 0 : index
    %c0_26 = arith.constant 0 : index
    %83 = vector.load %arg0[%c2, %c0_25, %c0_26] : memref<12x8x128xf32, #tpu.memory_space<vmem>>, vector<1x8x128xf32>
    %84 = vector.shape_cast %83 : vector<1x8x128xf32> to vector<8x128xf32>
    %cst_27 = arith.constant dense<0.000000e+00> : vector<8x128xf32>
    %85 = tpu.matmul %64, %0, %cst_27 {dimension_numbers = #tpu.dot_dimension_numbers<[1], [0], [0], [1], [0, 0, 1, 1], [], []>} : vector<8x32xf32>, vector<32x128xf32>, vector<8x128xf32> -> vector<8x128xf32>
    %86 = arith.addf %84, %85 : vector<8x128xf32>
    %87 = arith.negf %86 : vector<8x128xf32>
    %88 = math.exp %87 : vector<8x128xf32>
    %cst_28 = arith.constant 1.000000e+00 : f32
    %89 = vector.broadcast %cst_28 : f32 to vector<8x128xf32>
    %90 = arith.addf %89, %88 : vector<8x128xf32>
    %91 = arith.divf %89, %90 : vector<8x128xf32>
    %92 = math.tanh %86 : vector<8x128xf32>
    %93 = vector.extract_strided_slice %91 {offsets = [0, 0], sizes = [8, 32], strides = [1, 1]} : vector<8x128xf32> to vector<8x32xf32>
    %94 = vector.extract_strided_slice %91 {offsets = [0, 32], sizes = [8, 32], strides = [1, 1]} : vector<8x128xf32> to vector<8x32xf32>
    %95 = vector.extract_strided_slice %92 {offsets = [0, 64], sizes = [8, 32], strides = [1, 1]} : vector<8x128xf32> to vector<8x32xf32>
    %96 = vector.extract_strided_slice %91 {offsets = [0, 96], sizes = [8, 32], strides = [1, 1]} : vector<8x128xf32> to vector<8x32xf32>
    %97 = arith.mulf %94, %62 : vector<8x32xf32>
    %98 = arith.mulf %93, %95 : vector<8x32xf32>
    %99 = arith.addf %97, %98 : vector<8x32xf32>
    %100 = math.tanh %99 : vector<8x32xf32>
    %101 = arith.mulf %96, %100 : vector<8x32xf32>
    %102 = tpu.concatenate %101, %82 in 1 : vector<8x32xf32>, vector<8x32xf32> -> vector<8x64xf32>
    %cst_29 = arith.constant dense<0.000000e+00> : vector<8x128xf32>
    %103 = tpu.matmul %102, %1, %cst_29 {dimension_numbers = #tpu.dot_dimension_numbers<[1], [0], [0], [1], [0, 0, 1, 1], [], []>} : vector<8x64xf32>, vector<64x128xf32>, vector<8x128xf32> -> vector<8x128xf32>
    %104 = arith.addf %103, %4 : vector<8x128xf32>
    %105 = arith.negf %104 : vector<8x128xf32>
    %106 = math.exp %105 : vector<8x128xf32>
    %cst_30 = arith.constant 1.000000e+00 : f32
    %107 = vector.broadcast %cst_30 : f32 to vector<8x128xf32>
    %108 = arith.addf %107, %106 : vector<8x128xf32>
    %109 = arith.divf %107, %108 : vector<8x128xf32>
    %110 = math.tanh %104 : vector<8x128xf32>
    %111 = vector.extract_strided_slice %109 {offsets = [0, 0], sizes = [8, 32], strides = [1, 1]} : vector<8x128xf32> to vector<8x32xf32>
    %112 = vector.extract_strided_slice %109 {offsets = [0, 32], sizes = [8, 32], strides = [1, 1]} : vector<8x128xf32> to vector<8x32xf32>
    %113 = vector.extract_strided_slice %110 {offsets = [0, 64], sizes = [8, 32], strides = [1, 1]} : vector<8x128xf32> to vector<8x32xf32>
    %114 = vector.extract_strided_slice %109 {offsets = [0, 96], sizes = [8, 32], strides = [1, 1]} : vector<8x128xf32> to vector<8x32xf32>
    %115 = arith.mulf %112, %80 : vector<8x32xf32>
    %116 = arith.mulf %111, %113 : vector<8x32xf32>
    %117 = arith.addf %115, %116 : vector<8x32xf32>
    %118 = math.tanh %117 : vector<8x32xf32>
    %119 = arith.mulf %114, %118 : vector<8x32xf32>
    %c3 = arith.constant 3 : index
    %c0_31 = arith.constant 0 : index
    %c0_32 = arith.constant 0 : index
    %120 = vector.load %arg0[%c3, %c0_31, %c0_32] : memref<12x8x128xf32, #tpu.memory_space<vmem>>, vector<1x8x128xf32>
    %121 = vector.shape_cast %120 : vector<1x8x128xf32> to vector<8x128xf32>
    %cst_33 = arith.constant dense<0.000000e+00> : vector<8x128xf32>
    %122 = tpu.matmul %101, %0, %cst_33 {dimension_numbers = #tpu.dot_dimension_numbers<[1], [0], [0], [1], [0, 0, 1, 1], [], []>} : vector<8x32xf32>, vector<32x128xf32>, vector<8x128xf32> -> vector<8x128xf32>
    %123 = arith.addf %121, %122 : vector<8x128xf32>
    %124 = arith.negf %123 : vector<8x128xf32>
    %125 = math.exp %124 : vector<8x128xf32>
    %cst_34 = arith.constant 1.000000e+00 : f32
    %126 = vector.broadcast %cst_34 : f32 to vector<8x128xf32>
    %127 = arith.addf %126, %125 : vector<8x128xf32>
    %128 = arith.divf %126, %127 : vector<8x128xf32>
    %129 = math.tanh %123 : vector<8x128xf32>
    %130 = vector.extract_strided_slice %128 {offsets = [0, 0], sizes = [8, 32], strides = [1, 1]} : vector<8x128xf32> to vector<8x32xf32>
    %131 = vector.extract_strided_slice %128 {offsets = [0, 32], sizes = [8, 32], strides = [1, 1]} : vector<8x128xf32> to vector<8x32xf32>
    %132 = vector.extract_strided_slice %129 {offsets = [0, 64], sizes = [8, 32], strides = [1, 1]} : vector<8x128xf32> to vector<8x32xf32>
    %133 = vector.extract_strided_slice %128 {offsets = [0, 96], sizes = [8, 32], strides = [1, 1]} : vector<8x128xf32> to vector<8x32xf32>
    %134 = arith.mulf %131, %99 : vector<8x32xf32>
    %135 = arith.mulf %130, %132 : vector<8x32xf32>
    %136 = arith.addf %134, %135 : vector<8x32xf32>
    %137 = math.tanh %136 : vector<8x32xf32>
    %138 = arith.mulf %133, %137 : vector<8x32xf32>
    %139 = tpu.concatenate %138, %119 in 1 : vector<8x32xf32>, vector<8x32xf32> -> vector<8x64xf32>
    %cst_35 = arith.constant dense<0.000000e+00> : vector<8x128xf32>
    %140 = tpu.matmul %139, %1, %cst_35 {dimension_numbers = #tpu.dot_dimension_numbers<[1], [0], [0], [1], [0, 0, 1, 1], [], []>} : vector<8x64xf32>, vector<64x128xf32>, vector<8x128xf32> -> vector<8x128xf32>
    %141 = arith.addf %140, %4 : vector<8x128xf32>
    %142 = arith.negf %141 : vector<8x128xf32>
    %143 = math.exp %142 : vector<8x128xf32>
    %cst_36 = arith.constant 1.000000e+00 : f32
    %144 = vector.broadcast %cst_36 : f32 to vector<8x128xf32>
    %145 = arith.addf %144, %143 : vector<8x128xf32>
    %146 = arith.divf %144, %145 : vector<8x128xf32>
    %147 = math.tanh %141 : vector<8x128xf32>
    %148 = vector.extract_strided_slice %146 {offsets = [0, 0], sizes = [8, 32], strides = [1, 1]} : vector<8x128xf32> to vector<8x32xf32>
    %149 = vector.extract_strided_slice %146 {offsets = [0, 32], sizes = [8, 32], strides = [1, 1]} : vector<8x128xf32> to vector<8x32xf32>
    %150 = vector.extract_strided_slice %147 {offsets = [0, 64], sizes = [8, 32], strides = [1, 1]} : vector<8x128xf32> to vector<8x32xf32>
    %151 = vector.extract_strided_slice %146 {offsets = [0, 96], sizes = [8, 32], strides = [1, 1]} : vector<8x128xf32> to vector<8x32xf32>
    %152 = arith.mulf %149, %117 : vector<8x32xf32>
    %153 = arith.mulf %148, %150 : vector<8x32xf32>
    %154 = arith.addf %152, %153 : vector<8x32xf32>
    %155 = math.tanh %154 : vector<8x32xf32>
    %156 = arith.mulf %151, %155 : vector<8x32xf32>
    %c4 = arith.constant 4 : index
    %c0_37 = arith.constant 0 : index
    %c0_38 = arith.constant 0 : index
    %157 = vector.load %arg0[%c4, %c0_37, %c0_38] : memref<12x8x128xf32, #tpu.memory_space<vmem>>, vector<1x8x128xf32>
    %158 = vector.shape_cast %157 : vector<1x8x128xf32> to vector<8x128xf32>
    %cst_39 = arith.constant dense<0.000000e+00> : vector<8x128xf32>
    %159 = tpu.matmul %138, %0, %cst_39 {dimension_numbers = #tpu.dot_dimension_numbers<[1], [0], [0], [1], [0, 0, 1, 1], [], []>} : vector<8x32xf32>, vector<32x128xf32>, vector<8x128xf32> -> vector<8x128xf32>
    %160 = arith.addf %158, %159 : vector<8x128xf32>
    %161 = arith.negf %160 : vector<8x128xf32>
    %162 = math.exp %161 : vector<8x128xf32>
    %cst_40 = arith.constant 1.000000e+00 : f32
    %163 = vector.broadcast %cst_40 : f32 to vector<8x128xf32>
    %164 = arith.addf %163, %162 : vector<8x128xf32>
    %165 = arith.divf %163, %164 : vector<8x128xf32>
    %166 = math.tanh %160 : vector<8x128xf32>
    %167 = vector.extract_strided_slice %165 {offsets = [0, 0], sizes = [8, 32], strides = [1, 1]} : vector<8x128xf32> to vector<8x32xf32>
    %168 = vector.extract_strided_slice %165 {offsets = [0, 32], sizes = [8, 32], strides = [1, 1]} : vector<8x128xf32> to vector<8x32xf32>
    %169 = vector.extract_strided_slice %166 {offsets = [0, 64], sizes = [8, 32], strides = [1, 1]} : vector<8x128xf32> to vector<8x32xf32>
    %170 = vector.extract_strided_slice %165 {offsets = [0, 96], sizes = [8, 32], strides = [1, 1]} : vector<8x128xf32> to vector<8x32xf32>
    %171 = arith.mulf %168, %136 : vector<8x32xf32>
    %172 = arith.mulf %167, %169 : vector<8x32xf32>
    %173 = arith.addf %171, %172 : vector<8x32xf32>
    %174 = math.tanh %173 : vector<8x32xf32>
    %175 = arith.mulf %170, %174 : vector<8x32xf32>
    %176 = tpu.concatenate %175, %156 in 1 : vector<8x32xf32>, vector<8x32xf32> -> vector<8x64xf32>
    %cst_41 = arith.constant dense<0.000000e+00> : vector<8x128xf32>
    %177 = tpu.matmul %176, %1, %cst_41 {dimension_numbers = #tpu.dot_dimension_numbers<[1], [0], [0], [1], [0, 0, 1, 1], [], []>} : vector<8x64xf32>, vector<64x128xf32>, vector<8x128xf32> -> vector<8x128xf32>
    %178 = arith.addf %177, %4 : vector<8x128xf32>
    %179 = arith.negf %178 : vector<8x128xf32>
    %180 = math.exp %179 : vector<8x128xf32>
    %cst_42 = arith.constant 1.000000e+00 : f32
    %181 = vector.broadcast %cst_42 : f32 to vector<8x128xf32>
    %182 = arith.addf %181, %180 : vector<8x128xf32>
    %183 = arith.divf %181, %182 : vector<8x128xf32>
    %184 = math.tanh %178 : vector<8x128xf32>
    %185 = vector.extract_strided_slice %183 {offsets = [0, 0], sizes = [8, 32], strides = [1, 1]} : vector<8x128xf32> to vector<8x32xf32>
    %186 = vector.extract_strided_slice %183 {offsets = [0, 32], sizes = [8, 32], strides = [1, 1]} : vector<8x128xf32> to vector<8x32xf32>
    %187 = vector.extract_strided_slice %184 {offsets = [0, 64], sizes = [8, 32], strides = [1, 1]} : vector<8x128xf32> to vector<8x32xf32>
    %188 = vector.extract_strided_slice %183 {offsets = [0, 96], sizes = [8, 32], strides = [1, 1]} : vector<8x128xf32> to vector<8x32xf32>
    %189 = arith.mulf %186, %154 : vector<8x32xf32>
    %190 = arith.mulf %185, %187 : vector<8x32xf32>
    %191 = arith.addf %189, %190 : vector<8x32xf32>
    %192 = math.tanh %191 : vector<8x32xf32>
    %193 = arith.mulf %188, %192 : vector<8x32xf32>
    %c5 = arith.constant 5 : index
    %c0_43 = arith.constant 0 : index
    %c0_44 = arith.constant 0 : index
    %194 = vector.load %arg0[%c5, %c0_43, %c0_44] : memref<12x8x128xf32, #tpu.memory_space<vmem>>, vector<1x8x128xf32>
    %195 = vector.shape_cast %194 : vector<1x8x128xf32> to vector<8x128xf32>
    %cst_45 = arith.constant dense<0.000000e+00> : vector<8x128xf32>
    %196 = tpu.matmul %175, %0, %cst_45 {dimension_numbers = #tpu.dot_dimension_numbers<[1], [0], [0], [1], [0, 0, 1, 1], [], []>} : vector<8x32xf32>, vector<32x128xf32>, vector<8x128xf32> -> vector<8x128xf32>
    %197 = arith.addf %195, %196 : vector<8x128xf32>
    %198 = arith.negf %197 : vector<8x128xf32>
    %199 = math.exp %198 : vector<8x128xf32>
    %cst_46 = arith.constant 1.000000e+00 : f32
    %200 = vector.broadcast %cst_46 : f32 to vector<8x128xf32>
    %201 = arith.addf %200, %199 : vector<8x128xf32>
    %202 = arith.divf %200, %201 : vector<8x128xf32>
    %203 = math.tanh %197 : vector<8x128xf32>
    %204 = vector.extract_strided_slice %202 {offsets = [0, 0], sizes = [8, 32], strides = [1, 1]} : vector<8x128xf32> to vector<8x32xf32>
    %205 = vector.extract_strided_slice %202 {offsets = [0, 32], sizes = [8, 32], strides = [1, 1]} : vector<8x128xf32> to vector<8x32xf32>
    %206 = vector.extract_strided_slice %203 {offsets = [0, 64], sizes = [8, 32], strides = [1, 1]} : vector<8x128xf32> to vector<8x32xf32>
    %207 = vector.extract_strided_slice %202 {offsets = [0, 96], sizes = [8, 32], strides = [1, 1]} : vector<8x128xf32> to vector<8x32xf32>
    %208 = arith.mulf %205, %173 : vector<8x32xf32>
    %209 = arith.mulf %204, %206 : vector<8x32xf32>
    %210 = arith.addf %208, %209 : vector<8x32xf32>
    %211 = math.tanh %210 : vector<8x32xf32>
    %212 = arith.mulf %207, %211 : vector<8x32xf32>
    %213 = tpu.concatenate %212, %193 in 1 : vector<8x32xf32>, vector<8x32xf32> -> vector<8x64xf32>
    %cst_47 = arith.constant dense<0.000000e+00> : vector<8x128xf32>
    %214 = tpu.matmul %213, %1, %cst_47 {dimension_numbers = #tpu.dot_dimension_numbers<[1], [0], [0], [1], [0, 0, 1, 1], [], []>} : vector<8x64xf32>, vector<64x128xf32>, vector<8x128xf32> -> vector<8x128xf32>
    %215 = arith.addf %214, %4 : vector<8x128xf32>
    %216 = arith.negf %215 : vector<8x128xf32>
    %217 = math.exp %216 : vector<8x128xf32>
    %cst_48 = arith.constant 1.000000e+00 : f32
    %218 = vector.broadcast %cst_48 : f32 to vector<8x128xf32>
    %219 = arith.addf %218, %217 : vector<8x128xf32>
    %220 = arith.divf %218, %219 : vector<8x128xf32>
    %221 = math.tanh %215 : vector<8x128xf32>
    %222 = vector.extract_strided_slice %220 {offsets = [0, 0], sizes = [8, 32], strides = [1, 1]} : vector<8x128xf32> to vector<8x32xf32>
    %223 = vector.extract_strided_slice %220 {offsets = [0, 32], sizes = [8, 32], strides = [1, 1]} : vector<8x128xf32> to vector<8x32xf32>
    %224 = vector.extract_strided_slice %221 {offsets = [0, 64], sizes = [8, 32], strides = [1, 1]} : vector<8x128xf32> to vector<8x32xf32>
    %225 = vector.extract_strided_slice %220 {offsets = [0, 96], sizes = [8, 32], strides = [1, 1]} : vector<8x128xf32> to vector<8x32xf32>
    %226 = arith.mulf %223, %191 : vector<8x32xf32>
    %227 = arith.mulf %222, %224 : vector<8x32xf32>
    %228 = arith.addf %226, %227 : vector<8x32xf32>
    %229 = math.tanh %228 : vector<8x32xf32>
    %230 = arith.mulf %225, %229 : vector<8x32xf32>
    %c0_49 = arith.constant 0 : index
    %c0_50 = arith.constant 0 : index
    %231 = vector.load %arg11[%c0_49, %c0_50] : memref<56x32xf32, #tpu.memory_space<vmem>>, vector<8x32xf32>
    tpu.vector_store %arg11[%c0_49, %c0_50], %230 {strides = array<i32>} : memref<56x32xf32, #tpu.memory_space<vmem>>, vector<8x32xf32>,
    %c6 = arith.constant 6 : index
    %c0_51 = arith.constant 0 : index
    %c0_52 = arith.constant 0 : index
    %232 = vector.load %arg0[%c6, %c0_51, %c0_52] : memref<12x8x128xf32, #tpu.memory_space<vmem>>, vector<1x8x128xf32>
    %233 = vector.shape_cast %232 : vector<1x8x128xf32> to vector<8x128xf32>
    %cst_53 = arith.constant dense<0.000000e+00> : vector<8x128xf32>
    %234 = tpu.matmul %212, %0, %cst_53 {dimension_numbers = #tpu.dot_dimension_numbers<[1], [0], [0], [1], [0, 0, 1, 1], [], []>} : vector<8x32xf32>, vector<32x128xf32>, vector<8x128xf32> -> vector<8x128xf32>
    %235 = arith.addf %233, %234 : vector<8x128xf32>
    %236 = arith.negf %235 : vector<8x128xf32>
    %237 = math.exp %236 : vector<8x128xf32>
    %cst_54 = arith.constant 1.000000e+00 : f32
    %238 = vector.broadcast %cst_54 : f32 to vector<8x128xf32>
    %239 = arith.addf %238, %237 : vector<8x128xf32>
    %240 = arith.divf %238, %239 : vector<8x128xf32>
    %241 = math.tanh %235 : vector<8x128xf32>
    %242 = vector.extract_strided_slice %240 {offsets = [0, 0], sizes = [8, 32], strides = [1, 1]} : vector<8x128xf32> to vector<8x32xf32>
    %243 = vector.extract_strided_slice %240 {offsets = [0, 32], sizes = [8, 32], strides = [1, 1]} : vector<8x128xf32> to vector<8x32xf32>
    %244 = vector.extract_strided_slice %241 {offsets = [0, 64], sizes = [8, 32], strides = [1, 1]} : vector<8x128xf32> to vector<8x32xf32>
    %245 = vector.extract_strided_slice %240 {offsets = [0, 96], sizes = [8, 32], strides = [1, 1]} : vector<8x128xf32> to vector<8x32xf32>
    %246 = arith.mulf %243, %210 : vector<8x32xf32>
    %247 = arith.mulf %242, %244 : vector<8x32xf32>
    %248 = arith.addf %246, %247 : vector<8x32xf32>
    %249 = math.tanh %248 : vector<8x32xf32>
    %250 = arith.mulf %245, %249 : vector<8x32xf32>
    %251 = tpu.concatenate %250, %230 in 1 : vector<8x32xf32>, vector<8x32xf32> -> vector<8x64xf32>
    %cst_55 = arith.constant dense<0.000000e+00> : vector<8x128xf32>
    %252 = tpu.matmul %251, %1, %cst_55 {dimension_numbers = #tpu.dot_dimension_numbers<[1], [0], [0], [1], [0, 0, 1, 1], [], []>} : vector<8x64xf32>, vector<64x128xf32>, vector<8x128xf32> -> vector<8x128xf32>
    %253 = arith.addf %252, %4 : vector<8x128xf32>
    %254 = arith.negf %253 : vector<8x128xf32>
    %255 = math.exp %254 : vector<8x128xf32>
    %cst_56 = arith.constant 1.000000e+00 : f32
    %256 = vector.broadcast %cst_56 : f32 to vector<8x128xf32>
    %257 = arith.addf %256, %255 : vector<8x128xf32>
    %258 = arith.divf %256, %257 : vector<8x128xf32>
    %259 = math.tanh %253 : vector<8x128xf32>
    %260 = vector.extract_strided_slice %258 {offsets = [0, 0], sizes = [8, 32], strides = [1, 1]} : vector<8x128xf32> to vector<8x32xf32>
    %261 = vector.extract_strided_slice %258 {offsets = [0, 32], sizes = [8, 32], strides = [1, 1]} : vector<8x128xf32> to vector<8x32xf32>
    %262 = vector.extract_strided_slice %259 {offsets = [0, 64], sizes = [8, 32], strides = [1, 1]} : vector<8x128xf32> to vector<8x32xf32>
    %263 = vector.extract_strided_slice %258 {offsets = [0, 96], sizes = [8, 32], strides = [1, 1]} : vector<8x128xf32> to vector<8x32xf32>
    %264 = arith.mulf %261, %228 : vector<8x32xf32>
    %265 = arith.mulf %260, %262 : vector<8x32xf32>
    %266 = arith.addf %264, %265 : vector<8x32xf32>
    %267 = math.tanh %266 : vector<8x32xf32>
    %268 = arith.mulf %263, %267 : vector<8x32xf32>
    %c8 = arith.constant 8 : index
    %c0_57 = arith.constant 0 : index
    %269 = vector.load %arg11[%c8, %c0_57] : memref<56x32xf32, #tpu.memory_space<vmem>>, vector<8x32xf32>
    tpu.vector_store %arg11[%c8, %c0_57], %268 {strides = array<i32>} : memref<56x32xf32, #tpu.memory_space<vmem>>, vector<8x32xf32>,
    %c7 = arith.constant 7 : index
    %c0_58 = arith.constant 0 : index
    %c0_59 = arith.constant 0 : index
    %270 = vector.load %arg0[%c7, %c0_58, %c0_59] : memref<12x8x128xf32, #tpu.memory_space<vmem>>, vector<1x8x128xf32>
    %271 = vector.shape_cast %270 : vector<1x8x128xf32> to vector<8x128xf32>
    %cst_60 = arith.constant dense<0.000000e+00> : vector<8x128xf32>
    %272 = tpu.matmul %250, %0, %cst_60 {dimension_numbers = #tpu.dot_dimension_numbers<[1], [0], [0], [1], [0, 0, 1, 1], [], []>} : vector<8x32xf32>, vector<32x128xf32>, vector<8x128xf32> -> vector<8x128xf32>
    %273 = arith.addf %271, %272 : vector<8x128xf32>
    %274 = arith.negf %273 : vector<8x128xf32>
    %275 = math.exp %274 : vector<8x128xf32>
    %cst_61 = arith.constant 1.000000e+00 : f32
    %276 = vector.broadcast %cst_61 : f32 to vector<8x128xf32>
    %277 = arith.addf %276, %275 : vector<8x128xf32>
    %278 = arith.divf %276, %277 : vector<8x128xf32>
    %279 = math.tanh %273 : vector<8x128xf32>
    %280 = vector.extract_strided_slice %278 {offsets = [0, 0], sizes = [8, 32], strides = [1, 1]} : vector<8x128xf32> to vector<8x32xf32>
    %281 = vector.extract_strided_slice %278 {offsets = [0, 32], sizes = [8, 32], strides = [1, 1]} : vector<8x128xf32> to vector<8x32xf32>
    %282 = vector.extract_strided_slice %279 {offsets = [0, 64], sizes = [8, 32], strides = [1, 1]} : vector<8x128xf32> to vector<8x32xf32>
    %283 = vector.extract_strided_slice %278 {offsets = [0, 96], sizes = [8, 32], strides = [1, 1]} : vector<8x128xf32> to vector<8x32xf32>
    %284 = arith.mulf %281, %248 : vector<8x32xf32>
    %285 = arith.mulf %280, %282 : vector<8x32xf32>
    %286 = arith.addf %284, %285 : vector<8x32xf32>
    %287 = math.tanh %286 : vector<8x32xf32>
    %288 = arith.mulf %283, %287 : vector<8x32xf32>
    %289 = tpu.concatenate %288, %268 in 1 : vector<8x32xf32>, vector<8x32xf32> -> vector<8x64xf32>
    %cst_62 = arith.constant dense<0.000000e+00> : vector<8x128xf32>
    %290 = tpu.matmul %289, %1, %cst_62 {dimension_numbers = #tpu.dot_dimension_numbers<[1], [0], [0], [1], [0, 0, 1, 1], [], []>} : vector<8x64xf32>, vector<64x128xf32>, vector<8x128xf32> -> vector<8x128xf32>
    %291 = arith.addf %290, %4 : vector<8x128xf32>
    %292 = arith.negf %291 : vector<8x128xf32>
    %293 = math.exp %292 : vector<8x128xf32>
    %cst_63 = arith.constant 1.000000e+00 : f32
    %294 = vector.broadcast %cst_63 : f32 to vector<8x128xf32>
    %295 = arith.addf %294, %293 : vector<8x128xf32>
    %296 = arith.divf %294, %295 : vector<8x128xf32>
    %297 = math.tanh %291 : vector<8x128xf32>
    %298 = vector.extract_strided_slice %296 {offsets = [0, 0], sizes = [8, 32], strides = [1, 1]} : vector<8x128xf32> to vector<8x32xf32>
    %299 = vector.extract_strided_slice %296 {offsets = [0, 32], sizes = [8, 32], strides = [1, 1]} : vector<8x128xf32> to vector<8x32xf32>
    %300 = vector.extract_strided_slice %297 {offsets = [0, 64], sizes = [8, 32], strides = [1, 1]} : vector<8x128xf32> to vector<8x32xf32>
    %301 = vector.extract_strided_slice %296 {offsets = [0, 96], sizes = [8, 32], strides = [1, 1]} : vector<8x128xf32> to vector<8x32xf32>
    %302 = arith.mulf %299, %266 : vector<8x32xf32>
    %303 = arith.mulf %298, %300 : vector<8x32xf32>
    %304 = arith.addf %302, %303 : vector<8x32xf32>
    %305 = math.tanh %304 : vector<8x32xf32>
    %306 = arith.mulf %301, %305 : vector<8x32xf32>
    %c16 = arith.constant 16 : index
    %c0_64 = arith.constant 0 : index
    %307 = vector.load %arg11[%c16, %c0_64] : memref<56x32xf32, #tpu.memory_space<vmem>>, vector<8x32xf32>
    tpu.vector_store %arg11[%c16, %c0_64], %306 {strides = array<i32>} : memref<56x32xf32, #tpu.memory_space<vmem>>, vector<8x32xf32>,
    %c8_65 = arith.constant 8 : index
    %c0_66 = arith.constant 0 : index
    %c0_67 = arith.constant 0 : index
    %308 = vector.load %arg0[%c8_65, %c0_66, %c0_67] : memref<12x8x128xf32, #tpu.memory_space<vmem>>, vector<1x8x128xf32>
    %309 = vector.shape_cast %308 : vector<1x8x128xf32> to vector<8x128xf32>
    %cst_68 = arith.constant dense<0.000000e+00> : vector<8x128xf32>
    %310 = tpu.matmul %288, %0, %cst_68 {dimension_numbers = #tpu.dot_dimension_numbers<[1], [0], [0], [1], [0, 0, 1, 1], [], []>} : vector<8x32xf32>, vector<32x128xf32>, vector<8x128xf32> -> vector<8x128xf32>
    %311 = arith.addf %309, %310 : vector<8x128xf32>
    %312 = arith.negf %311 : vector<8x128xf32>
    %313 = math.exp %312 : vector<8x128xf32>
    %cst_69 = arith.constant 1.000000e+00 : f32
    %314 = vector.broadcast %cst_69 : f32 to vector<8x128xf32>
    %315 = arith.addf %314, %313 : vector<8x128xf32>
    %316 = arith.divf %314, %315 : vector<8x128xf32>
    %317 = math.tanh %311 : vector<8x128xf32>
    %318 = vector.extract_strided_slice %316 {offsets = [0, 0], sizes = [8, 32], strides = [1, 1]} : vector<8x128xf32> to vector<8x32xf32>
    %319 = vector.extract_strided_slice %316 {offsets = [0, 32], sizes = [8, 32], strides = [1, 1]} : vector<8x128xf32> to vector<8x32xf32>
    %320 = vector.extract_strided_slice %317 {offsets = [0, 64], sizes = [8, 32], strides = [1, 1]} : vector<8x128xf32> to vector<8x32xf32>
    %321 = vector.extract_strided_slice %316 {offsets = [0, 96], sizes = [8, 32], strides = [1, 1]} : vector<8x128xf32> to vector<8x32xf32>
    %322 = arith.mulf %319, %286 : vector<8x32xf32>
    %323 = arith.mulf %318, %320 : vector<8x32xf32>
    %324 = arith.addf %322, %323 : vector<8x32xf32>
    %325 = math.tanh %324 : vector<8x32xf32>
    %326 = arith.mulf %321, %325 : vector<8x32xf32>
    %327 = tpu.concatenate %326, %306 in 1 : vector<8x32xf32>, vector<8x32xf32> -> vector<8x64xf32>
    %cst_70 = arith.constant dense<0.000000e+00> : vector<8x128xf32>
    %328 = tpu.matmul %327, %1, %cst_70 {dimension_numbers = #tpu.dot_dimension_numbers<[1], [0], [0], [1], [0, 0, 1, 1], [], []>} : vector<8x64xf32>, vector<64x128xf32>, vector<8x128xf32> -> vector<8x128xf32>
    %329 = arith.addf %328, %4 : vector<8x128xf32>
    %330 = arith.negf %329 : vector<8x128xf32>
    %331 = math.exp %330 : vector<8x128xf32>
    %cst_71 = arith.constant 1.000000e+00 : f32
    %332 = vector.broadcast %cst_71 : f32 to vector<8x128xf32>
    %333 = arith.addf %332, %331 : vector<8x128xf32>
    %334 = arith.divf %332, %333 : vector<8x128xf32>
    %335 = math.tanh %329 : vector<8x128xf32>
    %336 = vector.extract_strided_slice %334 {offsets = [0, 0], sizes = [8, 32], strides = [1, 1]} : vector<8x128xf32> to vector<8x32xf32>
    %337 = vector.extract_strided_slice %334 {offsets = [0, 32], sizes = [8, 32], strides = [1, 1]} : vector<8x128xf32> to vector<8x32xf32>
    %338 = vector.extract_strided_slice %335 {offsets = [0, 64], sizes = [8, 32], strides = [1, 1]} : vector<8x128xf32> to vector<8x32xf32>
    %339 = vector.extract_strided_slice %334 {offsets = [0, 96], sizes = [8, 32], strides = [1, 1]} : vector<8x128xf32> to vector<8x32xf32>
    %340 = arith.mulf %337, %304 : vector<8x32xf32>
    %341 = arith.mulf %336, %338 : vector<8x32xf32>
    %342 = arith.addf %340, %341 : vector<8x32xf32>
    %343 = math.tanh %342 : vector<8x32xf32>
    %344 = arith.mulf %339, %343 : vector<8x32xf32>
    %c24 = arith.constant 24 : index
    %c0_72 = arith.constant 0 : index
    %345 = vector.load %arg11[%c24, %c0_72] : memref<56x32xf32, #tpu.memory_space<vmem>>, vector<8x32xf32>
    tpu.vector_store %arg11[%c24, %c0_72], %344 {strides = array<i32>} : memref<56x32xf32, #tpu.memory_space<vmem>>, vector<8x32xf32>,
    %c9 = arith.constant 9 : index
    %c0_73 = arith.constant 0 : index
    %c0_74 = arith.constant 0 : index
    %346 = vector.load %arg0[%c9, %c0_73, %c0_74] : memref<12x8x128xf32, #tpu.memory_space<vmem>>, vector<1x8x128xf32>
    %347 = vector.shape_cast %346 : vector<1x8x128xf32> to vector<8x128xf32>
    %cst_75 = arith.constant dense<0.000000e+00> : vector<8x128xf32>
    %348 = tpu.matmul %326, %0, %cst_75 {dimension_numbers = #tpu.dot_dimension_numbers<[1], [0], [0], [1], [0, 0, 1, 1], [], []>} : vector<8x32xf32>, vector<32x128xf32>, vector<8x128xf32> -> vector<8x128xf32>
    %349 = arith.addf %347, %348 : vector<8x128xf32>
    %350 = arith.negf %349 : vector<8x128xf32>
    %351 = math.exp %350 : vector<8x128xf32>
    %cst_76 = arith.constant 1.000000e+00 : f32
    %352 = vector.broadcast %cst_76 : f32 to vector<8x128xf32>
    %353 = arith.addf %352, %351 : vector<8x128xf32>
    %354 = arith.divf %352, %353 : vector<8x128xf32>
    %355 = math.tanh %349 : vector<8x128xf32>
    %356 = vector.extract_strided_slice %354 {offsets = [0, 0], sizes = [8, 32], strides = [1, 1]} : vector<8x128xf32> to vector<8x32xf32>
    %357 = vector.extract_strided_slice %354 {offsets = [0, 32], sizes = [8, 32], strides = [1, 1]} : vector<8x128xf32> to vector<8x32xf32>
    %358 = vector.extract_strided_slice %355 {offsets = [0, 64], sizes = [8, 32], strides = [1, 1]} : vector<8x128xf32> to vector<8x32xf32>
    %359 = vector.extract_strided_slice %354 {offsets = [0, 96], sizes = [8, 32], strides = [1, 1]} : vector<8x128xf32> to vector<8x32xf32>
    %360 = arith.mulf %357, %324 : vector<8x32xf32>
    %361 = arith.mulf %356, %358 : vector<8x32xf32>
    %362 = arith.addf %360, %361 : vector<8x32xf32>
    %363 = math.tanh %362 : vector<8x32xf32>
    %364 = arith.mulf %359, %363 : vector<8x32xf32>
    %365 = tpu.concatenate %364, %344 in 1 : vector<8x32xf32>, vector<8x32xf32> -> vector<8x64xf32>
    %cst_77 = arith.constant dense<0.000000e+00> : vector<8x128xf32>
    %366 = tpu.matmul %365, %1, %cst_77 {dimension_numbers = #tpu.dot_dimension_numbers<[1], [0], [0], [1], [0, 0, 1, 1], [], []>} : vector<8x64xf32>, vector<64x128xf32>, vector<8x128xf32> -> vector<8x128xf32>
    %367 = arith.addf %366, %4 : vector<8x128xf32>
    %368 = arith.negf %367 : vector<8x128xf32>
    %369 = math.exp %368 : vector<8x128xf32>
    %cst_78 = arith.constant 1.000000e+00 : f32
    %370 = vector.broadcast %cst_78 : f32 to vector<8x128xf32>
    %371 = arith.addf %370, %369 : vector<8x128xf32>
    %372 = arith.divf %370, %371 : vector<8x128xf32>
    %373 = math.tanh %367 : vector<8x128xf32>
    %374 = vector.extract_strided_slice %372 {offsets = [0, 0], sizes = [8, 32], strides = [1, 1]} : vector<8x128xf32> to vector<8x32xf32>
    %375 = vector.extract_strided_slice %372 {offsets = [0, 32], sizes = [8, 32], strides = [1, 1]} : vector<8x128xf32> to vector<8x32xf32>
    %376 = vector.extract_strided_slice %373 {offsets = [0, 64], sizes = [8, 32], strides = [1, 1]} : vector<8x128xf32> to vector<8x32xf32>
    %377 = vector.extract_strided_slice %372 {offsets = [0, 96], sizes = [8, 32], strides = [1, 1]} : vector<8x128xf32> to vector<8x32xf32>
    %378 = arith.mulf %375, %342 : vector<8x32xf32>
    %379 = arith.mulf %374, %376 : vector<8x32xf32>
    %380 = arith.addf %378, %379 : vector<8x32xf32>
    %381 = math.tanh %380 : vector<8x32xf32>
    %382 = arith.mulf %377, %381 : vector<8x32xf32>
    %c32 = arith.constant 32 : index
    %c0_79 = arith.constant 0 : index
    %383 = vector.load %arg11[%c32, %c0_79] : memref<56x32xf32, #tpu.memory_space<vmem>>, vector<8x32xf32>
    tpu.vector_store %arg11[%c32, %c0_79], %382 {strides = array<i32>} : memref<56x32xf32, #tpu.memory_space<vmem>>, vector<8x32xf32>,
    %c10 = arith.constant 10 : index
    %c0_80 = arith.constant 0 : index
    %c0_81 = arith.constant 0 : index
    %384 = vector.load %arg0[%c10, %c0_80, %c0_81] : memref<12x8x128xf32, #tpu.memory_space<vmem>>, vector<1x8x128xf32>
    %385 = vector.shape_cast %384 : vector<1x8x128xf32> to vector<8x128xf32>
    %cst_82 = arith.constant dense<0.000000e+00> : vector<8x128xf32>
    %386 = tpu.matmul %364, %0, %cst_82 {dimension_numbers = #tpu.dot_dimension_numbers<[1], [0], [0], [1], [0, 0, 1, 1], [], []>} : vector<8x32xf32>, vector<32x128xf32>, vector<8x128xf32> -> vector<8x128xf32>
    %387 = arith.addf %385, %386 : vector<8x128xf32>
    %388 = arith.negf %387 : vector<8x128xf32>
    %389 = math.exp %388 : vector<8x128xf32>
    %cst_83 = arith.constant 1.000000e+00 : f32
    %390 = vector.broadcast %cst_83 : f32 to vector<8x128xf32>
    %391 = arith.addf %390, %389 : vector<8x128xf32>
    %392 = arith.divf %390, %391 : vector<8x128xf32>
    %393 = math.tanh %387 : vector<8x128xf32>
    %394 = vector.extract_strided_slice %392 {offsets = [0, 0], sizes = [8, 32], strides = [1, 1]} : vector<8x128xf32> to vector<8x32xf32>
    %395 = vector.extract_strided_slice %392 {offsets = [0, 32], sizes = [8, 32], strides = [1, 1]} : vector<8x128xf32> to vector<8x32xf32>
    %396 = vector.extract_strided_slice %393 {offsets = [0, 64], sizes = [8, 32], strides = [1, 1]} : vector<8x128xf32> to vector<8x32xf32>
    %397 = vector.extract_strided_slice %392 {offsets = [0, 96], sizes = [8, 32], strides = [1, 1]} : vector<8x128xf32> to vector<8x32xf32>
    %398 = arith.mulf %395, %362 : vector<8x32xf32>
    %399 = arith.mulf %394, %396 : vector<8x32xf32>
    %400 = arith.addf %398, %399 : vector<8x32xf32>
    %401 = math.tanh %400 : vector<8x32xf32>
    %402 = arith.mulf %397, %401 : vector<8x32xf32>
    %403 = tpu.concatenate %402, %382 in 1 : vector<8x32xf32>, vector<8x32xf32> -> vector<8x64xf32>
    %cst_84 = arith.constant dense<0.000000e+00> : vector<8x128xf32>
    %404 = tpu.matmul %403, %1, %cst_84 {dimension_numbers = #tpu.dot_dimension_numbers<[1], [0], [0], [1], [0, 0, 1, 1], [], []>} : vector<8x64xf32>, vector<64x128xf32>, vector<8x128xf32> -> vector<8x128xf32>
    %405 = arith.addf %404, %4 : vector<8x128xf32>
    %406 = arith.negf %405 : vector<8x128xf32>
    %407 = math.exp %406 : vector<8x128xf32>
    %cst_85 = arith.constant 1.000000e+00 : f32
    %408 = vector.broadcast %cst_85 : f32 to vector<8x128xf32>
    %409 = arith.addf %408, %407 : vector<8x128xf32>
    %410 = arith.divf %408, %409 : vector<8x128xf32>
    %411 = math.tanh %405 : vector<8x128xf32>
    %412 = vector.extract_strided_slice %410 {offsets = [0, 0], sizes = [8, 32], strides = [1, 1]} : vector<8x128xf32> to vector<8x32xf32>
    %413 = vector.extract_strided_slice %410 {offsets = [0, 32], sizes = [8, 32], strides = [1, 1]} : vector<8x128xf32> to vector<8x32xf32>
    %414 = vector.extract_strided_slice %411 {offsets = [0, 64], sizes = [8, 32], strides = [1, 1]} : vector<8x128xf32> to vector<8x32xf32>
    %415 = vector.extract_strided_slice %410 {offsets = [0, 96], sizes = [8, 32], strides = [1, 1]} : vector<8x128xf32> to vector<8x32xf32>
    %416 = arith.mulf %413, %380 : vector<8x32xf32>
    %417 = arith.mulf %412, %414 : vector<8x32xf32>
    %418 = arith.addf %416, %417 : vector<8x32xf32>
    %419 = math.tanh %418 : vector<8x32xf32>
    %420 = arith.mulf %415, %419 : vector<8x32xf32>
    %c40 = arith.constant 40 : index
    %c0_86 = arith.constant 0 : index
    %421 = vector.load %arg11[%c40, %c0_86] : memref<56x32xf32, #tpu.memory_space<vmem>>, vector<8x32xf32>
    tpu.vector_store %arg11[%c40, %c0_86], %420 {strides = array<i32>} : memref<56x32xf32, #tpu.memory_space<vmem>>, vector<8x32xf32>,
    %c11 = arith.constant 11 : index
    %c0_87 = arith.constant 0 : index
    %c0_88 = arith.constant 0 : index
    %422 = vector.load %arg0[%c11, %c0_87, %c0_88] : memref<12x8x128xf32, #tpu.memory_space<vmem>>, vector<1x8x128xf32>
    %423 = vector.shape_cast %422 : vector<1x8x128xf32> to vector<8x128xf32>
    %cst_89 = arith.constant dense<0.000000e+00> : vector<8x128xf32>
    %424 = tpu.matmul %402, %0, %cst_89 {dimension_numbers = #tpu.dot_dimension_numbers<[1], [0], [0], [1], [0, 0, 1, 1], [], []>} : vector<8x32xf32>, vector<32x128xf32>, vector<8x128xf32> -> vector<8x128xf32>
    %425 = arith.addf %423, %424 : vector<8x128xf32>
    %426 = arith.negf %425 : vector<8x128xf32>
    %427 = math.exp %426 : vector<8x128xf32>
    %cst_90 = arith.constant 1.000000e+00 : f32
    %428 = vector.broadcast %cst_90 : f32 to vector<8x128xf32>
    %429 = arith.addf %428, %427 : vector<8x128xf32>
    %430 = arith.divf %428, %429 : vector<8x128xf32>
    %431 = math.tanh %425 : vector<8x128xf32>
    %432 = vector.extract_strided_slice %430 {offsets = [0, 0], sizes = [8, 32], strides = [1, 1]} : vector<8x128xf32> to vector<8x32xf32>
    %433 = vector.extract_strided_slice %430 {offsets = [0, 32], sizes = [8, 32], strides = [1, 1]} : vector<8x128xf32> to vector<8x32xf32>
    %434 = vector.extract_strided_slice %431 {offsets = [0, 64], sizes = [8, 32], strides = [1, 1]} : vector<8x128xf32> to vector<8x32xf32>
    %435 = vector.extract_strided_slice %430 {offsets = [0, 96], sizes = [8, 32], strides = [1, 1]} : vector<8x128xf32> to vector<8x32xf32>
    %436 = arith.mulf %433, %400 : vector<8x32xf32>
    %437 = arith.mulf %432, %434 : vector<8x32xf32>
    %438 = arith.addf %436, %437 : vector<8x32xf32>
    %439 = math.tanh %438 : vector<8x32xf32>
    %440 = arith.mulf %435, %439 : vector<8x32xf32>
    %441 = tpu.concatenate %440, %420 in 1 : vector<8x32xf32>, vector<8x32xf32> -> vector<8x64xf32>
    %cst_91 = arith.constant dense<0.000000e+00> : vector<8x128xf32>
    %442 = tpu.matmul %441, %1, %cst_91 {dimension_numbers = #tpu.dot_dimension_numbers<[1], [0], [0], [1], [0, 0, 1, 1], [], []>} : vector<8x64xf32>, vector<64x128xf32>, vector<8x128xf32> -> vector<8x128xf32>
    %443 = arith.addf %442, %4 : vector<8x128xf32>
    %444 = arith.negf %443 : vector<8x128xf32>
    %445 = math.exp %444 : vector<8x128xf32>
    %cst_92 = arith.constant 1.000000e+00 : f32
    %446 = vector.broadcast %cst_92 : f32 to vector<8x128xf32>
    %447 = arith.addf %446, %445 : vector<8x128xf32>
    %448 = arith.divf %446, %447 : vector<8x128xf32>
    %449 = math.tanh %443 : vector<8x128xf32>
    %450 = vector.extract_strided_slice %448 {offsets = [0, 0], sizes = [8, 32], strides = [1, 1]} : vector<8x128xf32> to vector<8x32xf32>
    %451 = vector.extract_strided_slice %448 {offsets = [0, 32], sizes = [8, 32], strides = [1, 1]} : vector<8x128xf32> to vector<8x32xf32>
    %452 = vector.extract_strided_slice %449 {offsets = [0, 64], sizes = [8, 32], strides = [1, 1]} : vector<8x128xf32> to vector<8x32xf32>
    %453 = vector.extract_strided_slice %448 {offsets = [0, 96], sizes = [8, 32], strides = [1, 1]} : vector<8x128xf32> to vector<8x32xf32>
    %454 = arith.mulf %451, %418 : vector<8x32xf32>
    %455 = arith.mulf %450, %452 : vector<8x32xf32>
    %456 = arith.addf %454, %455 : vector<8x32xf32>
    %457 = math.tanh %456 : vector<8x32xf32>
    %458 = arith.mulf %453, %457 : vector<8x32xf32>
    %c48 = arith.constant 48 : index
    %c0_93 = arith.constant 0 : index
    %459 = vector.load %arg11[%c48, %c0_93] : memref<56x32xf32, #tpu.memory_space<vmem>>, vector<8x32xf32>
    tpu.vector_store %arg11[%c48, %c0_93], %458 {strides = array<i32>} : memref<56x32xf32, #tpu.memory_space<vmem>>, vector<8x32xf32>,
    %c0_94 = arith.constant 0 : index
    %c0_95 = arith.constant 0 : index
    %460 = vector.load %arg11[%c0_94, %c0_95] : memref<56x32xf32, #tpu.memory_space<vmem>>, vector<56x32xf32>
    %c0_96 = arith.constant 0 : index
    %c0_97 = arith.constant 0 : index
    %461 = vector.load %arg8[%c0_96, %c0_97] : memref<32x2xf32, #tpu.memory_space<vmem>>, vector<32x2xf32>
    %cst_98 = arith.constant dense<0.000000e+00> : vector<56x2xf32>
    %462 = tpu.matmul %460, %461, %cst_98 {dimension_numbers = #tpu.dot_dimension_numbers<[1], [0], [0], [1], [0, 0, 1, 1], [], []>} : vector<56x32xf32>, vector<32x2xf32>, vector<56x2xf32> -> vector<56x2xf32>
    %c0_99 = arith.constant 0 : index
    %c0_100 = arith.constant 0 : index
    %463 = vector.load %arg9[%c0_99, %c0_100] : memref<1x2xf32, #tpu.memory_space<vmem>>, vector<1x2xf32>
    %464 = vector.broadcast %463 : vector<1x2xf32> to vector<56x2xf32>
    %465 = arith.addf %462, %464 : vector<56x2xf32>
    %c0_101 = arith.constant 0 : index
    %c0_102 = arith.constant 0 : index
    %466 = vector.load %arg10[%c0_101, %c0_102] : memref<56x2xf32, #tpu.memory_space<vmem>>, vector<56x2xf32>
    tpu.vector_store %arg10[%c0_101, %c0_102], %465 {strides = array<i32>} : memref<56x2xf32, #tpu.memory_space<vmem>>, vector<56x2xf32>,
    return
  }
}

</mosaic_0001>

<llo_original>
// kernel: lstm_stack_forward.1
$region0: #{lstm_stack_forward.1}
  #allocation0 [shape = 'u32[]', space=smem, size = 0x4, offset = 0x4, fixed_abs, tag = 'smem constant byte address 0x4 - core index']
  #allocation1 [shape = 'u32[144,128]{1,0:T(1,128)}', space=vmem, size = 0x12000, scoped, tag = 'internal scratch']
  #allocation2 [shape = 'f32[56,32]{1,0:T(8,128)}', space=vmem, size = 0x7000, scoped, tag = 'scratch operand']
  %s0 = inlined_call_operand.vmem [shape: f32[12,8,128], index: 0, kind: input, shape index: {}]
  %s1 = inlined_call_operand.vmem [shape: f32[8,32], index: 1, kind: input, shape index: {}]
  %s2 = inlined_call_operand.vmem [shape: f32[8,32], index: 2, kind: input, shape index: {}]
  %s3 = inlined_call_operand.vmem [shape: f32[8,32], index: 3, kind: input, shape index: {}]
  %s4 = inlined_call_operand.vmem [shape: f32[8,32], index: 4, kind: input, shape index: {}]
  %s5 = inlined_call_operand.vmem [shape: f32[32,128], index: 5, kind: input, shape index: {}]
  %s6 = inlined_call_operand.vmem [shape: f32[64,128], index: 6, kind: input, shape index: {}]
  %s7 = inlined_call_operand.vmem [shape: f32[1,128], index: 7, kind: input, shape index: {}]
  %s8 = inlined_call_operand.vmem [shape: f32[32,2], index: 8, kind: input, shape index: {}]
  %s9 = inlined_call_operand.vmem [shape: f32[1,2], index: 9, kind: input, shape index: {}]
  %s10 = inlined_call_operand.vmem [shape: f32[56,2], index: 10, kind: output, shape index: {}]
  %s11 = sld [smem:[#allocation0]]
  $region50: #{lstm_stack_forward.1} parent=0
    _
  %s13 = ssub.s32 1, %s11
  %s14 = scalar_select 0, %s13, %s11
  // Predicated region
  $region2: #{lstm_stack_forward.1} parent=0 // pred_check
    _
  $region3: #{lstm_stack_forward.1} parent=0 // pred_check_branch
    %16 = sbr.rel (0) target = $region5
  $region4: #{lstm_stack_forward.1} parent=0 // pred_region
    _
  $region5: #{lstm_stack_forward.1} parent=0 // pred_fallthru
    _
  // Predicated region
  $region6: #{lstm_stack_forward.1} parent=0 // pred_check
    _
  $region7: #{lstm_stack_forward.1} parent=0 // pred_check_branch
    %18 = sbr.rel (0) target = $region9
  $region8: #{lstm_stack_forward.1} parent=0 // pred_region
    _
  $region9: #{lstm_stack_forward.1} parent=0 // pred_fallthru
    _
  // Predicated region
  $region10: #{lstm_stack_forward.1} parent=0 // pred_check
    _
  $region11: #{lstm_stack_forward.1} parent=0 // pred_check_branch
    %20 = sbr.rel (0) target = $region13
  $region12: #{lstm_stack_forward.1} parent=0 // pred_region
    _
  $region13: #{lstm_stack_forward.1} parent=0 // pred_fallthru
    _
  // Predicated region
  $region14: #{lstm_stack_forward.1} parent=0 // pred_check
    _
  $region15: #{lstm_stack_forward.1} parent=0 // pred_check_branch
    %22 = sbr.rel (0) target = $region17
  $region16: #{lstm_stack_forward.1} parent=0 // pred_region
    _
  $region17: #{lstm_stack_forward.1} parent=0 // pred_fallthru
    _
  // Predicated region
  $region18: #{lstm_stack_forward.1} parent=0 // pred_check
    _
  $region19: #{lstm_stack_forward.1} parent=0 // pred_check_branch
    %24 = sbr.rel (0) target = $region21
  $region20: #{lstm_stack_forward.1} parent=0 // pred_region
    _
  $region21: #{lstm_stack_forward.1} parent=0 // pred_fallthru
    _
  // Predicated region
  $region22: #{lstm_stack_forward.1} parent=0 // pred_check
    _
  $region23: #{lstm_stack_forward.1} parent=0 // pred_check_branch
    %26 = sbr.rel (0) target = $region25
  $region24: #{lstm_stack_forward.1} parent=0 // pred_region
    _
  $region25: #{lstm_stack_forward.1} parent=0 // pred_fallthru
    _
  // Predicated region
  $region26: #{lstm_stack_forward.1} parent=0 // pred_check
    _
  $region27: #{lstm_stack_forward.1} parent=0 // pred_check_branch
    %28 = sbr.rel (0) target = $region29
  $region28: #{lstm_stack_forward.1} parent=0 // pred_region
    _
  $region29: #{lstm_stack_forward.1} parent=0 // pred_fallthru
    _
  // Predicated region
  $region30: #{lstm_stack_forward.1} parent=0 // pred_check
    _
  $region31: #{lstm_stack_forward.1} parent=0 // pred_check_branch
    %30 = sbr.rel (0) target = $region33
  $region32: #{lstm_stack_forward.1} parent=0 // pred_region
    _
  $region33: #{lstm_stack_forward.1} parent=0 // pred_fallthru
    _
  // Predicated region
  $region34: #{lstm_stack_forward.1} parent=0 // pred_check
    _
  $region35: #{lstm_stack_forward.1} parent=0 // pred_check_branch
    %32 = sbr.rel (0) target = $region37
  $region36: #{lstm_stack_forward.1} parent=0 // pred_region
    _
  $region37: #{lstm_stack_forward.1} parent=0 // pred_fallthru
    _
  // Predicated region
  $region38: #{lstm_stack_forward.1} parent=0 // pred_check
    _
  $region39: #{lstm_stack_forward.1} parent=0 // pred_check_branch
    %34 = sbr.rel (0) target = $region41
  $region40: #{lstm_stack_forward.1} parent=0 // pred_region
    _
  $region41: #{lstm_stack_forward.1} parent=0 // pred_fallthru
    _
  %v35 = vld [vmem:[%s5] sm:$0xff]
  %v36 = vld [vmem:[%s5 + $0x8] sm:$0xff]
  %v37 = vld [vmem:[%s5 + $0x10] sm:$0xff]
  %v38 = vld [vmem:[%s5 + $0x18] sm:$0xff]
  %v39 = vld [vmem:[%s6] sm:$0xff]
  %v40 = vld [vmem:[%s6 + $0x8] sm:$0xff]
  %v41 = vld [vmem:[%s6 + $0x10] sm:$0xff]
  %v42 = vld [vmem:[%s6 + $0x18] sm:$0xff]
  %v43 = vld [vmem:[%s6 + $0x20] sm:$0xff]
  %v44 = vld [vmem:[%s6 + $0x28] sm:$0xff]
  %v45 = vld [vmem:[%s6 + $0x30] sm:$0xff]
  %v46 = vld [vmem:[%s6 + $0x38] sm:$0xff]
  %v47 = vld [vmem:[%s7] sm:$0x1]
  %v49 = vlaneseq
  %v50 = vshrl.u32 %v49, 7
  %v51 = vsub.s32 0, %v50
  %v52 = vrot.slane %v47, %v51
  %v54 = vld [vmem:[%s1] sm:$0xff]
  %v55 = vld [vmem:[%s2] sm:$0xff]
  %v56 = vld [vmem:[%s3] sm:$0xff]
  %v57 = vld [vmem:[%s4] sm:$0xff]
  %v58 = vld [vmem:[%s0] sm:$0xff]
  %vm59 = vcmask 261120
  %v61 = vsel %vm59, %v54, 0
  %63 = vmatprep.subr.mxu0 0.0
  %64 = vmatpush1.msra.mxu0 %v35
  %65 = vmatprep.subr.mxu0 0.0
  %66 = vmatpush1.msra.mxu0 %v36
  %67 = vmatprep.subr.mxu0 0.0
  %68 = vmatpush1.msra.mxu0 %v37
  %69 = vmatprep.subr.mxu0 0.0
  %70 = vmatpush1.msra.mxu0 %v38
  %71 = vmatprep.subr.mxu0 0.0
  %72 = vmatpush1.msra.mxu0 0.0
  %73 = vmatprep.subr.mxu0 0.0
  %74 = vmatpush1.msra.mxu0 0.0
  %75 = vmatprep.subr.mxu0 0.0
  %76 = vmatpush1.msra.mxu0 0.0
  %77 = vmatprep.subr.mxu0 0.0
  %78 = vmatpush1.msra.mxu0 0.0
  %79 = vmatprep.subr.mxu0 0.0
  %80 = vmatpush1.msra.mxu0 0.0
  %81 = vmatprep.subr.mxu0 0.0
  %82 = vmatpush1.msra.mxu0 0.0
  %83 = vmatprep.subr.mxu0 0.0
  %84 = vmatpush1.msra.mxu0 0.0
  %85 = vmatprep.subr.mxu0 0.0
  %86 = vmatpush1.msra.mxu0 0.0
  %87 = vmatprep.subr.mxu0 0.0
  %88 = vmatpush1.msra.mxu0 0.0
  %89 = vmatprep.subr.mxu0 0.0
  %90 = vmatpush1.msra.mxu0 0.0
  %91 = vmatprep.subr.mxu0 0.0
  %92 = vmatpush1.msra.mxu0 0.0
  %93 = vmatprep.subr.mxu0 0.0
  %94 = vmatpush1.msra.mxu0 0.0
  %95 = vmatprep.subr.mxu0 0.0
  %96 = vmatpush1.msra.mxu0 0.0
  %97 = vmatprep.subr.mxu0 0.0
  %98 = vmatpush1.msra.mxu0 0.0
  %99 = vmatprep.subr.mxu0 0.0
  %100 = vmatpush1.msra.mxu0 0.0
  %101 = vmatprep.subr.mxu0 0.0
  %102 = vmatpush1.msra.mxu0 0.0
  %103 = vmatprep.subr.mxu0 0.0
  %104 = vmatpush1.msra.mxu0 0.0
  %105 = vmatprep.subr.mxu0 0.0
  %106 = vmatpush1.msra.mxu0 0.0
  %107 = vmatprep.subr.mxu0 0.0
  %108 = vmatpush1.msra.mxu0 0.0
  %109 = vmatprep.subr.mxu0 0.0
  %110 = vmatpush1.msra.mxu0 0.0
  %111 = vmatprep.subr.mxu0 0.0
  %112 = vmatpush1.msra.mxu0 0.0
  %113 = vmatprep.subr.mxu0 0.0
  %114 = vmatpush1.msra.mxu0 0.0
  %115 = vmatprep.subr.mxu0 0.0
  %116 = vmatpush1.msra.mxu0 0.0
  %117 = vmatprep.subr.mxu0 0.0
  %118 = vmatpush1.msra.mxu0 0.0
  %119 = vmatprep.subr.mxu0 0.0
  %120 = vmatpush1.msra.mxu0 0.0
  %121 = vmatprep.subr.mxu0 0.0
  %122 = vmatpush1.msra.mxu0 0.0
  %123 = vmatprep.subr.mxu0 0.0
  %124 = vmatpush1.msra.mxu0 0.0
  %125 = vmatprep.subr.mxu0 0.0
  %126 = vmatpush1.msra.mxu0 0.0
  %127 = vmatprep.mubr.f32.mxu0 0.0
  %128 = vmatmul.mubr.f32.gmra.mrb[0].mxu0 %v61
  %v129 = vpop.f32.mrb[0].mxu0
  %v130 = vadd.f32 0.0, %v129
  %v131 = vpop.f32.mrb[0].mxu0
  %132 = vdwg.mxu0
  %v133 = vadd.f32 %v58, %v130
  %v134 = vxor.u32 %v133, 2147483648
  %v135 = vmul.f32 %v134, 1.442695
  %v136 = vpow.pop %v135
  %v137 = vadd.f32 %v136, 1.0
  %v138 = vrcp.pop %v137
  %v139 = vmul.f32 1.0, %v138
  %v140 = vtanh.pop %v133
  %142 = vrot.lane.b32.xlu0 %v55, 32
  %v143 = vpop.permute.xlu0 %142
  %v145 = vmul.f32 %v139, %v143
  %147 = vrot.lane.b32.xlu0 %v140, 64
  %v148 = vpop.permute.xlu0 %147
  %v150 = vmul.f32 %v139, %v148
  %152 = vrot.lane.b32.xlu0 %v150, 32
  %v153 = vpop.permute.xlu0 %152
  %v155 = vadd.f32 %v145, %v153
  %v156 = vtanh.pop %v155
  %158 = vrot.lane.b32.xlu0 %v156, 64
  %v159 = vpop.permute.xlu0 %158
  %v161 = vmul.f32 %v139, %v159
  %163 = vrot.lane.b32.xlu0 %v161, 32
  %v164 = vpop.permute.xlu0 %163
  %167 = vrot.lane.b32.xlu0 %v56, 32
  %v168 = vpop.permute.xlu0 %167
  %v170 = vsel %vm59, %v164, %v168
  %vm171 = vcmask 523264
  %v173 = vsel %vm171, %v170, 0
  %175 = vmatprep.subr.mxu0 0.0
  %176 = vmatpush1.msra.mxu0 %v39
  %177 = vmatprep.subr.mxu0 0.0
  %178 = vmatpush1.msra.mxu0 %v40
  %179 = vmatprep.subr.mxu0 0.0
  %180 = vmatpush1.msra.mxu0 %v41
  %181 = vmatprep.subr.mxu0 0.0
  %182 = vmatpush1.msra.mxu0 %v42
  %183 = vmatprep.subr.mxu0 0.0
  %184 = vmatpush1.msra.mxu0 %v43
  %185 = vmatprep.subr.mxu0 0.0
  %186 = vmatpush1.msra.mxu0 %v44
  %187 = vmatprep.subr.mxu0 0.0
  %188 = vmatpush1.msra.mxu0 %v45
  %189 = vmatprep.subr.mxu0 0.0
  %190 = vmatpush1.msra.mxu0 %v46
  %191 = vmatprep.subr.mxu0 0.0
  %192 = vmatpush1.msra.mxu0 0.0
  %193 = vmatprep.subr.mxu0 0.0
  %194 = vmatpush1.msra.mxu0 0.0
  %195 = vmatprep.subr.mxu0 0.0
  %196 = vmatpush1.msra.mxu0 0.0
  %197 = vmatprep.subr.mxu0 0.0
  %198 = vmatpush1.msra.mxu0 0.0
  %199 = vmatprep.subr.mxu0 0.0
  %200 = vmatpush1.msra.mxu0 0.0
  %201 = vmatprep.subr.mxu0 0.0
  %202 = vmatpush1.msra.mxu0 0.0
  %203 = vmatprep.subr.mxu0 0.0
  %204 = vmatpush1.msra.mxu0 0.0
  %205 = vmatprep.subr.mxu0 0.0
  %206 = vmatpush1.msra.mxu0 0.0
  %207 = vmatprep.subr.mxu0 0.0
  %208 = vmatpush1.msra.mxu0 0.0
  %209 = vmatprep.subr.mxu0 0.0
  %210 = vmatpush1.msra.mxu0 0.0
  %211 = vmatprep.subr.mxu0 0.0
  %212 = vmatpush1.msra.mxu0 0.0
  %213 = vmatprep.subr.mxu0 0.0
  %214 = vmatpush1.msra.mxu0 0.0
  %215 = vmatprep.subr.mxu0 0.0
  %216 = vmatpush1.msra.mxu0 0.0
  %217 = vmatprep.subr.mxu0 0.0
  %218 = vmatpush1.msra.mxu0 0.0
  %219 = vmatprep.subr.mxu0 0.0
  %220 = vmatpush1.msra.mxu0 0.0
  %221 = vmatprep.subr.mxu0 0.0
  %222 = vmatpush1.msra.mxu0 0.0
  %223 = vmatprep.subr.mxu0 0.0
  %224 = vmatpush1.msra.mxu0 0.0
  %225 = vmatprep.subr.mxu0 0.0
  %226 = vmatpush1.msra.mxu0 0.0
  %227 = vmatprep.subr.mxu0 0.0
  %228 = vmatpush1.msra.mxu0 0.0
  %229 = vmatprep.subr.mxu0 0.0
  %230 = vmatpush1.msra.mxu0 0.0
  %231 = vmatprep.subr.mxu0 0.0
  %232 = vmatpush1.msra.mxu0 0.0
  %233 = vmatprep.subr.mxu0 0.0
  %234 = vmatpush1.msra.mxu0 0.0
  %235 = vmatprep.subr.mxu0 0.0
  %236 = vmatpush1.msra.mxu0 0.0
  %237 = vmatprep.subr.mxu0 0.0
  %238 = vmatpush1.msra.mxu0 0.0
  %239 = vmatprep.mubr.f32.mxu0 0.0
  %240 = vmatmul.mubr.f32.gmra.mrb[0].mxu0 %v173
  %v241 = vpop.f32.mrb[0].mxu0
  %v242 = vadd.f32 %v52, %v241
  %v243 = vpop.f32.mrb[0].mxu0
  %244 = vdwg.mxu0
  %v245 = vxor.u32 %v242, 2147483648
  %v246 = vmul.f32 %v245, 1.442695
  %v247 = vpow.pop %v246
  %v248 = vadd.f32 %v247, 1.0
  %v249 = vrcp.pop %v248
  %v250 = vmul.f32 1.0, %v249
  %v251 = vtanh.pop %v242
  %253 = vrot.lane.b32.xlu0 %v57, 32
  %v254 = vpop.permute.xlu0 %253
  %v256 = vmul.f32 %v250, %v254
  %258 = vrot.lane.b32.xlu0 %v251, 64
  %v259 = vpop.permute.xlu0 %258
  %v261 = vmul.f32 %v250, %v259
  %263 = vrot.lane.b32.xlu0 %v261, 32
  %v264 = vpop.permute.xlu0 %263
  %v266 = vadd.f32 %v256, %v264
  %v267 = vtanh.pop %v266
  %269 = vrot.lane.b32.xlu0 %v267, 64
  %v270 = vpop.permute.xlu0 %269
  %v272 = vmul.f32 %v250, %v270
  %s273 = scalar_lea.vmem %s0, 8
  %v274 = vld [vmem:[%s273] sm:$0xff]
  %v275 = vsel %vm59, %v164, 0
  %277 = vmatprep.subr.mxu0 0.0
  %278 = vmatpush1.msra.mxu0 %v35
  %279 = vmatprep.subr.mxu0 0.0
  %280 = vmatpush1.msra.mxu0 %v36
  %281 = vmatprep.subr.mxu0 0.0
  %282 = vmatpush1.msra.mxu0 %v37
  %283 = vmatprep.subr.mxu0 0.0
  %284 = vmatpush1.msra.mxu0 %v38
  %285 = vmatprep.subr.mxu0 0.0
  %286 = vmatpush1.msra.mxu0 0.0
  %287 = vmatprep.subr.mxu0 0.0
  %288 = vmatpush1.msra.mxu0 0.0
  %289 = vmatprep.subr.mxu0 0.0
  %290 = vmatpush1.msra.mxu0 0.0
  %291 = vmatprep.subr.mxu0 0.0
  %292 = vmatpush1.msra.mxu0 0.0
  %293 = vmatprep.subr.mxu0 0.0
  %294 = vmatpush1.msra.mxu0 0.0
  %295 = vmatprep.subr.mxu0 0.0
  %296 = vmatpush1.msra.mxu0 0.0
  %297 = vmatprep.subr.mxu0 0.0
  %298 = vmatpush1.msra.mxu0 0.0
  %299 = vmatprep.subr.mxu0 0.0
  %300 = vmatpush1.msra.mxu0 0.0
  %301 = vmatprep.subr.mxu0 0.0
  %302 = vmatpush1.msra.mxu0 0.0
  %303 = vmatprep.subr.mxu0 0.0
  %304 = vmatpush1.msra.mxu0 0.0
  %305 = vmatprep.subr.mxu0 0.0
  %306 = vmatpush1.msra.mxu0 0.0
  %307 = vmatprep.subr.mxu0 0.0
  %308 = vmatpush1.msra.mxu0 0.0
  %309 = vmatprep.subr.mxu0 0.0
  %310 = vmatpush1.msra.mxu0 0.0
  %311 = vmatprep.subr.mxu0 0.0
  %312 = vmatpush1.msra.mxu0 0.0
  %313 = vmatprep.subr.mxu0 0.0
  %314 = vmatpush1.msra.mxu0 0.0
  %315 = vmatprep.subr.mxu0 0.0
  %316 = vmatpush1.msra.mxu0 0.0
  %317 = vmatprep.subr.mxu0 0.0
  %318 = vmatpush1.msra.mxu0 0.0
  %319 = vmatprep.subr.mxu0 0.0
  %320 = vmatpush1.msra.mxu0 0.0
  %321 = vmatprep.subr.mxu0 0.0
  %322 = vmatpush1.msra.mxu0 0.0
  %323 = vmatprep.subr.mxu0 0.0
  %324 = vmatpush1.msra.mxu0 0.0
  %325 = vmatprep.subr.mxu0 0.0
  %326 = vmatpush1.msra.mxu0 0.0
  %327 = vmatprep.subr.mxu0 0.0
  %328 = vmatpush1.msra.mxu0 0.0
  %329 = vmatprep.subr.mxu0 0.0
  %330 = vmatpush1.msra.mxu0 0.0
  %331 = vmatprep.subr.mxu0 0.0
  %332 = vmatpush1.msra.mxu0 0.0
  %333 = vmatprep.subr.mxu0 0.0
  %334 = vmatpush1.msra.mxu0 0.0
  %335 = vmatprep.subr.mxu0 0.0
  %336 = vmatpush1.msra.mxu0 0.0
  %337 = vmatprep.subr.mxu0 0.0
  %338 = vmatpush1.msra.mxu0 0.0
  %339 = vmatprep.subr.mxu0 0.0
  %340 = vmatpush1.msra.mxu0 0.0
  %341 = vmatprep.mubr.f32.mxu0 0.0
  %342 = vmatmul.mubr.f32.gmra.mrb[0].mxu0 %v275
  %v343 = vpop.f32.mrb[0].mxu0
  %v344 = vadd.f32 0.0, %v343
  %v345 = vpop.f32.mrb[0].mxu0
  %346 = vdwg.mxu0
  %v347 = vadd.f32 %v274, %v344
  %v348 = vxor.u32 %v347, 2147483648
  %v349 = vmul.f32 %v348, 1.442695
  %v350 = vpow.pop %v349
  %v351 = vadd.f32 %v350, 1.0
  %v352 = vrcp.pop %v351
  %v353 = vmul.f32 1.0, %v352
  %v354 = vtanh.pop %v347
  %v355 = vmul.f32 %v353, %v155
  %357 = vrot.lane.b32.xlu0 %v354, 64
  %v358 = vpop.permute.xlu0 %357
  %v360 = vmul.f32 %v353, %v358
  %362 = vrot.lane.b32.xlu0 %v360, 32
  %v363 = vpop.permute.xlu0 %362
  %v365 = vadd.f32 %v355, %v363
  %v366 = vtanh.pop %v365
  %368 = vrot.lane.b32.xlu0 %v366, 64
  %v369 = vpop.permute.xlu0 %368
  %v371 = vmul.f32 %v353, %v369
  %373 = vrot.lane.b32.xlu0 %v371, 32
  %v374 = vpop.permute.xlu0 %373
  %377 = vrot.lane.b32.xlu0 %v272, 64
  %v378 = vpop.permute.xlu0 %377
  %v380 = vsel %vm59, %v374, %v378
  %v382 = vsel %vm171, %v380, 0
  %384 = vmatprep.subr.mxu0 0.0
  %385 = vmatpush1.msra.mxu0 %v39
  %386 = vmatprep.subr.mxu0 0.0
  %387 = vmatpush1.msra.mxu0 %v40
  %388 = vmatprep.subr.mxu0 0.0
  %389 = vmatpush1.msra.mxu0 %v41
  %390 = vmatprep.subr.mxu0 0.0
  %391 = vmatpush1.msra.mxu0 %v42
  %392 = vmatprep.subr.mxu0 0.0
  %393 = vmatpush1.msra.mxu0 %v43
  %394 = vmatprep.subr.mxu0 0.0
  %395 = vmatpush1.msra.mxu0 %v44
  %396 = vmatprep.subr.mxu0 0.0
  %397 = vmatpush1.msra.mxu0 %v45
  %398 = vmatprep.subr.mxu0 0.0
  %399 = vmatpush1.msra.mxu0 %v46
  %400 = vmatprep.subr.mxu0 0.0
  %401 = vmatpush1.msra.mxu0 0.0
  %402 = vmatprep.subr.mxu0 0.0
  %403 = vmatpush1.msra.mxu0 0.0
  %404 = vmatprep.subr.mxu0 0.0
  %405 = vmatpush1.msra.mxu0 0.0
  %406 = vmatprep.subr.mxu0 0.0
  %407 = vmatpush1.msra.mxu0 0.0
  %408 = vmatprep.subr.mxu0 0.0
  %409 = vmatpush1.msra.mxu0 0.0
  %410 = vmatprep.subr.mxu0 0.0
  %411 = vmatpush1.msra.mxu0 0.0
  %412 = vmatprep.subr.mxu0 0.0
  %413 = vmatpush1.msra.mxu0 0.0
  %414 = vmatprep.subr.mxu0 0.0
  %415 = vmatpush1.msra.mxu0 0.0
  %416 = vmatprep.subr.mxu0 0.0
  %417 = vmatpush1.msra.mxu0 0.0
  %418 = vmatprep.subr.mxu0 0.0
  %419 = vmatpush1.msra.mxu0 0.0
  %420 = vmatprep.subr.mxu0 0.0
  %421 = vmatpush1.msra.mxu0 0.0
  %422 = vmatprep.subr.mxu0 0.0
  %423 = vmatpush1.msra.mxu0 0.0
  %424 = vmatprep.subr.mxu0 0.0
  %425 = vmatpush1.msra.mxu0 0.0
  %426 = vmatprep.subr.mxu0 0.0
  %427 = vmatpush1.msra.mxu0 0.0
  %428 = vmatprep.subr.mxu0 0.0
  %429 = vmatpush1.msra.mxu0 0.0
  %430 = vmatprep.subr.mxu0 0.0
  %431 = vmatpush1.msra.mxu0 0.0
  %432 = vmatprep.subr.mxu0 0.0
  %433 = vmatpush1.msra.mxu0 0.0
  %434 = vmatprep.subr.mxu0 0.0
  %435 = vmatpush1.msra.mxu0 0.0
  %436 = vmatprep.subr.mxu0 0.0
  %437 = vmatpush1.msra.mxu0 0.0
  %438 = vmatprep.subr.mxu0 0.0
  %439 = vmatpush1.msra.mxu0 0.0
  %440 = vmatprep.subr.mxu0 0.0
  %441 = vmatpush1.msra.mxu0 0.0
  %442 = vmatprep.subr.mxu0 0.0
  %443 = vmatpush1.msra.mxu0 0.0
  %444 = vmatprep.subr.mxu0 0.0
  %445 = vmatpush1.msra.mxu0 0.0
  %446 = vmatprep.subr.mxu0 0.0
  %447 = vmatpush1.msra.mxu0 0.0
  %448 = vmatprep.mubr.f32.mxu0 0.0
  %449 = vmatmul.mubr.f32.gmra.mrb[0].mxu0 %v382
  %v450 = vpop.f32.mrb[0].mxu0
  %v451 = vadd.f32 %v52, %v450
  %v452 = vpop.f32.mrb[0].mxu0
  %453 = vdwg.mxu0
  %v454 = vxor.u32 %v451, 2147483648
  %v455 = vmul.f32 %v454, 1.442695
  %v456 = vpow.pop %v455
  %v457 = vadd.f32 %v456, 1.0
  %v458 = vrcp.pop %v457
  %v459 = vmul.f32 1.0, %v458
  %v460 = vtanh.pop %v451
  %v461 = vmul.f32 %v459, %v266
  %463 = vrot.lane.b32.xlu0 %v460, 64
  %v464 = vpop.permute.xlu0 %463
  %v466 = vmul.f32 %v459, %v464
  %468 = vrot.lane.b32.xlu0 %v466, 32
  %v469 = vpop.permute.xlu0 %468
  %v471 = vadd.f32 %v461, %v469
  %v472 = vtanh.pop %v471
  %474 = vrot.lane.b32.xlu0 %v472, 64
  %v475 = vpop.permute.xlu0 %474
  %v477 = vmul.f32 %v459, %v475
  %s478 = scalar_lea.vmem %s0, 16
  %v479 = vld [vmem:[%s478] sm:$0xff]
  %v480 = vsel %vm59, %v374, 0
  %482 = vmatprep.subr.mxu0 0.0
  %483 = vmatpush1.msra.mxu0 %v35
  %484 = vmatprep.subr.mxu0 0.0
  %485 = vmatpush1.msra.mxu0 %v36
  %486 = vmatprep.subr.mxu0 0.0
  %487 = vmatpush1.msra.mxu0 %v37
  %488 = vmatprep.subr.mxu0 0.0
  %489 = vmatpush1.msra.mxu0 %v38
  %490 = vmatprep.subr.mxu0 0.0
  %491 = vmatpush1.msra.mxu0 0.0
  %492 = vmatprep.subr.mxu0 0.0
  %493 = vmatpush1.msra.mxu0 0.0
  %494 = vmatprep.subr.mxu0 0.0
  %495 = vmatpush1.msra.mxu0 0.0
  %496 = vmatprep.subr.mxu0 0.0
  %497 = vmatpush1.msra.mxu0 0.0
  %498 = vmatprep.subr.mxu0 0.0
  %499 = vmatpush1.msra.mxu0 0.0
  %500 = vmatprep.subr.mxu0 0.0
  %501 = vmatpush1.msra.mxu0 0.0
  %502 = vmatprep.subr.mxu0 0.0
  %503 = vmatpush1.msra.mxu0 0.0
  %504 = vmatprep.subr.mxu0 0.0
  %505 = vmatpush1.msra.mxu0 0.0
  %506 = vmatprep.subr.mxu0 0.0
  %507 = vmatpush1.msra.mxu0 0.0
  %508 = vmatprep.subr.mxu0 0.0
  %509 = vmatpush1.msra.mxu0 0.0
  %510 = vmatprep.subr.mxu0 0.0
  %511 = vmatpush1.msra.mxu0 0.0
  %512 = vmatprep.subr.mxu0 0.0
  %513 = vmatpush1.msra.mxu0 0.0
  %514 = vmatprep.subr.mxu0 0.0
  %515 = vmatpush1.msra.mxu0 0.0
  %516 = vmatprep.subr.mxu0 0.0
  %517 = vmatpush1.msra.mxu0 0.0
  %518 = vmatprep.subr.mxu0 0.0
  %519 = vmatpush1.msra.mxu0 0.0
  %520 = vmatprep.subr.mxu0 0.0
  %521 = vmatpush1.msra.mxu0 0.0
  %522 = vmatprep.subr.mxu0 0.0
  %523 = vmatpush1.msra.mxu0 0.0
  %524 = vmatprep.subr.mxu0 0.0
  %525 = vmatpush1.msra.mxu0 0.0
  %526 = vmatprep.subr.mxu0 0.0
  %527 = vmatpush1.msra.mxu0 0.0
  %528 = vmatprep.subr.mxu0 0.0
  %529 = vmatpush1.msra.mxu0 0.0
  %530 = vmatprep.subr.mxu0 0.0
  %531 = vmatpush1.msra.mxu0 0.0
  %532 = vmatprep.subr.mxu0 0.0
  %533 = vmatpush1.msra.mxu0 0.0
  %534 = vmatprep.subr.mxu0 0.0
  %535 = vmatpush1.msra.mxu0 0.0
  %536 = vmatprep.subr.mxu0 0.0
  %537 = vmatpush1.msra.mxu0 0.0
  %538 = vmatprep.subr.mxu0 0.0
  %539 = vmatpush1.msra.mxu0 0.0
  %540 = vmatprep.subr.mxu0 0.0
  %541 = vmatpush1.msra.mxu0 0.0
  %542 = vmatprep.subr.mxu0 0.0
  %543 = vmatpush1.msra.mxu0 0.0
  %544 = vmatprep.subr.mxu0 0.0
  %545 = vmatpush1.msra.mxu0 0.0
  %546 = vmatprep.mubr.f32.mxu0 0.0
  %547 = vmatmul.mubr.f32.gmra.mrb[0].mxu0 %v480
  %v548 = vpop.f32.mrb[0].mxu0
  %v549 = vadd.f32 0.0, %v548
  %v550 = vpop.f32.mrb[0].mxu0
  %551 = vdwg.mxu0
  %v552 = vadd.f32 %v479, %v549
  %v553 = vxor.u32 %v552, 2147483648
  %v554 = vmul.f32 %v553, 1.442695
  %v555 = vpow.pop %v554
  %v556 = vadd.f32 %v555, 1.0
  %v557 = vrcp.pop %v556
  %v558 = vmul.f32 1.0, %v557
  %v559 = vtanh.pop %v552
  %v560 = vmul.f32 %v558, %v365
  %562 = vrot.lane.b32.xlu0 %v559, 64
  %v563 = vpop.permute.xlu0 %562
  %v565 = vmul.f32 %v558, %v563
  %567 = vrot.lane.b32.xlu0 %v565, 32
  %v568 = vpop.permute.xlu0 %567
  %v570 = vadd.f32 %v560, %v568
  %v571 = vtanh.pop %v570
  %573 = vrot.lane.b32.xlu0 %v571, 64
  %v574 = vpop.permute.xlu0 %573
  %v576 = vmul.f32 %v558, %v574
  %578 = vrot.lane.b32.xlu0 %v576, 32
  %v579 = vpop.permute.xlu0 %578
  %582 = vrot.lane.b32.xlu0 %v477, 64
  %v583 = vpop.permute.xlu0 %582
  %v585 = vsel %vm59, %v579, %v583
  %v587 = vsel %vm171, %v585, 0
  %589 = vmatprep.subr.mxu0 0.0
  %590 = vmatpush1.msra.mxu0 %v39
  %591 = vmatprep.subr.mxu0 0.0
  %592 = vmatpush1.msra.mxu0 %v40
  %593 = vmatprep.subr.mxu0 0.0
  %594 = vmatpush1.msra.mxu0 %v41
  %595 = vmatprep.subr.mxu0 0.0
  %596 = vmatpush1.msra.mxu0 %v42
  %597 = vmatprep.subr.mxu0 0.0
  %598 = vmatpush1.msra.mxu0 %v43
  %599 = vmatprep.subr.mxu0 0.0
  %600 = vmatpush1.msra.mxu0 %v44
  %601 = vmatprep.subr.mxu0 0.0
  %602 = vmatpush1.msra.mxu0 %v45
  %603 = vmatprep.subr.mxu0 0.0
  %604 = vmatpush1.msra.mxu0 %v46
  %605 = vmatprep.subr.mxu0 0.0
  %606 = vmatpush1.msra.mxu0 0.0
  %607 = vmatprep.subr.mxu0 0.0
  %608 = vmatpush1.msra.mxu0 0.0
  %609 = vmatprep.subr.mxu0 0.0
  %610 = vmatpush1.msra.mxu0 0.0
  %611 = vmatprep.subr.mxu0 0.0
  %612 = vmatpush1.msra.mxu0 0.0
  %613 = vmatprep.subr.mxu0 0.0
  %614 = vmatpush1.msra.mxu0 0.0
  %615 = vmatprep.subr.mxu0 0.0
  %616 = vmatpush1.msra.mxu0 0.0
  %617 = vmatprep.subr.mxu0 0.0
  %618 = vmatpush1.msra.mxu0 0.0
  %619 = vmatprep.subr.mxu0 0.0
  %620 = vmatpush1.msra.mxu0 0.0
  %621 = vmatprep.subr.mxu0 0.0
  %622 = vmatpush1.msra.mxu0 0.0
  %623 = vmatprep.subr.mxu0 0.0
  %624 = vmatpush1.msra.mxu0 0.0
  %625 = vmatprep.subr.mxu0 0.0
  %626 = vmatpush1.msra.mxu0 0.0
  %627 = vmatprep.subr.mxu0 0.0
  %628 = vmatpush1.msra.mxu0 0.0
  %629 = vmatprep.subr.mxu0 0.0
  %630 = vmatpush1.msra.mxu0 0.0
  %631 = vmatprep.subr.mxu0 0.0
  %632 = vmatpush1.msra.mxu0 0.0
  %633 = vmatprep.subr.mxu0 0.0
  %634 = vmatpush1.msra.mxu0 0.0
  %635 = vmatprep.subr.mxu0 0.0
  %636 = vmatpush1.msra.mxu0 0.0
  %637 = vmatprep.subr.mxu0 0.0
  %638 = vmatpush1.msra.mxu0 0.0
  %639 = vmatprep.subr.mxu0 0.0
  %640 = vmatpush1.msra.mxu0 0.0
  %641 = vmatprep.subr.mxu0 0.0
  %642 = vmatpush1.msra.mxu0 0.0
  %643 = vmatprep.subr.mxu0 0.0
  %644 = vmatpush1.msra.mxu0 0.0
  %645 = vmatprep.subr.mxu0 0.0
  %646 = vmatpush1.msra.mxu0 0.0
  %647 = vmatprep.subr.mxu0 0.0
  %648 = vmatpush1.msra.mxu0 0.0
  %649 = vmatprep.subr.mxu0 0.0
  %650 = vmatpush1.msra.mxu0 0.0
  %651 = vmatprep.subr.mxu0 0.0
  %652 = vmatpush1.msra.mxu0 0.0
  %653 = vmatprep.mubr.f32.mxu0 0.0
  %654 = vmatmul.mubr.f32.gmra.mrb[0].mxu0 %v587
  %v655 = vpop.f32.mrb[0].mxu0
  %v656 = vadd.f32 %v52, %v655
  %v657 = vpop.f32.mrb[0].mxu0
  %658 = vdwg.mxu0
  %v659 = vxor.u32 %v656, 2147483648
  %v660 = vmul.f32 %v659, 1.442695
  %v661 = vpow.pop %v660
  %v662 = vadd.f32 %v661, 1.0
  %v663 = vrcp.pop %v662
  %v664 = vmul.f32 1.0, %v663
  %v665 = vtanh.pop %v656
  %v666 = vmul.f32 %v664, %v471
  %668 = vrot.lane.b32.xlu0 %v665, 64
  %v669 = vpop.permute.xlu0 %668
  %v671 = vmul.f32 %v664, %v669
  %673 = vrot.lane.b32.xlu0 %v671, 32
  %v674 = vpop.permute.xlu0 %673
  %v676 = vadd.f32 %v666, %v674
  %v677 = vtanh.pop %v676
  %679 = vrot.lane.b32.xlu0 %v677, 64
  %v680 = vpop.permute.xlu0 %679
  %v682 = vmul.f32 %v664, %v680
  %s683 = scalar_lea.vmem %s0, 24
  %v684 = vld [vmem:[%s683] sm:$0xff]
  %v685 = vsel %vm59, %v579, 0
  %687 = vmatprep.subr.mxu0 0.0
  %688 = vmatpush1.msra.mxu0 %v35
  %689 = vmatprep.subr.mxu0 0.0
  %690 = vmatpush1.msra.mxu0 %v36
  %691 = vmatprep.subr.mxu0 0.0
  %692 = vmatpush1.msra.mxu0 %v37
  %693 = vmatprep.subr.mxu0 0.0
  %694 = vmatpush1.msra.mxu0 %v38
  %695 = vmatprep.subr.mxu0 0.0
  %696 = vmatpush1.msra.mxu0 0.0
  %697 = vmatprep.subr.mxu0 0.0
  %698 = vmatpush1.msra.mxu0 0.0
  %699 = vmatprep.subr.mxu0 0.0
  %700 = vmatpush1.msra.mxu0 0.0
  %701 = vmatprep.subr.mxu0 0.0
  %702 = vmatpush1.msra.mxu0 0.0
  %703 = vmatprep.subr.mxu0 0.0
  %704 = vmatpush1.msra.mxu0 0.0
  %705 = vmatprep.subr.mxu0 0.0
  %706 = vmatpush1.msra.mxu0 0.0
  %707 = vmatprep.subr.mxu0 0.0
  %708 = vmatpush1.msra.mxu0 0.0
  %709 = vmatprep.subr.mxu0 0.0
  %710 = vmatpush1.msra.mxu0 0.0
  %711 = vmatprep.subr.mxu0 0.0
  %712 = vmatpush1.msra.mxu0 0.0
  %713 = vmatprep.subr.mxu0 0.0
  %714 = vmatpush1.msra.mxu0 0.0
  %715 = vmatprep.subr.mxu0 0.0
  %716 = vmatpush1.msra.mxu0 0.0
  %717 = vmatprep.subr.mxu0 0.0
  %718 = vmatpush1.msra.mxu0 0.0
  %719 = vmatprep.subr.mxu0 0.0
  %720 = vmatpush1.msra.mxu0 0.0
  %721 = vmatprep.subr.mxu0 0.0
  %722 = vmatpush1.msra.mxu0 0.0
  %723 = vmatprep.subr.mxu0 0.0
  %724 = vmatpush1.msra.mxu0 0.0
  %725 = vmatprep.subr.mxu0 0.0
  %726 = vmatpush1.msra.mxu0 0.0
  %727 = vmatprep.subr.mxu0 0.0
  %728 = vmatpush1.msra.mxu0 0.0
  %729 = vmatprep.subr.mxu0 0.0
  %730 = vmatpush1.msra.mxu0 0.0
  %731 = vmatprep.subr.mxu0 0.0
  %732 = vmatpush1.msra.mxu0 0.0
  %733 = vmatprep.subr.mxu0 0.0
  %734 = vmatpush1.msra.mxu0 0.0
  %735 = vmatprep.subr.mxu0 0.0
  %736 = vmatpush1.msra.mxu0 0.0
  %737 = vmatprep.subr.mxu0 0.0
  %738 = vmatpush1.msra.mxu0 0.0
  %739 = vmatprep.subr.mxu0 0.0
  %740 = vmatpush1.msra.mxu0 0.0
  %741 = vmatprep.subr.mxu0 0.0
  %742 = vmatpush1.msra.mxu0 0.0
  %743 = vmatprep.subr.mxu0 0.0
  %744 = vmatpush1.msra.mxu0 0.0
  %745 = vmatprep.subr.mxu0 0.0
  %746 = vmatpush1.msra.mxu0 0.0
  %747 = vmatprep.subr.mxu0 0.0
  %748 = vmatpush1.msra.mxu0 0.0
  %749 = vmatprep.subr.mxu0 0.0
  %750 = vmatpush1.msra.mxu0 0.0
  %751 = vmatprep.mubr.f32.mxu0 0.0
  %752 = vmatmul.mubr.f32.gmra.mrb[0].mxu0 %v685
  %v753 = vpop.f32.mrb[0].mxu0
  %v754 = vadd.f32 0.0, %v753
  %v755 = vpop.f32.mrb[0].mxu0
  %756 = vdwg.mxu0
  %v757 = vadd.f32 %v684, %v754
  %v758 = vxor.u32 %v757, 2147483648
  %v759 = vmul.f32 %v758, 1.442695
  %v760 = vpow.pop %v759
  %v761 = vadd.f32 %v760, 1.0
  %v762 = vrcp.pop %v761
  %v763 = vmul.f32 1.0, %v762
  %v764 = vtanh.pop %v757
  %v765 = vmul.f32 %v763, %v570
  %767 = vrot.lane.b32.xlu0 %v764, 64
  %v768 = vpop.permute.xlu0 %767
  %v770 = vmul.f32 %v763, %v768
  %772 = vrot.lane.b32.xlu0 %v770, 32
  %v773 = vpop.permute.xlu0 %772
  %v775 = vadd.f32 %v765, %v773
  %v776 = vtanh.pop %v775
  %778 = vrot.lane.b32.xlu0 %v776, 64
  %v779 = vpop.permute.xlu0 %778
  %v781 = vmul.f32 %v763, %v779
  %783 = vrot.lane.b32.xlu0 %v781, 32
  %v784 = vpop.permute.xlu0 %783
  %787 = vrot.lane.b32.xlu0 %v682, 64
  %v788 = vpop.permute.xlu0 %787
  %v790 = vsel %vm59, %v784, %v788
  %v792 = vsel %vm171, %v790, 0
  %794 = vmatprep.subr.mxu0 0.0
  %795 = vmatpush1.msra.mxu0 %v39
  %796 = vmatprep.subr.mxu0 0.0
  %797 = vmatpush1.msra.mxu0 %v40
  %798 = vmatprep.subr.mxu0 0.0
  %799 = vmatpush1.msra.mxu0 %v41
  %800 = vmatprep.subr.mxu0 0.0
  %801 = vmatpush1.msra.mxu0 %v42
  %802 = vmatprep.subr.mxu0 0.0
  %803 = vmatpush1.msra.mxu0 %v43
  %804 = vmatprep.subr.mxu0 0.0
  %805 = vmatpush1.msra.mxu0 %v44
  %806 = vmatprep.subr.mxu0 0.0
  %807 = vmatpush1.msra.mxu0 %v45
  %808 = vmatprep.subr.mxu0 0.0
  %809 = vmatpush1.msra.mxu0 %v46
  %810 = vmatprep.subr.mxu0 0.0
  %811 = vmatpush1.msra.mxu0 0.0
  %812 = vmatprep.subr.mxu0 0.0
  %813 = vmatpush1.msra.mxu0 0.0
  %814 = vmatprep.subr.mxu0 0.0
  %815 = vmatpush1.msra.mxu0 0.0
  %816 = vmatprep.subr.mxu0 0.0
  %817 = vmatpush1.msra.mxu0 0.0
  %818 = vmatprep.subr.mxu0 0.0
  %819 = vmatpush1.msra.mxu0 0.0
  %820 = vmatprep.subr.mxu0 0.0
  %821 = vmatpush1.msra.mxu0 0.0
  %822 = vmatprep.subr.mxu0 0.0
  %823 = vmatpush1.msra.mxu0 0.0
  %824 = vmatprep.subr.mxu0 0.0
  %825 = vmatpush1.msra.mxu0 0.0
  %826 = vmatprep.subr.mxu0 0.0
  %827 = vmatpush1.msra.mxu0 0.0
  %828 = vmatprep.subr.mxu0 0.0
  %829 = vmatpush1.msra.mxu0 0.0
  %830 = vmatprep.subr.mxu0 0.0
  %831 = vmatpush1.msra.mxu0 0.0
  %832 = vmatprep.subr.mxu0 0.0
  %833 = vmatpush1.msra.mxu0 0.0
  %834 = vmatprep.subr.mxu0 0.0
  %835 = vmatpush1.msra.mxu0 0.0
  %836 = vmatprep.subr.mxu0 0.0
  %837 = vmatpush1.msra.mxu0 0.0
  %838 = vmatprep.subr.mxu0 0.0
  %839 = vmatpush1.msra.mxu0 0.0
  %840 = vmatprep.subr.mxu0 0.0
  %841 = vmatpush1.msra.mxu0 0.0
  %842 = vmatprep.subr.mxu0 0.0
  %843 = vmatpush1.msra.mxu0 0.0
  %844 = vmatprep.subr.mxu0 0.0
  %845 = vmatpush1.msra.mxu0 0.0
  %846 = vmatprep.subr.mxu0 0.0
  %847 = vmatpush1.msra.mxu0 0.0
  %848 = vmatprep.subr.mxu0 0.0
  %849 = vmatpush1.msra.mxu0 0.0
  %850 = vmatprep.subr.mxu0 0.0
  %851 = vmatpush1.msra.mxu0 0.0
  %852 = vmatprep.subr.mxu0 0.0
  %853 = vmatpush1.msra.mxu0 0.0
  %854 = vmatprep.subr.mxu0 0.0
  %855 = vmatpush1.msra.mxu0 0.0
  %856 = vmatprep.subr.mxu0 0.0
  %857 = vmatpush1.msra.mxu0 0.0
  %858 = vmatprep.mubr.f32.mxu0 0.0
  %859 = vmatmul.mubr.f32.gmra.mrb[0].mxu0 %v792
  %v860 = vpop.f32.mrb[0].mxu0
  %v861 = vadd.f32 %v52, %v860
  %v862 = vpop.f32.mrb[0].mxu0
  %863 = vdwg.mxu0
  %v864 = vxor.u32 %v861, 2147483648
  %v865 = vmul.f32 %v864, 1.442695
  %v866 = vpow.pop %v865
  %v867 = vadd.f32 %v866, 1.0
  %v868 = vrcp.pop %v867
  %v869 = vmul.f32 1.0, %v868
  %v870 = vtanh.pop %v861
  %v871 = vmul.f32 %v869, %v676
  %873 = vrot.lane.b32.xlu0 %v870, 64
  %v874 = vpop.permute.xlu0 %873
  %v876 = vmul.f32 %v869, %v874
  %878 = vrot.lane.b32.xlu0 %v876, 32
  %v879 = vpop.permute.xlu0 %878
  %v881 = vadd.f32 %v871, %v879
  %v882 = vtanh.pop %v881
  %884 = vrot.lane.b32.xlu0 %v882, 64
  %v885 = vpop.permute.xlu0 %884
  %v887 = vmul.f32 %v869, %v885
  %s888 = scalar_lea.vmem %s0, 32
  %v889 = vld [vmem:[%s888] sm:$0xff]
  %v890 = vsel %vm59, %v784, 0
  %892 = vmatprep.subr.mxu0 0.0
  %893 = vmatpush1.msra.mxu0 %v35
  %894 = vmatprep.subr.mxu0 0.0
  %895 = vmatpush1.msra.mxu0 %v36
  %896 = vmatprep.subr.mxu0 0.0
  %897 = vmatpush1.msra.mxu0 %v37
  %898 = vmatprep.subr.mxu0 0.0
  %899 = vmatpush1.msra.mxu0 %v38
  %900 = vmatprep.subr.mxu0 0.0
  %901 = vmatpush1.msra.mxu0 0.0
  %902 = vmatprep.subr.mxu0 0.0
  %903 = vmatpush1.msra.mxu0 0.0
  %904 = vmatprep.subr.mxu0 0.0
  %905 = vmatpush1.msra.mxu0 0.0
  %906 = vmatprep.subr.mxu0 0.0
  %907 = vmatpush1.msra.mxu0 0.0
  %908 = vmatprep.subr.mxu0 0.0
  %909 = vmatpush1.msra.mxu0 0.0
  %910 = vmatprep.subr.mxu0 0.0
  %911 = vmatpush1.msra.mxu0 0.0
  %912 = vmatprep.subr.mxu0 0.0
  %913 = vmatpush1.msra.mxu0 0.0
  %914 = vmatprep.subr.mxu0 0.0
  %915 = vmatpush1.msra.mxu0 0.0
  %916 = vmatprep.subr.mxu0 0.0
  %917 = vmatpush1.msra.mxu0 0.0
  %918 = vmatprep.subr.mxu0 0.0
  %919 = vmatpush1.msra.mxu0 0.0
  %920 = vmatprep.subr.mxu0 0.0
  %921 = vmatpush1.msra.mxu0 0.0
  %922 = vmatprep.subr.mxu0 0.0
  %923 = vmatpush1.msra.mxu0 0.0
  %924 = vmatprep.subr.mxu0 0.0
  %925 = vmatpush1.msra.mxu0 0.0
  %926 = vmatprep.subr.mxu0 0.0
  %927 = vmatpush1.msra.mxu0 0.0
  %928 = vmatprep.subr.mxu0 0.0
  %929 = vmatpush1.msra.mxu0 0.0
  %930 = vmatprep.subr.mxu0 0.0
  %931 = vmatpush1.msra.mxu0 0.0
  %932 = vmatprep.subr.mxu0 0.0
  %933 = vmatpush1.msra.mxu0 0.0
  %934 = vmatprep.subr.mxu0 0.0
  %935 = vmatpush1.msra.mxu0 0.0
  %936 = vmatprep.subr.mxu0 0.0
  %937 = vmatpush1.msra.mxu0 0.0
  %938 = vmatprep.subr.mxu0 0.0
  %939 = vmatpush1.msra.mxu0 0.0
  %940 = vmatprep.subr.mxu0 0.0
  %941 = vmatpush1.msra.mxu0 0.0
  %942 = vmatprep.subr.mxu0 0.0
  %943 = vmatpush1.msra.mxu0 0.0
  %944 = vmatprep.subr.mxu0 0.0
  %945 = vmatpush1.msra.mxu0 0.0
  %946 = vmatprep.subr.mxu0 0.0
  %947 = vmatpush1.msra.mxu0 0.0
  %948 = vmatprep.subr.mxu0 0.0
  %949 = vmatpush1.msra.mxu0 0.0
  %950 = vmatprep.subr.mxu0 0.0
  %951 = vmatpush1.msra.mxu0 0.0
  %952 = vmatprep.subr.mxu0 0.0
  %953 = vmatpush1.msra.mxu0 0.0
  %954 = vmatprep.subr.mxu0 0.0
  %955 = vmatpush1.msra.mxu0 0.0
  %956 = vmatprep.mubr.f32.mxu0 0.0
  %957 = vmatmul.mubr.f32.gmra.mrb[0].mxu0 %v890
  %v958 = vpop.f32.mrb[0].mxu0
  %v959 = vadd.f32 0.0, %v958
  %v960 = vpop.f32.mrb[0].mxu0
  %961 = vdwg.mxu0
  %v962 = vadd.f32 %v889, %v959
  %v963 = vxor.u32 %v962, 2147483648
  %v964 = vmul.f32 %v963, 1.442695
  %v965 = vpow.pop %v964
  %v966 = vadd.f32 %v965, 1.0
  %v967 = vrcp.pop %v966
  %v968 = vmul.f32 1.0, %v967
  %v969 = vtanh.pop %v962
  %v970 = vmul.f32 %v968, %v775
  %972 = vrot.lane.b32.xlu0 %v969, 64
  %v973 = vpop.permute.xlu0 %972
  %v975 = vmul.f32 %v968, %v973
  %977 = vrot.lane.b32.xlu0 %v975, 32
  %v978 = vpop.permute.xlu0 %977
  %v980 = vadd.f32 %v970, %v978
  %v981 = vtanh.pop %v980
  %983 = vrot.lane.b32.xlu0 %v981, 64
  %v984 = vpop.permute.xlu0 %983
  %v986 = vmul.f32 %v968, %v984
  %988 = vrot.lane.b32.xlu0 %v986, 32
  %v989 = vpop.permute.xlu0 %988
  %992 = vrot.lane.b32.xlu0 %v887, 64
  %v993 = vpop.permute.xlu0 %992
  %v995 = vsel %vm59, %v989, %v993
  %v997 = vsel %vm171, %v995, 0
  %999 = vmatprep.subr.mxu0 0.0
  %1000 = vmatpush1.msra.mxu0 %v39
  %1001 = vmatprep.subr.mxu0 0.0
  %1002 = vmatpush1.msra.mxu0 %v40
  %1003 = vmatprep.subr.mxu0 0.0
  %1004 = vmatpush1.msra.mxu0 %v41
  %1005 = vmatprep.subr.mxu0 0.0
  %1006 = vmatpush1.msra.mxu0 %v42
  %1007 = vmatprep.subr.mxu0 0.0
  %1008 = vmatpush1.msra.mxu0 %v43
  %1009 = vmatprep.subr.mxu0 0.0
  %1010 = vmatpush1.msra.mxu0 %v44
  %1011 = vmatprep.subr.mxu0 0.0
  %1012 = vmatpush1.msra.mxu0 %v45
  %1013 = vmatprep.subr.mxu0 0.0
  %1014 = vmatpush1.msra.mxu0 %v46
  %1015 = vmatprep.subr.mxu0 0.0
  %1016 = vmatpush1.msra.mxu0 0.0
  %1017 = vmatprep.subr.mxu0 0.0
  %1018 = vmatpush1.msra.mxu0 0.0
  %1019 = vmatprep.subr.mxu0 0.0
  %1020 = vmatpush1.msra.mxu0 0.0
  %1021 = vmatprep.subr.mxu0 0.0
  %1022 = vmatpush1.msra.mxu0 0.0
  %1023 = vmatprep.subr.mxu0 0.0
  %1024 = vmatpush1.msra.mxu0 0.0
  %1025 = vmatprep.subr.mxu0 0.0
  %1026 = vmatpush1.msra.mxu0 0.0
  %1027 = vmatprep.subr.mxu0 0.0
  %1028 = vmatpush1.msra.mxu0 0.0
  %1029 = vmatprep.subr.mxu0 0.0
  %1030 = vmatpush1.msra.mxu0 0.0
  %1031 = vmatprep.subr.mxu0 0.0
  %1032 = vmatpush1.msra.mxu0 0.0
  %1033 = vmatprep.subr.mxu0 0.0
  %1034 = vmatpush1.msra.mxu0 0.0
  %1035 = vmatprep.subr.mxu0 0.0
  %1036 = vmatpush1.msra.mxu0 0.0
  %1037 = vmatprep.subr.mxu0 0.0
  %1038 = vmatpush1.msra.mxu0 0.0
  %1039 = vmatprep.subr.mxu0 0.0
  %1040 = vmatpush1.msra.mxu0 0.0
  %1041 = vmatprep.subr.mxu0 0.0
  %1042 = vmatpush1.msra.mxu0 0.0
  %1043 = vmatprep.subr.mxu0 0.0
  %1044 = vmatpush1.msra.mxu0 0.0
  %1045 = vmatprep.subr.mxu0 0.0
  %1046 = vmatpush1.msra.mxu0 0.0
  %1047 = vmatprep.subr.mxu0 0.0
  %1048 = vmatpush1.msra.mxu0 0.0
  %1049 = vmatprep.subr.mxu0 0.0
  %1050 = vmatpush1.msra.mxu0 0.0
  %1051 = vmatprep.subr.mxu0 0.0
  %1052 = vmatpush1.msra.mxu0 0.0
  %1053 = vmatprep.subr.mxu0 0.0
  %1054 = vmatpush1.msra.mxu0 0.0
  %1055 = vmatprep.subr.mxu0 0.0
  %1056 = vmatpush1.msra.mxu0 0.0
  %1057 = vmatprep.subr.mxu0 0.0
  %1058 = vmatpush1.msra.mxu0 0.0
  %1059 = vmatprep.subr.mxu0 0.0
  %1060 = vmatpush1.msra.mxu0 0.0
  %1061 = vmatprep.subr.mxu0 0.0
  %1062 = vmatpush1.msra.mxu0 0.0
  %1063 = vmatprep.mubr.f32.mxu0 0.0
  %1064 = vmatmul.mubr.f32.gmra.mrb[0].mxu0 %v997
  %v1065 = vpop.f32.mrb[0].mxu0
  %v1066 = vadd.f32 %v52, %v1065
  %v1067 = vpop.f32.mrb[0].mxu0
  %1068 = vdwg.mxu0
  %v1069 = vxor.u32 %v1066, 2147483648
  %v1070 = vmul.f32 %v1069, 1.442695
  %v1071 = vpow.pop %v1070
  %v1072 = vadd.f32 %v1071, 1.0
  %v1073 = vrcp.pop %v1072
  %v1074 = vmul.f32 1.0, %v1073
  %v1075 = vtanh.pop %v1066
  %v1076 = vmul.f32 %v1074, %v881
  %1078 = vrot.lane.b32.xlu0 %v1075, 64
  %v1079 = vpop.permute.xlu0 %1078
  %v1081 = vmul.f32 %v1074, %v1079
  %1083 = vrot.lane.b32.xlu0 %v1081, 32
  %v1084 = vpop.permute.xlu0 %1083
  %v1086 = vadd.f32 %v1076, %v1084
  %v1087 = vtanh.pop %v1086
  %1089 = vrot.lane.b32.xlu0 %v1087, 64
  %v1090 = vpop.permute.xlu0 %1089
  %v1092 = vmul.f32 %v1074, %v1090
  %s1093 = scalar_lea.vmem %s0, 40
  %v1094 = vld [vmem:[%s1093] sm:$0xff]
  %v1095 = vsel %vm59, %v989, 0
  %1097 = vmatprep.subr.mxu0 0.0
  %1098 = vmatpush1.msra.mxu0 %v35
  %1099 = vmatprep.subr.mxu0 0.0
  %1100 = vmatpush1.msra.mxu0 %v36
  %1101 = vmatprep.subr.mxu0 0.0
  %1102 = vmatpush1.msra.mxu0 %v37
  %1103 = vmatprep.subr.mxu0 0.0
  %1104 = vmatpush1.msra.mxu0 %v38
  %1105 = vmatprep.subr.mxu0 0.0
  %1106 = vmatpush1.msra.mxu0 0.0
  %1107 = vmatprep.subr.mxu0 0.0
  %1108 = vmatpush1.msra.mxu0 0.0
  %1109 = vmatprep.subr.mxu0 0.0
  %1110 = vmatpush1.msra.mxu0 0.0
  %1111 = vmatprep.subr.mxu0 0.0
  %1112 = vmatpush1.msra.mxu0 0.0
  %1113 = vmatprep.subr.mxu0 0.0
  %1114 = vmatpush1.msra.mxu0 0.0
  %1115 = vmatprep.subr.mxu0 0.0
  %1116 = vmatpush1.msra.mxu0 0.0
  %1117 = vmatprep.subr.mxu0 0.0
  %1118 = vmatpush1.msra.mxu0 0.0
  %1119 = vmatprep.subr.mxu0 0.0
  %1120 = vmatpush1.msra.mxu0 0.0
  %1121 = vmatprep.subr.mxu0 0.0
  %1122 = vmatpush1.msra.mxu0 0.0
  %1123 = vmatprep.subr.mxu0 0.0
  %1124 = vmatpush1.msra.mxu0 0.0
  %1125 = vmatprep.subr.mxu0 0.0
  %1126 = vmatpush1.msra.mxu0 0.0
  %1127 = vmatprep.subr.mxu0 0.0
  %1128 = vmatpush1.msra.mxu0 0.0
  %1129 = vmatprep.subr.mxu0 0.0
  %1130 = vmatpush1.msra.mxu0 0.0
  %1131 = vmatprep.subr.mxu0 0.0
  %1132 = vmatpush1.msra.mxu0 0.0
  %1133 = vmatprep.subr.mxu0 0.0
  %1134 = vmatpush1.msra.mxu0 0.0
  %1135 = vmatprep.subr.mxu0 0.0
  %1136 = vmatpush1.msra.mxu0 0.0
  %1137 = vmatprep.subr.mxu0 0.0
  %1138 = vmatpush1.msra.mxu0 0.0
  %1139 = vmatprep.subr.mxu0 0.0
  %1140 = vmatpush1.msra.mxu0 0.0
  %1141 = vmatprep.subr.mxu0 0.0
  %1142 = vmatpush1.msra.mxu0 0.0
  %1143 = vmatprep.subr.mxu0 0.0
  %1144 = vmatpush1.msra.mxu0 0.0
  %1145 = vmatprep.subr.mxu0 0.0
  %1146 = vmatpush1.msra.mxu0 0.0
  %1147 = vmatprep.subr.mxu0 0.0
  %1148 = vmatpush1.msra.mxu0 0.0
  %1149 = vmatprep.subr.mxu0 0.0
  %1150 = vmatpush1.msra.mxu0 0.0
  %1151 = vmatprep.subr.mxu0 0.0
  %1152 = vmatpush1.msra.mxu0 0.0
  %1153 = vmatprep.subr.mxu0 0.0
  %1154 = vmatpush1.msra.mxu0 0.0
  %1155 = vmatprep.subr.mxu0 0.0
  %1156 = vmatpush1.msra.mxu0 0.0
  %1157 = vmatprep.subr.mxu0 0.0
  %1158 = vmatpush1.msra.mxu0 0.0
  %1159 = vmatprep.subr.mxu0 0.0
  %1160 = vmatpush1.msra.mxu0 0.0
  %1161 = vmatprep.mubr.f32.mxu0 0.0
  %1162 = vmatmul.mubr.f32.gmra.mrb[0].mxu0 %v1095
  %v1163 = vpop.f32.mrb[0].mxu0
  %v1164 = vadd.f32 0.0, %v1163
  %v1165 = vpop.f32.mrb[0].mxu0
  %1166 = vdwg.mxu0
  %v1167 = vadd.f32 %v1094, %v1164
  %v1168 = vxor.u32 %v1167, 2147483648
  %v1169 = vmul.f32 %v1168, 1.442695
  %v1170 = vpow.pop %v1169
  %v1171 = vadd.f32 %v1170, 1.0
  %v1172 = vrcp.pop %v1171
  %v1173 = vmul.f32 1.0, %v1172
  %v1174 = vtanh.pop %v1167
  %v1175 = vmul.f32 %v1173, %v980
  %1177 = vrot.lane.b32.xlu0 %v1174, 64
  %v1178 = vpop.permute.xlu0 %1177
  %v1180 = vmul.f32 %v1173, %v1178
  %1182 = vrot.lane.b32.xlu0 %v1180, 32
  %v1183 = vpop.permute.xlu0 %1182
  %v1185 = vadd.f32 %v1175, %v1183
  %v1186 = vtanh.pop %v1185
  %1188 = vrot.lane.b32.xlu0 %v1186, 64
  %v1189 = vpop.permute.xlu0 %1188
  %v1191 = vmul.f32 %v1173, %v1189
  %1193 = vrot.lane.b32.xlu0 %v1191, 32
  %v1194 = vpop.permute.xlu0 %1193
  %1197 = vrot.lane.b32.xlu0 %v1092, 64
  %v1198 = vpop.permute.xlu0 %1197
  %v1200 = vsel %vm59, %v1194, %v1198
  %v1202 = vsel %vm171, %v1200, 0
  %1204 = vmatprep.subr.mxu0 0.0
  %1205 = vmatpush1.msra.mxu0 %v39
  %1206 = vmatprep.subr.mxu0 0.0
  %1207 = vmatpush1.msra.mxu0 %v40
  %1208 = vmatprep.subr.mxu0 0.0
  %1209 = vmatpush1.msra.mxu0 %v41
  %1210 = vmatprep.subr.mxu0 0.0
  %1211 = vmatpush1.msra.mxu0 %v42
  %1212 = vmatprep.subr.mxu0 0.0
  %1213 = vmatpush1.msra.mxu0 %v43
  %1214 = vmatprep.subr.mxu0 0.0
  %1215 = vmatpush1.msra.mxu0 %v44
  %1216 = vmatprep.subr.mxu0 0.0
  %1217 = vmatpush1.msra.mxu0 %v45
  %1218 = vmatprep.subr.mxu0 0.0
  %1219 = vmatpush1.msra.mxu0 %v46
  %1220 = vmatprep.subr.mxu0 0.0
  %1221 = vmatpush1.msra.mxu0 0.0
  %1222 = vmatprep.subr.mxu0 0.0
  %1223 = vmatpush1.msra.mxu0 0.0
  %1224 = vmatprep.subr.mxu0 0.0
  %1225 = vmatpush1.msra.mxu0 0.0
  %1226 = vmatprep.subr.mxu0 0.0
  %1227 = vmatpush1.msra.mxu0 0.0
  %1228 = vmatprep.subr.mxu0 0.0
  %1229 = vmatpush1.msra.mxu0 0.0
  %1230 = vmatprep.subr.mxu0 0.0
  %1231 = vmatpush1.msra.mxu0 0.0
  %1232 = vmatprep.subr.mxu0 0.0
  %1233 = vmatpush1.msra.mxu0 0.0
  %1234 = vmatprep.subr.mxu0 0.0
  %1235 = vmatpush1.msra.mxu0 0.0
  %1236 = vmatprep.subr.mxu0 0.0
  %1237 = vmatpush1.msra.mxu0 0.0
  %1238 = vmatprep.subr.mxu0 0.0
  %1239 = vmatpush1.msra.mxu0 0.0
  %1240 = vmatprep.subr.mxu0 0.0
  %1241 = vmatpush1.msra.mxu0 0.0
  %1242 = vmatprep.subr.mxu0 0.0
  %1243 = vmatpush1.msra.mxu0 0.0
  %1244 = vmatprep.subr.mxu0 0.0
  %1245 = vmatpush1.msra.mxu0 0.0
  %1246 = vmatprep.subr.mxu0 0.0
  %1247 = vmatpush1.msra.mxu0 0.0
  %1248 = vmatprep.subr.mxu0 0.0
  %1249 = vmatpush1.msra.mxu0 0.0
  %1250 = vmatprep.subr.mxu0 0.0
  %1251 = vmatpush1.msra.mxu0 0.0
  %1252 = vmatprep.subr.mxu0 0.0
  %1253 = vmatpush1.msra.mxu0 0.0
  %1254 = vmatprep.subr.mxu0 0.0
  %1255 = vmatpush1.msra.mxu0 0.0
  %1256 = vmatprep.subr.mxu0 0.0
  %1257 = vmatpush1.msra.mxu0 0.0
  %1258 = vmatprep.subr.mxu0 0.0
  %1259 = vmatpush1.msra.mxu0 0.0
  %1260 = vmatprep.subr.mxu0 0.0
  %1261 = vmatpush1.msra.mxu0 0.0
  %1262 = vmatprep.subr.mxu0 0.0
  %1263 = vmatpush1.msra.mxu0 0.0
  %1264 = vmatprep.subr.mxu0 0.0
  %1265 = vmatpush1.msra.mxu0 0.0
  %1266 = vmatprep.subr.mxu0 0.0
  %1267 = vmatpush1.msra.mxu0 0.0
  %1268 = vmatprep.mubr.f32.mxu0 0.0
  %1269 = vmatmul.mubr.f32.gmra.mrb[0].mxu0 %v1202
  %v1270 = vpop.f32.mrb[0].mxu0
  %v1271 = vadd.f32 %v52, %v1270
  %v1272 = vpop.f32.mrb[0].mxu0
  %1273 = vdwg.mxu0
  %v1274 = vxor.u32 %v1271, 2147483648
  %v1275 = vmul.f32 %v1274, 1.442695
  %v1276 = vpow.pop %v1275
  %v1277 = vadd.f32 %v1276, 1.0
  %v1278 = vrcp.pop %v1277
  %v1279 = vmul.f32 1.0, %v1278
  %v1280 = vtanh.pop %v1271
  %v1281 = vmul.f32 %v1279, %v1086
  %1283 = vrot.lane.b32.xlu0 %v1280, 64
  %v1284 = vpop.permute.xlu0 %1283
  %v1286 = vmul.f32 %v1279, %v1284
  %1288 = vrot.lane.b32.xlu0 %v1286, 32
  %v1289 = vpop.permute.xlu0 %1288
  %v1291 = vadd.f32 %v1281, %v1289
  %v1292 = vtanh.pop %v1291
  %1294 = vrot.lane.b32.xlu0 %v1292, 64
  %v1295 = vpop.permute.xlu0 %1294
  %v1297 = vmul.f32 %v1279, %v1295
  %1299 = vrot.lane.b32.xlu0 %v1297, 32
  %v1300 = vpop.permute.xlu0 %1299
  %1302 = vst.msk [vmem:[#allocation2] sm:$0xff] %vm59, %v1300
  %s1303 = scalar_lea.vmem %s0, 48
  %v1304 = vld [vmem:[%s1303] sm:$0xff]
  %v1305 = vsel %vm59, %v1194, 0
  %1307 = vmatprep.subr.mxu0 0.0
  %1308 = vmatpush1.msra.mxu0 %v35
  %1309 = vmatprep.subr.mxu0 0.0
  %1310 = vmatpush1.msra.mxu0 %v36
  %1311 = vmatprep.subr.mxu0 0.0
  %1312 = vmatpush1.msra.mxu0 %v37
  %1313 = vmatprep.subr.mxu0 0.0
  %1314 = vmatpush1.msra.mxu0 %v38
  %1315 = vmatprep.subr.mxu0 0.0
  %1316 = vmatpush1.msra.mxu0 0.0
  %1317 = vmatprep.subr.mxu0 0.0
  %1318 = vmatpush1.msra.mxu0 0.0
  %1319 = vmatprep.subr.mxu0 0.0
  %1320 = vmatpush1.msra.mxu0 0.0
  %1321 = vmatprep.subr.mxu0 0.0
  %1322 = vmatpush1.msra.mxu0 0.0
  %1323 = vmatprep.subr.mxu0 0.0
  %1324 = vmatpush1.msra.mxu0 0.0
  %1325 = vmatprep.subr.mxu0 0.0
  %1326 = vmatpush1.msra.mxu0 0.0
  %1327 = vmatprep.subr.mxu0 0.0
  %1328 = vmatpush1.msra.mxu0 0.0
  %1329 = vmatprep.subr.mxu0 0.0
  %1330 = vmatpush1.msra.mxu0 0.0
  %1331 = vmatprep.subr.mxu0 0.0
  %1332 = vmatpush1.msra.mxu0 0.0
  %1333 = vmatprep.subr.mxu0 0.0
  %1334 = vmatpush1.msra.mxu0 0.0
  %1335 = vmatprep.subr.mxu0 0.0
  %1336 = vmatpush1.msra.mxu0 0.0
  %1337 = vmatprep.subr.mxu0 0.0
  %1338 = vmatpush1.msra.mxu0 0.0
  %1339 = vmatprep.subr.mxu0 0.0
  %1340 = vmatpush1.msra.mxu0 0.0
  %1341 = vmatprep.subr.mxu0 0.0
  %1342 = vmatpush1.msra.mxu0 0.0
  %1343 = vmatprep.subr.mxu0 0.0
  %1344 = vmatpush1.msra.mxu0 0.0
  %1345 = vmatprep.subr.mxu0 0.0
  %1346 = vmatpush1.msra.mxu0 0.0
  %1347 = vmatprep.subr.mxu0 0.0
  %1348 = vmatpush1.msra.mxu0 0.0
  %1349 = vmatprep.subr.mxu0 0.0
  %1350 = vmatpush1.msra.mxu0 0.0
  %1351 = vmatprep.subr.mxu0 0.0
  %1352 = vmatpush1.msra.mxu0 0.0
  %1353 = vmatprep.subr.mxu0 0.0
  %1354 = vmatpush1.msra.mxu0 0.0
  %1355 = vmatprep.subr.mxu0 0.0
  %1356 = vmatpush1.msra.mxu0 0.0
  %1357 = vmatprep.subr.mxu0 0.0
  %1358 = vmatpush1.msra.mxu0 0.0
  %1359 = vmatprep.subr.mxu0 0.0
  %1360 = vmatpush1.msra.mxu0 0.0
  %1361 = vmatprep.subr.mxu0 0.0
  %1362 = vmatpush1.msra.mxu0 0.0
  %1363 = vmatprep.subr.mxu0 0.0
  %1364 = vmatpush1.msra.mxu0 0.0
  %1365 = vmatprep.subr.mxu0 0.0
  %1366 = vmatpush1.msra.mxu0 0.0
  %1367 = vmatprep.subr.mxu0 0.0
  %1368 = vmatpush1.msra.mxu0 0.0
  %1369 = vmatprep.subr.mxu0 0.0
  %1370 = vmatpush1.msra.mxu0 0.0
  %1371 = vmatprep.mubr.f32.mxu0 0.0
  %1372 = vmatmul.mubr.f32.gmra.mrb[0].mxu0 %v1305
  %v1373 = vpop.f32.mrb[0].mxu0
  %v1374 = vadd.f32 0.0, %v1373
  %v1375 = vpop.f32.mrb[0].mxu0
  %1376 = vdwg.mxu0
  %v1377 = vadd.f32 %v1304, %v1374
  %v1378 = vxor.u32 %v1377, 2147483648
  %v1379 = vmul.f32 %v1378, 1.442695
  %v1380 = vpow.pop %v1379
  %v1381 = vadd.f32 %v1380, 1.0
  %v1382 = vrcp.pop %v1381
  %v1383 = vmul.f32 1.0, %v1382
  %v1384 = vtanh.pop %v1377
  %v1385 = vmul.f32 %v1383, %v1185
  %1387 = vrot.lane.b32.xlu0 %v1384, 64
  %v1388 = vpop.permute.xlu0 %1387
  %v1390 = vmul.f32 %v1383, %v1388
  %1392 = vrot.lane.b32.xlu0 %v1390, 32
  %v1393 = vpop.permute.xlu0 %1392
  %v1395 = vadd.f32 %v1385, %v1393
  %v1396 = vtanh.pop %v1395
  %1398 = vrot.lane.b32.xlu0 %v1396, 64
  %v1399 = vpop.permute.xlu0 %1398
  %v1401 = vmul.f32 %v1383, %v1399
  %1403 = vrot.lane.b32.xlu0 %v1401, 32
  %v1404 = vpop.permute.xlu0 %1403
  %1406 = vrot.lane.b32.xlu0 %v1297, 64
  %v1407 = vpop.permute.xlu0 %1406
  %v1409 = vsel %vm59, %v1404, %v1407
  %v1411 = vsel %vm171, %v1409, 0
  %1413 = vmatprep.subr.mxu0 0.0
  %1414 = vmatpush1.msra.mxu0 %v39
  %1415 = vmatprep.subr.mxu0 0.0
  %1416 = vmatpush1.msra.mxu0 %v40
  %1417 = vmatprep.subr.mxu0 0.0
  %1418 = vmatpush1.msra.mxu0 %v41
  %1419 = vmatprep.subr.mxu0 0.0
  %1420 = vmatpush1.msra.mxu0 %v42
  %1421 = vmatprep.subr.mxu0 0.0
  %1422 = vmatpush1.msra.mxu0 %v43
  %1423 = vmatprep.subr.mxu0 0.0
  %1424 = vmatpush1.msra.mxu0 %v44
  %1425 = vmatprep.subr.mxu0 0.0
  %1426 = vmatpush1.msra.mxu0 %v45
  %1427 = vmatprep.subr.mxu0 0.0
  %1428 = vmatpush1.msra.mxu0 %v46
  %1429 = vmatprep.subr.mxu0 0.0
  %1430 = vmatpush1.msra.mxu0 0.0
  %1431 = vmatprep.subr.mxu0 0.0
  %1432 = vmatpush1.msra.mxu0 0.0
  %1433 = vmatprep.subr.mxu0 0.0
  %1434 = vmatpush1.msra.mxu0 0.0
  %1435 = vmatprep.subr.mxu0 0.0
  %1436 = vmatpush1.msra.mxu0 0.0
  %1437 = vmatprep.subr.mxu0 0.0
  %1438 = vmatpush1.msra.mxu0 0.0
  %1439 = vmatprep.subr.mxu0 0.0
  %1440 = vmatpush1.msra.mxu0 0.0
  %1441 = vmatprep.subr.mxu0 0.0
  %1442 = vmatpush1.msra.mxu0 0.0
  %1443 = vmatprep.subr.mxu0 0.0
  %1444 = vmatpush1.msra.mxu0 0.0
  %1445 = vmatprep.subr.mxu0 0.0
  %1446 = vmatpush1.msra.mxu0 0.0
  %1447 = vmatprep.subr.mxu0 0.0
  %1448 = vmatpush1.msra.mxu0 0.0
  %1449 = vmatprep.subr.mxu0 0.0
  %1450 = vmatpush1.msra.mxu0 0.0
  %1451 = vmatprep.subr.mxu0 0.0
  %1452 = vmatpush1.msra.mxu0 0.0
  %1453 = vmatprep.subr.mxu0 0.0
  %1454 = vmatpush1.msra.mxu0 0.0
  %1455 = vmatprep.subr.mxu0 0.0
  %1456 = vmatpush1.msra.mxu0 0.0
  %1457 = vmatprep.subr.mxu0 0.0
  %1458 = vmatpush1.msra.mxu0 0.0
  %1459 = vmatprep.subr.mxu0 0.0
  %1460 = vmatpush1.msra.mxu0 0.0
  %1461 = vmatprep.subr.mxu0 0.0
  %1462 = vmatpush1.msra.mxu0 0.0
  %1463 = vmatprep.subr.mxu0 0.0
  %1464 = vmatpush1.msra.mxu0 0.0
  %1465 = vmatprep.subr.mxu0 0.0
  %1466 = vmatpush1.msra.mxu0 0.0
  %1467 = vmatprep.subr.mxu0 0.0
  %1468 = vmatpush1.msra.mxu0 0.0
  %1469 = vmatprep.subr.mxu0 0.0
  %1470 = vmatpush1.msra.mxu0 0.0
  %1471 = vmatprep.subr.mxu0 0.0
  %1472 = vmatpush1.msra.mxu0 0.0
  %1473 = vmatprep.subr.mxu0 0.0
  %1474 = vmatpush1.msra.mxu0 0.0
  %1475 = vmatprep.subr.mxu0 0.0
  %1476 = vmatpush1.msra.mxu0 0.0
  %1477 = vmatprep.mubr.f32.mxu0 0.0
  %1478 = vmatmul.mubr.f32.gmra.mrb[0].mxu0 %v1411
  %v1479 = vpop.f32.mrb[0].mxu0
  %v1480 = vadd.f32 %v52, %v1479
  %v1481 = vpop.f32.mrb[0].mxu0
  %1482 = vdwg.mxu0
  %v1483 = vxor.u32 %v1480, 2147483648
  %v1484 = vmul.f32 %v1483, 1.442695
  %v1485 = vpow.pop %v1484
  %v1486 = vadd.f32 %v1485, 1.0
  %v1487 = vrcp.pop %v1486
  %v1488 = vmul.f32 1.0, %v1487
  %v1489 = vtanh.pop %v1480
  %v1490 = vmul.f32 %v1488, %v1291
  %1492 = vrot.lane.b32.xlu0 %v1489, 64
  %v1493 = vpop.permute.xlu0 %1492
  %v1495 = vmul.f32 %v1488, %v1493
  %1497 = vrot.lane.b32.xlu0 %v1495, 32
  %v1498 = vpop.permute.xlu0 %1497
  %v1500 = vadd.f32 %v1490, %v1498
  %v1501 = vtanh.pop %v1500
  %1503 = vrot.lane.b32.xlu0 %v1501, 64
  %v1504 = vpop.permute.xlu0 %1503
  %v1506 = vmul.f32 %v1488, %v1504
  %1508 = vrot.lane.b32.xlu0 %v1506, 32
  %v1509 = vpop.permute.xlu0 %1508
  %1511 = vst.msk [vmem:[#allocation2 + $0x8] sm:$0xff] %vm59, %v1509
  %s1512 = scalar_lea.vmem %s0, 56
  %v1513 = vld [vmem:[%s1512] sm:$0xff]
  %v1514 = vsel %vm59, %v1404, 0
  %1516 = vmatprep.subr.mxu0 0.0
  %1517 = vmatpush1.msra.mxu0 %v35
  %1518 = vmatprep.subr.mxu0 0.0
  %1519 = vmatpush1.msra.mxu0 %v36
  %1520 = vmatprep.subr.mxu0 0.0
  %1521 = vmatpush1.msra.mxu0 %v37
  %1522 = vmatprep.subr.mxu0 0.0
  %1523 = vmatpush1.msra.mxu0 %v38
  %1524 = vmatprep.subr.mxu0 0.0
  %1525 = vmatpush1.msra.mxu0 0.0
  %1526 = vmatprep.subr.mxu0 0.0
  %1527 = vmatpush1.msra.mxu0 0.0
  %1528 = vmatprep.subr.mxu0 0.0
  %1529 = vmatpush1.msra.mxu0 0.0
  %1530 = vmatprep.subr.mxu0 0.0
  %1531 = vmatpush1.msra.mxu0 0.0
  %1532 = vmatprep.subr.mxu0 0.0
  %1533 = vmatpush1.msra.mxu0 0.0
  %1534 = vmatprep.subr.mxu0 0.0
  %1535 = vmatpush1.msra.mxu0 0.0
  %1536 = vmatprep.subr.mxu0 0.0
  %1537 = vmatpush1.msra.mxu0 0.0
  %1538 = vmatprep.subr.mxu0 0.0
  %1539 = vmatpush1.msra.mxu0 0.0
  %1540 = vmatprep.subr.mxu0 0.0
  %1541 = vmatpush1.msra.mxu0 0.0
  %1542 = vmatprep.subr.mxu0 0.0
  %1543 = vmatpush1.msra.mxu0 0.0
  %1544 = vmatprep.subr.mxu0 0.0
  %1545 = vmatpush1.msra.mxu0 0.0
  %1546 = vmatprep.subr.mxu0 0.0
  %1547 = vmatpush1.msra.mxu0 0.0
  %1548 = vmatprep.subr.mxu0 0.0
  %1549 = vmatpush1.msra.mxu0 0.0
  %1550 = vmatprep.subr.mxu0 0.0
  %1551 = vmatpush1.msra.mxu0 0.0
  %1552 = vmatprep.subr.mxu0 0.0
  %1553 = vmatpush1.msra.mxu0 0.0
  %1554 = vmatprep.subr.mxu0 0.0
  %1555 = vmatpush1.msra.mxu0 0.0
  %1556 = vmatprep.subr.mxu0 0.0
  %1557 = vmatpush1.msra.mxu0 0.0
  %1558 = vmatprep.subr.mxu0 0.0
  %1559 = vmatpush1.msra.mxu0 0.0
  %1560 = vmatprep.subr.mxu0 0.0
  %1561 = vmatpush1.msra.mxu0 0.0
  %1562 = vmatprep.subr.mxu0 0.0
  %1563 = vmatpush1.msra.mxu0 0.0
  %1564 = vmatprep.subr.mxu0 0.0
  %1565 = vmatpush1.msra.mxu0 0.0
  %1566 = vmatprep.subr.mxu0 0.0
  %1567 = vmatpush1.msra.mxu0 0.0
  %1568 = vmatprep.subr.mxu0 0.0
  %1569 = vmatpush1.msra.mxu0 0.0
  %1570 = vmatprep.subr.mxu0 0.0
  %1571 = vmatpush1.msra.mxu0 0.0
  %1572 = vmatprep.subr.mxu0 0.0
  %1573 = vmatpush1.msra.mxu0 0.0
  %1574 = vmatprep.subr.mxu0 0.0
  %1575 = vmatpush1.msra.mxu0 0.0
  %1576 = vmatprep.subr.mxu0 0.0
  %1577 = vmatpush1.msra.mxu0 0.0
  %1578 = vmatprep.subr.mxu0 0.0
  %1579 = vmatpush1.msra.mxu0 0.0
  %1580 = vmatprep.mubr.f32.mxu0 0.0
  %1581 = vmatmul.mubr.f32.gmra.mrb[0].mxu0 %v1514
  %v1582 = vpop.f32.mrb[0].mxu0
  %v1583 = vadd.f32 0.0, %v1582
  %v1584 = vpop.f32.mrb[0].mxu0
  %1585 = vdwg.mxu0
  %v1586 = vadd.f32 %v1513, %v1583
  %v1587 = vxor.u32 %v1586, 2147483648
  %v1588 = vmul.f32 %v1587, 1.442695
  %v1589 = vpow.pop %v1588
  %v1590 = vadd.f32 %v1589, 1.0
  %v1591 = vrcp.pop %v1590
  %v1592 = vmul.f32 1.0, %v1591
  %v1593 = vtanh.pop %v1586
  %v1594 = vmul.f32 %v1592, %v1395
  %1596 = vrot.lane.b32.xlu0 %v1593, 64
  %v1597 = vpop.permute.xlu0 %1596
  %v1599 = vmul.f32 %v1592, %v1597
  %1601 = vrot.lane.b32.xlu0 %v1599, 32
  %v1602 = vpop.permute.xlu0 %1601
  %v1604 = vadd.f32 %v1594, %v1602
  %v1605 = vtanh.pop %v1604
  %1607 = vrot.lane.b32.xlu0 %v1605, 64
  %v1608 = vpop.permute.xlu0 %1607
  %v1610 = vmul.f32 %v1592, %v1608
  %1612 = vrot.lane.b32.xlu0 %v1610, 32
  %v1613 = vpop.permute.xlu0 %1612
  %1615 = vrot.lane.b32.xlu0 %v1506, 64
  %v1616 = vpop.permute.xlu0 %1615
  %v1618 = vsel %vm59, %v1613, %v1616
  %v1620 = vsel %vm171, %v1618, 0
  %1622 = vmatprep.subr.mxu0 0.0
  %1623 = vmatpush1.msra.mxu0 %v39
  %1624 = vmatprep.subr.mxu0 0.0
  %1625 = vmatpush1.msra.mxu0 %v40
  %1626 = vmatprep.subr.mxu0 0.0
  %1627 = vmatpush1.msra.mxu0 %v41
  %1628 = vmatprep.subr.mxu0 0.0
  %1629 = vmatpush1.msra.mxu0 %v42
  %1630 = vmatprep.subr.mxu0 0.0
  %1631 = vmatpush1.msra.mxu0 %v43
  %1632 = vmatprep.subr.mxu0 0.0
  %1633 = vmatpush1.msra.mxu0 %v44
  %1634 = vmatprep.subr.mxu0 0.0
  %1635 = vmatpush1.msra.mxu0 %v45
  %1636 = vmatprep.subr.mxu0 0.0
  %1637 = vmatpush1.msra.mxu0 %v46
  %1638 = vmatprep.subr.mxu0 0.0
  %1639 = vmatpush1.msra.mxu0 0.0
  %1640 = vmatprep.subr.mxu0 0.0
  %1641 = vmatpush1.msra.mxu0 0.0
  %1642 = vmatprep.subr.mxu0 0.0
  %1643 = vmatpush1.msra.mxu0 0.0
  %1644 = vmatprep.subr.mxu0 0.0
  %1645 = vmatpush1.msra.mxu0 0.0
  %1646 = vmatprep.subr.mxu0 0.0
  %1647 = vmatpush1.msra.mxu0 0.0
  %1648 = vmatprep.subr.mxu0 0.0
  %1649 = vmatpush1.msra.mxu0 0.0
  %1650 = vmatprep.subr.mxu0 0.0
  %1651 = vmatpush1.msra.mxu0 0.0
  %1652 = vmatprep.subr.mxu0 0.0
  %1653 = vmatpush1.msra.mxu0 0.0
  %1654 = vmatprep.subr.mxu0 0.0
  %1655 = vmatpush1.msra.mxu0 0.0
  %1656 = vmatprep.subr.mxu0 0.0
  %1657 = vmatpush1.msra.mxu0 0.0
  %1658 = vmatprep.subr.mxu0 0.0
  %1659 = vmatpush1.msra.mxu0 0.0
  %1660 = vmatprep.subr.mxu0 0.0
  %1661 = vmatpush1.msra.mxu0 0.0
  %1662 = vmatprep.subr.mxu0 0.0
  %1663 = vmatpush1.msra.mxu0 0.0
  %1664 = vmatprep.subr.mxu0 0.0
  %1665 = vmatpush1.msra.mxu0 0.0
  %1666 = vmatprep.subr.mxu0 0.0
  %1667 = vmatpush1.msra.mxu0 0.0
  %1668 = vmatprep.subr.mxu0 0.0
  %1669 = vmatpush1.msra.mxu0 0.0
  %1670 = vmatprep.subr.mxu0 0.0
  %1671 = vmatpush1.msra.mxu0 0.0
  %1672 = vmatprep.subr.mxu0 0.0
  %1673 = vmatpush1.msra.mxu0 0.0
  %1674 = vmatprep.subr.mxu0 0.0
  %1675 = vmatpush1.msra.mxu0 0.0
  %1676 = vmatprep.subr.mxu0 0.0
  %1677 = vmatpush1.msra.mxu0 0.0
  %1678 = vmatprep.subr.mxu0 0.0
  %1679 = vmatpush1.msra.mxu0 0.0
  %1680 = vmatprep.subr.mxu0 0.0
  %1681 = vmatpush1.msra.mxu0 0.0
  %1682 = vmatprep.subr.mxu0 0.0
  %1683 = vmatpush1.msra.mxu0 0.0
  %1684 = vmatprep.subr.mxu0 0.0
  %1685 = vmatpush1.msra.mxu0 0.0
  %1686 = vmatprep.mubr.f32.mxu0 0.0
  %1687 = vmatmul.mubr.f32.gmra.mrb[0].mxu0 %v1620
  %v1688 = vpop.f32.mrb[0].mxu0
  %v1689 = vadd.f32 %v52, %v1688
  %v1690 = vpop.f32.mrb[0].mxu0
  %1691 = vdwg.mxu0
  %v1692 = vxor.u32 %v1689, 2147483648
  %v1693 = vmul.f32 %v1692, 1.442695
  %v1694 = vpow.pop %v1693
  %v1695 = vadd.f32 %v1694, 1.0
  %v1696 = vrcp.pop %v1695
  %v1697 = vmul.f32 1.0, %v1696
  %v1698 = vtanh.pop %v1689
  %v1699 = vmul.f32 %v1697, %v1500
  %1701 = vrot.lane.b32.xlu0 %v1698, 64
  %v1702 = vpop.permute.xlu0 %1701
  %v1704 = vmul.f32 %v1697, %v1702
  %1706 = vrot.lane.b32.xlu0 %v1704, 32
  %v1707 = vpop.permute.xlu0 %1706
  %v1709 = vadd.f32 %v1699, %v1707
  %v1710 = vtanh.pop %v1709
  %1712 = vrot.lane.b32.xlu0 %v1710, 64
  %v1713 = vpop.permute.xlu0 %1712
  %v1715 = vmul.f32 %v1697, %v1713
  %1717 = vrot.lane.b32.xlu0 %v1715, 32
  %v1718 = vpop.permute.xlu0 %1717
  %1720 = vst.msk [vmem:[#allocation2 + $0x10] sm:$0xff] %vm59, %v1718
  %s1721 = scalar_lea.vmem %s0, 64
  %v1722 = vld [vmem:[%s1721] sm:$0xff]
  %v1723 = vsel %vm59, %v1613, 0
  %1725 = vmatprep.subr.mxu0 0.0
  %1726 = vmatpush1.msra.mxu0 %v35
  %1727 = vmatprep.subr.mxu0 0.0
  %1728 = vmatpush1.msra.mxu0 %v36
  %1729 = vmatprep.subr.mxu0 0.0
  %1730 = vmatpush1.msra.mxu0 %v37
  %1731 = vmatprep.subr.mxu0 0.0
  %1732 = vmatpush1.msra.mxu0 %v38
  %1733 = vmatprep.subr.mxu0 0.0
  %1734 = vmatpush1.msra.mxu0 0.0
  %1735 = vmatprep.subr.mxu0 0.0
  %1736 = vmatpush1.msra.mxu0 0.0
  %1737 = vmatprep.subr.mxu0 0.0
  %1738 = vmatpush1.msra.mxu0 0.0
  %1739 = vmatprep.subr.mxu0 0.0
  %1740 = vmatpush1.msra.mxu0 0.0
  %1741 = vmatprep.subr.mxu0 0.0
  %1742 = vmatpush1.msra.mxu0 0.0
  %1743 = vmatprep.subr.mxu0 0.0
  %1744 = vmatpush1.msra.mxu0 0.0
  %1745 = vmatprep.subr.mxu0 0.0
  %1746 = vmatpush1.msra.mxu0 0.0
  %1747 = vmatprep.subr.mxu0 0.0
  %1748 = vmatpush1.msra.mxu0 0.0
  %1749 = vmatprep.subr.mxu0 0.0
  %1750 = vmatpush1.msra.mxu0 0.0
  %1751 = vmatprep.subr.mxu0 0.0
  %1752 = vmatpush1.msra.mxu0 0.0
  %1753 = vmatprep.subr.mxu0 0.0
  %1754 = vmatpush1.msra.mxu0 0.0
  %1755 = vmatprep.subr.mxu0 0.0
  %1756 = vmatpush1.msra.mxu0 0.0
  %1757 = vmatprep.subr.mxu0 0.0
  %1758 = vmatpush1.msra.mxu0 0.0
  %1759 = vmatprep.subr.mxu0 0.0
  %1760 = vmatpush1.msra.mxu0 0.0
  %1761 = vmatprep.subr.mxu0 0.0
  %1762 = vmatpush1.msra.mxu0 0.0
  %1763 = vmatprep.subr.mxu0 0.0
  %1764 = vmatpush1.msra.mxu0 0.0
  %1765 = vmatprep.subr.mxu0 0.0
  %1766 = vmatpush1.msra.mxu0 0.0
  %1767 = vmatprep.subr.mxu0 0.0
  %1768 = vmatpush1.msra.mxu0 0.0
  %1769 = vmatprep.subr.mxu0 0.0
  %1770 = vmatpush1.msra.mxu0 0.0
  %1771 = vmatprep.subr.mxu0 0.0
  %1772 = vmatpush1.msra.mxu0 0.0
  %1773 = vmatprep.subr.mxu0 0.0
  %1774 = vmatpush1.msra.mxu0 0.0
  %1775 = vmatprep.subr.mxu0 0.0
  %1776 = vmatpush1.msra.mxu0 0.0
  %1777 = vmatprep.subr.mxu0 0.0
  %1778 = vmatpush1.msra.mxu0 0.0
  %1779 = vmatprep.subr.mxu0 0.0
  %1780 = vmatpush1.msra.mxu0 0.0
  %1781 = vmatprep.subr.mxu0 0.0
  %1782 = vmatpush1.msra.mxu0 0.0
  %1783 = vmatprep.subr.mxu0 0.0
  %1784 = vmatpush1.msra.mxu0 0.0
  %1785 = vmatprep.subr.mxu0 0.0
  %1786 = vmatpush1.msra.mxu0 0.0
  %1787 = vmatprep.subr.mxu0 0.0
  %1788 = vmatpush1.msra.mxu0 0.0
  %1789 = vmatprep.mubr.f32.mxu0 0.0
  %1790 = vmatmul.mubr.f32.gmra.mrb[0].mxu0 %v1723
  %v1791 = vpop.f32.mrb[0].mxu0
  %v1792 = vadd.f32 0.0, %v1791
  %v1793 = vpop.f32.mrb[0].mxu0
  %1794 = vdwg.mxu0
  %v1795 = vadd.f32 %v1722, %v1792
  %v1796 = vxor.u32 %v1795, 2147483648
  %v1797 = vmul.f32 %v1796, 1.442695
  %v1798 = vpow.pop %v1797
  %v1799 = vadd.f32 %v1798, 1.0
  %v1800 = vrcp.pop %v1799
  %v1801 = vmul.f32 1.0, %v1800
  %v1802 = vtanh.pop %v1795
  %v1803 = vmul.f32 %v1801, %v1604
  %1805 = vrot.lane.b32.xlu0 %v1802, 64
  %v1806 = vpop.permute.xlu0 %1805
  %v1808 = vmul.f32 %v1801, %v1806
  %1810 = vrot.lane.b32.xlu0 %v1808, 32
  %v1811 = vpop.permute.xlu0 %1810
  %v1813 = vadd.f32 %v1803, %v1811
  %v1814 = vtanh.pop %v1813
  %1816 = vrot.lane.b32.xlu0 %v1814, 64
  %v1817 = vpop.permute.xlu0 %1816
  %v1819 = vmul.f32 %v1801, %v1817
  %1821 = vrot.lane.b32.xlu0 %v1819, 32
  %v1822 = vpop.permute.xlu0 %1821
  %1824 = vrot.lane.b32.xlu0 %v1715, 64
  %v1825 = vpop.permute.xlu0 %1824
  %v1827 = vsel %vm59, %v1822, %v1825
  %v1829 = vsel %vm171, %v1827, 0
  %1831 = vmatprep.subr.mxu0 0.0
  %1832 = vmatpush1.msra.mxu0 %v39
  %1833 = vmatprep.subr.mxu0 0.0
  %1834 = vmatpush1.msra.mxu0 %v40
  %1835 = vmatprep.subr.mxu0 0.0
  %1836 = vmatpush1.msra.mxu0 %v41
  %1837 = vmatprep.subr.mxu0 0.0
  %1838 = vmatpush1.msra.mxu0 %v42
  %1839 = vmatprep.subr.mxu0 0.0
  %1840 = vmatpush1.msra.mxu0 %v43
  %1841 = vmatprep.subr.mxu0 0.0
  %1842 = vmatpush1.msra.mxu0 %v44
  %1843 = vmatprep.subr.mxu0 0.0
  %1844 = vmatpush1.msra.mxu0 %v45
  %1845 = vmatprep.subr.mxu0 0.0
  %1846 = vmatpush1.msra.mxu0 %v46
  %1847 = vmatprep.subr.mxu0 0.0
  %1848 = vmatpush1.msra.mxu0 0.0
  %1849 = vmatprep.subr.mxu0 0.0
  %1850 = vmatpush1.msra.mxu0 0.0
  %1851 = vmatprep.subr.mxu0 0.0
  %1852 = vmatpush1.msra.mxu0 0.0
  %1853 = vmatprep.subr.mxu0 0.0
  %1854 = vmatpush1.msra.mxu0 0.0
  %1855 = vmatprep.subr.mxu0 0.0
  %1856 = vmatpush1.msra.mxu0 0.0
  %1857 = vmatprep.subr.mxu0 0.0
  %1858 = vmatpush1.msra.mxu0 0.0
  %1859 = vmatprep.subr.mxu0 0.0
  %1860 = vmatpush1.msra.mxu0 0.0
  %1861 = vmatprep.subr.mxu0 0.0
  %1862 = vmatpush1.msra.mxu0 0.0
  %1863 = vmatprep.subr.mxu0 0.0
  %1864 = vmatpush1.msra.mxu0 0.0
  %1865 = vmatprep.subr.mxu0 0.0
  %1866 = vmatpush1.msra.mxu0 0.0
  %1867 = vmatprep.subr.mxu0 0.0
  %1868 = vmatpush1.msra.mxu0 0.0
  %1869 = vmatprep.subr.mxu0 0.0
  %1870 = vmatpush1.msra.mxu0 0.0
  %1871 = vmatprep.subr.mxu0 0.0
  %1872 = vmatpush1.msra.mxu0 0.0
  %1873 = vmatprep.subr.mxu0 0.0
  %1874 = vmatpush1.msra.mxu0 0.0
  %1875 = vmatprep.subr.mxu0 0.0
  %1876 = vmatpush1.msra.mxu0 0.0
  %1877 = vmatprep.subr.mxu0 0.0
  %1878 = vmatpush1.msra.mxu0 0.0
  %1879 = vmatprep.subr.mxu0 0.0
  %1880 = vmatpush1.msra.mxu0 0.0
  %1881 = vmatprep.subr.mxu0 0.0
  %1882 = vmatpush1.msra.mxu0 0.0
  %1883 = vmatprep.subr.mxu0 0.0
  %1884 = vmatpush1.msra.mxu0 0.0
  %1885 = vmatprep.subr.mxu0 0.0
  %1886 = vmatpush1.msra.mxu0 0.0
  %1887 = vmatprep.subr.mxu0 0.0
  %1888 = vmatpush1.msra.mxu0 0.0
  %1889 = vmatprep.subr.mxu0 0.0
  %1890 = vmatpush1.msra.mxu0 0.0
  %1891 = vmatprep.subr.mxu0 0.0
  %1892 = vmatpush1.msra.mxu0 0.0
  %1893 = vmatprep.subr.mxu0 0.0
  %1894 = vmatpush1.msra.mxu0 0.0
  %1895 = vmatprep.mubr.f32.mxu0 0.0
  %1896 = vmatmul.mubr.f32.gmra.mrb[0].mxu0 %v1829
  %v1897 = vpop.f32.mrb[0].mxu0
  %v1898 = vadd.f32 %v52, %v1897
  %v1899 = vpop.f32.mrb[0].mxu0
  %1900 = vdwg.mxu0
  %v1901 = vxor.u32 %v1898, 2147483648
  %v1902 = vmul.f32 %v1901, 1.442695
  %v1903 = vpow.pop %v1902
  %v1904 = vadd.f32 %v1903, 1.0
  %v1905 = vrcp.pop %v1904
  %v1906 = vmul.f32 1.0, %v1905
  %v1907 = vtanh.pop %v1898
  %v1908 = vmul.f32 %v1906, %v1709
  %1910 = vrot.lane.b32.xlu0 %v1907, 64
  %v1911 = vpop.permute.xlu0 %1910
  %v1913 = vmul.f32 %v1906, %v1911
  %1915 = vrot.lane.b32.xlu0 %v1913, 32
  %v1916 = vpop.permute.xlu0 %1915
  %v1918 = vadd.f32 %v1908, %v1916
  %v1919 = vtanh.pop %v1918
  %1921 = vrot.lane.b32.xlu0 %v1919, 64
  %v1922 = vpop.permute.xlu0 %1921
  %v1924 = vmul.f32 %v1906, %v1922
  %1926 = vrot.lane.b32.xlu0 %v1924, 32
  %v1927 = vpop.permute.xlu0 %1926
  %1929 = vst.msk [vmem:[#allocation2 + $0x18] sm:$0xff] %vm59, %v1927
  %s1930 = scalar_lea.vmem %s0, 72
  %v1931 = vld [vmem:[%s1930] sm:$0xff]
  %v1932 = vsel %vm59, %v1822, 0
  %1934 = vmatprep.subr.mxu0 0.0
  %1935 = vmatpush1.msra.mxu0 %v35
  %1936 = vmatprep.subr.mxu0 0.0
  %1937 = vmatpush1.msra.mxu0 %v36
  %1938 = vmatprep.subr.mxu0 0.0
  %1939 = vmatpush1.msra.mxu0 %v37
  %1940 = vmatprep.subr.mxu0 0.0
  %1941 = vmatpush1.msra.mxu0 %v38
  %1942 = vmatprep.subr.mxu0 0.0
  %1943 = vmatpush1.msra.mxu0 0.0
  %1944 = vmatprep.subr.mxu0 0.0
  %1945 = vmatpush1.msra.mxu0 0.0
  %1946 = vmatprep.subr.mxu0 0.0
  %1947 = vmatpush1.msra.mxu0 0.0
  %1948 = vmatprep.subr.mxu0 0.0
  %1949 = vmatpush1.msra.mxu0 0.0
  %1950 = vmatprep.subr.mxu0 0.0
  %1951 = vmatpush1.msra.mxu0 0.0
  %1952 = vmatprep.subr.mxu0 0.0
  %1953 = vmatpush1.msra.mxu0 0.0
  %1954 = vmatprep.subr.mxu0 0.0
  %1955 = vmatpush1.msra.mxu0 0.0
  %1956 = vmatprep.subr.mxu0 0.0
  %1957 = vmatpush1.msra.mxu0 0.0
  %1958 = vmatprep.subr.mxu0 0.0
  %1959 = vmatpush1.msra.mxu0 0.0
  %1960 = vmatprep.subr.mxu0 0.0
  %1961 = vmatpush1.msra.mxu0 0.0
  %1962 = vmatprep.subr.mxu0 0.0
  %1963 = vmatpush1.msra.mxu0 0.0
  %1964 = vmatprep.subr.mxu0 0.0
  %1965 = vmatpush1.msra.mxu0 0.0
  %1966 = vmatprep.subr.mxu0 0.0
  %1967 = vmatpush1.msra.mxu0 0.0
  %1968 = vmatprep.subr.mxu0 0.0
  %1969 = vmatpush1.msra.mxu0 0.0
  %1970 = vmatprep.subr.mxu0 0.0
  %1971 = vmatpush1.msra.mxu0 0.0
  %1972 = vmatprep.subr.mxu0 0.0
  %1973 = vmatpush1.msra.mxu0 0.0
  %1974 = vmatprep.subr.mxu0 0.0
  %1975 = vmatpush1.msra.mxu0 0.0
  %1976 = vmatprep.subr.mxu0 0.0
  %1977 = vmatpush1.msra.mxu0 0.0
  %1978 = vmatprep.subr.mxu0 0.0
  %1979 = vmatpush1.msra.mxu0 0.0
  %1980 = vmatprep.subr.mxu0 0.0
  %1981 = vmatpush1.msra.mxu0 0.0
  %1982 = vmatprep.subr.mxu0 0.0
  %1983 = vmatpush1.msra.mxu0 0.0
  %1984 = vmatprep.subr.mxu0 0.0
  %1985 = vmatpush1.msra.mxu0 0.0
  %1986 = vmatprep.subr.mxu0 0.0
  %1987 = vmatpush1.msra.mxu0 0.0
  %1988 = vmatprep.subr.mxu0 0.0
  %1989 = vmatpush1.msra.mxu0 0.0
  %1990 = vmatprep.subr.mxu0 0.0
  %1991 = vmatpush1.msra.mxu0 0.0
  %1992 = vmatprep.subr.mxu0 0.0
  %1993 = vmatpush1.msra.mxu0 0.0
  %1994 = vmatprep.subr.mxu0 0.0
  %1995 = vmatpush1.msra.mxu0 0.0
  %1996 = vmatprep.subr.mxu0 0.0
  %1997 = vmatpush1.msra.mxu0 0.0
  %1998 = vmatprep.mubr.f32.mxu0 0.0
  %1999 = vmatmul.mubr.f32.gmra.mrb[0].mxu0 %v1932
  %v2000 = vpop.f32.mrb[0].mxu0
  %v2001 = vadd.f32 0.0, %v2000
  %v2002 = vpop.f32.mrb[0].mxu0
  %2003 = vdwg.mxu0
  %v2004 = vadd.f32 %v1931, %v2001
  %v2005 = vxor.u32 %v2004, 2147483648
  %v2006 = vmul.f32 %v2005, 1.442695
  %v2007 = vpow.pop %v2006
  %v2008 = vadd.f32 %v2007, 1.0
  %v2009 = vrcp.pop %v2008
  %v2010 = vmul.f32 1.0, %v2009
  %v2011 = vtanh.pop %v2004
  %v2012 = vmul.f32 %v2010, %v1813
  %2014 = vrot.lane.b32.xlu0 %v2011, 64
  %v2015 = vpop.permute.xlu0 %2014
  %v2017 = vmul.f32 %v2010, %v2015
  %2019 = vrot.lane.b32.xlu0 %v2017, 32
  %v2020 = vpop.permute.xlu0 %2019
  %v2022 = vadd.f32 %v2012, %v2020
  %v2023 = vtanh.pop %v2022
  %2025 = vrot.lane.b32.xlu0 %v2023, 64
  %v2026 = vpop.permute.xlu0 %2025
  %v2028 = vmul.f32 %v2010, %v2026
  %2030 = vrot.lane.b32.xlu0 %v2028, 32
  %v2031 = vpop.permute.xlu0 %2030
  %2033 = vrot.lane.b32.xlu0 %v1924, 64
  %v2034 = vpop.permute.xlu0 %2033
  %v2036 = vsel %vm59, %v2031, %v2034
  %v2038 = vsel %vm171, %v2036, 0
  %2040 = vmatprep.subr.mxu0 0.0
  %2041 = vmatpush1.msra.mxu0 %v39
  %2042 = vmatprep.subr.mxu0 0.0
  %2043 = vmatpush1.msra.mxu0 %v40
  %2044 = vmatprep.subr.mxu0 0.0
  %2045 = vmatpush1.msra.mxu0 %v41
  %2046 = vmatprep.subr.mxu0 0.0
  %2047 = vmatpush1.msra.mxu0 %v42
  %2048 = vmatprep.subr.mxu0 0.0
  %2049 = vmatpush1.msra.mxu0 %v43
  %2050 = vmatprep.subr.mxu0 0.0
  %2051 = vmatpush1.msra.mxu0 %v44
  %2052 = vmatprep.subr.mxu0 0.0
  %2053 = vmatpush1.msra.mxu0 %v45
  %2054 = vmatprep.subr.mxu0 0.0
  %2055 = vmatpush1.msra.mxu0 %v46
  %2056 = vmatprep.subr.mxu0 0.0
  %2057 = vmatpush1.msra.mxu0 0.0
  %2058 = vmatprep.subr.mxu0 0.0
  %2059 = vmatpush1.msra.mxu0 0.0
  %2060 = vmatprep.subr.mxu0 0.0
  %2061 = vmatpush1.msra.mxu0 0.0
  %2062 = vmatprep.subr.mxu0 0.0
  %2063 = vmatpush1.msra.mxu0 0.0
  %2064 = vmatprep.subr.mxu0 0.0
  %2065 = vmatpush1.msra.mxu0 0.0
  %2066 = vmatprep.subr.mxu0 0.0
  %2067 = vmatpush1.msra.mxu0 0.0
  %2068 = vmatprep.subr.mxu0 0.0
  %2069 = vmatpush1.msra.mxu0 0.0
  %2070 = vmatprep.subr.mxu0 0.0
  %2071 = vmatpush1.msra.mxu0 0.0
  %2072 = vmatprep.subr.mxu0 0.0
  %2073 = vmatpush1.msra.mxu0 0.0
  %2074 = vmatprep.subr.mxu0 0.0
  %2075 = vmatpush1.msra.mxu0 0.0
  %2076 = vmatprep.subr.mxu0 0.0
  %2077 = vmatpush1.msra.mxu0 0.0
  %2078 = vmatprep.subr.mxu0 0.0
  %2079 = vmatpush1.msra.mxu0 0.0
  %2080 = vmatprep.subr.mxu0 0.0
  %2081 = vmatpush1.msra.mxu0 0.0
  %2082 = vmatprep.subr.mxu0 0.0
  %2083 = vmatpush1.msra.mxu0 0.0
  %2084 = vmatprep.subr.mxu0 0.0
  %2085 = vmatpush1.msra.mxu0 0.0
  %2086 = vmatprep.subr.mxu0 0.0
  %2087 = vmatpush1.msra.mxu0 0.0
  %2088 = vmatprep.subr.mxu0 0.0
  %2089 = vmatpush1.msra.mxu0 0.0
  %2090 = vmatprep.subr.mxu0 0.0
  %2091 = vmatpush1.msra.mxu0 0.0
  %2092 = vmatprep.subr.mxu0 0.0
  %2093 = vmatpush1.msra.mxu0 0.0
  %2094 = vmatprep.subr.mxu0 0.0
  %2095 = vmatpush1.msra.mxu0 0.0
  %2096 = vmatprep.subr.mxu0 0.0
  %2097 = vmatpush1.msra.mxu0 0.0
  %2098 = vmatprep.subr.mxu0 0.0
  %2099 = vmatpush1.msra.mxu0 0.0
  %2100 = vmatprep.subr.mxu0 0.0
  %2101 = vmatpush1.msra.mxu0 0.0
  %2102 = vmatprep.subr.mxu0 0.0
  %2103 = vmatpush1.msra.mxu0 0.0
  %2104 = vmatprep.mubr.f32.mxu0 0.0
  %2105 = vmatmul.mubr.f32.gmra.mrb[0].mxu0 %v2038
  %v2106 = vpop.f32.mrb[0].mxu0
  %v2107 = vadd.f32 %v52, %v2106
  %v2108 = vpop.f32.mrb[0].mxu0
  %2109 = vdwg.mxu0
  %v2110 = vxor.u32 %v2107, 2147483648
  %v2111 = vmul.f32 %v2110, 1.442695
  %v2112 = vpow.pop %v2111
  %v2113 = vadd.f32 %v2112, 1.0
  %v2114 = vrcp.pop %v2113
  %v2115 = vmul.f32 1.0, %v2114
  %v2116 = vtanh.pop %v2107
  %v2117 = vmul.f32 %v2115, %v1918
  %2119 = vrot.lane.b32.xlu0 %v2116, 64
  %v2120 = vpop.permute.xlu0 %2119
  %v2122 = vmul.f32 %v2115, %v2120
  %2124 = vrot.lane.b32.xlu0 %v2122, 32
  %v2125 = vpop.permute.xlu0 %2124
  %v2127 = vadd.f32 %v2117, %v2125
  %v2128 = vtanh.pop %v2127
  %2130 = vrot.lane.b32.xlu0 %v2128, 64
  %v2131 = vpop.permute.xlu0 %2130
  %v2133 = vmul.f32 %v2115, %v2131
  %2135 = vrot.lane.b32.xlu0 %v2133, 32
  %v2136 = vpop.permute.xlu0 %2135
  %2138 = vst.msk [vmem:[#allocation2 + $0x20] sm:$0xff] %vm59, %v2136
  %s2139 = scalar_lea.vmem %s0, 80
  %v2140 = vld [vmem:[%s2139] sm:$0xff]
  %v2141 = vsel %vm59, %v2031, 0
  %2143 = vmatprep.subr.mxu0 0.0
  %2144 = vmatpush1.msra.mxu0 %v35
  %2145 = vmatprep.subr.mxu0 0.0
  %2146 = vmatpush1.msra.mxu0 %v36
  %2147 = vmatprep.subr.mxu0 0.0
  %2148 = vmatpush1.msra.mxu0 %v37
  %2149 = vmatprep.subr.mxu0 0.0
  %2150 = vmatpush1.msra.mxu0 %v38
  %2151 = vmatprep.subr.mxu0 0.0
  %2152 = vmatpush1.msra.mxu0 0.0
  %2153 = vmatprep.subr.mxu0 0.0
  %2154 = vmatpush1.msra.mxu0 0.0
  %2155 = vmatprep.subr.mxu0 0.0
  %2156 = vmatpush1.msra.mxu0 0.0
  %2157 = vmatprep.subr.mxu0 0.0
  %2158 = vmatpush1.msra.mxu0 0.0
  %2159 = vmatprep.subr.mxu0 0.0
  %2160 = vmatpush1.msra.mxu0 0.0
  %2161 = vmatprep.subr.mxu0 0.0
  %2162 = vmatpush1.msra.mxu0 0.0
  %2163 = vmatprep.subr.mxu0 0.0
  %2164 = vmatpush1.msra.mxu0 0.0
  %2165 = vmatprep.subr.mxu0 0.0
  %2166 = vmatpush1.msra.mxu0 0.0
  %2167 = vmatprep.subr.mxu0 0.0
  %2168 = vmatpush1.msra.mxu0 0.0
  %2169 = vmatprep.subr.mxu0 0.0
  %2170 = vmatpush1.msra.mxu0 0.0
  %2171 = vmatprep.subr.mxu0 0.0
  %2172 = vmatpush1.msra.mxu0 0.0
  %2173 = vmatprep.subr.mxu0 0.0
  %2174 = vmatpush1.msra.mxu0 0.0
  %2175 = vmatprep.subr.mxu0 0.0
  %2176 = vmatpush1.msra.mxu0 0.0
  %2177 = vmatprep.subr.mxu0 0.0
  %2178 = vmatpush1.msra.mxu0 0.0
  %2179 = vmatprep.subr.mxu0 0.0
  %2180 = vmatpush1.msra.mxu0 0.0
  %2181 = vmatprep.subr.mxu0 0.0
  %2182 = vmatpush1.msra.mxu0 0.0
  %2183 = vmatprep.subr.mxu0 0.0
  %2184 = vmatpush1.msra.mxu0 0.0
  %2185 = vmatprep.subr.mxu0 0.0
  %2186 = vmatpush1.msra.mxu0 0.0
  %2187 = vmatprep.subr.mxu0 0.0
  %2188 = vmatpush1.msra.mxu0 0.0
  %2189 = vmatprep.subr.mxu0 0.0
  %2190 = vmatpush1.msra.mxu0 0.0
  %2191 = vmatprep.subr.mxu0 0.0
  %2192 = vmatpush1.msra.mxu0 0.0
  %2193 = vmatprep.subr.mxu0 0.0
  %2194 = vmatpush1.msra.mxu0 0.0
  %2195 = vmatprep.subr.mxu0 0.0
  %2196 = vmatpush1.msra.mxu0 0.0
  %2197 = vmatprep.subr.mxu0 0.0
  %2198 = vmatpush1.msra.mxu0 0.0
  %2199 = vmatprep.subr.mxu0 0.0
  %2200 = vmatpush1.msra.mxu0 0.0
  %2201 = vmatprep.subr.mxu0 0.0
  %2202 = vmatpush1.msra.mxu0 0.0
  %2203 = vmatprep.subr.mxu0 0.0
  %2204 = vmatpush1.msra.mxu0 0.0
  %2205 = vmatprep.subr.mxu0 0.0
  %2206 = vmatpush1.msra.mxu0 0.0
  %2207 = vmatprep.mubr.f32.mxu0 0.0
  %2208 = vmatmul.mubr.f32.gmra.mrb[0].mxu0 %v2141
  %v2209 = vpop.f32.mrb[0].mxu0
  %v2210 = vadd.f32 0.0, %v2209
  %v2211 = vpop.f32.mrb[0].mxu0
  %2212 = vdwg.mxu0
  %v2213 = vadd.f32 %v2140, %v2210
  %v2214 = vxor.u32 %v2213, 2147483648
  %v2215 = vmul.f32 %v2214, 1.442695
  %v2216 = vpow.pop %v2215
  %v2217 = vadd.f32 %v2216, 1.0
  %v2218 = vrcp.pop %v2217
  %v2219 = vmul.f32 1.0, %v2218
  %v2220 = vtanh.pop %v2213
  %v2221 = vmul.f32 %v2219, %v2022
  %2223 = vrot.lane.b32.xlu0 %v2220, 64
  %v2224 = vpop.permute.xlu0 %2223
  %v2226 = vmul.f32 %v2219, %v2224
  %2228 = vrot.lane.b32.xlu0 %v2226, 32
  %v2229 = vpop.permute.xlu0 %2228
  %v2231 = vadd.f32 %v2221, %v2229
  %v2232 = vtanh.pop %v2231
  %2234 = vrot.lane.b32.xlu0 %v2232, 64
  %v2235 = vpop.permute.xlu0 %2234
  %v2237 = vmul.f32 %v2219, %v2235
  %2239 = vrot.lane.b32.xlu0 %v2237, 32
  %v2240 = vpop.permute.xlu0 %2239
  %2242 = vrot.lane.b32.xlu0 %v2133, 64
  %v2243 = vpop.permute.xlu0 %2242
  %v2245 = vsel %vm59, %v2240, %v2243
  %v2247 = vsel %vm171, %v2245, 0
  %2249 = vmatprep.subr.mxu0 0.0
  %2250 = vmatpush1.msra.mxu0 %v39
  %2251 = vmatprep.subr.mxu0 0.0
  %2252 = vmatpush1.msra.mxu0 %v40
  %2253 = vmatprep.subr.mxu0 0.0
  %2254 = vmatpush1.msra.mxu0 %v41
  %2255 = vmatprep.subr.mxu0 0.0
  %2256 = vmatpush1.msra.mxu0 %v42
  %2257 = vmatprep.subr.mxu0 0.0
  %2258 = vmatpush1.msra.mxu0 %v43
  %2259 = vmatprep.subr.mxu0 0.0
  %2260 = vmatpush1.msra.mxu0 %v44
  %2261 = vmatprep.subr.mxu0 0.0
  %2262 = vmatpush1.msra.mxu0 %v45
  %2263 = vmatprep.subr.mxu0 0.0
  %2264 = vmatpush1.msra.mxu0 %v46
  %2265 = vmatprep.subr.mxu0 0.0
  %2266 = vmatpush1.msra.mxu0 0.0
  %2267 = vmatprep.subr.mxu0 0.0
  %2268 = vmatpush1.msra.mxu0 0.0
  %2269 = vmatprep.subr.mxu0 0.0
  %2270 = vmatpush1.msra.mxu0 0.0
  %2271 = vmatprep.subr.mxu0 0.0
  %2272 = vmatpush1.msra.mxu0 0.0
  %2273 = vmatprep.subr.mxu0 0.0
  %2274 = vmatpush1.msra.mxu0 0.0
  %2275 = vmatprep.subr.mxu0 0.0
  %2276 = vmatpush1.msra.mxu0 0.0
  %2277 = vmatprep.subr.mxu0 0.0
  %2278 = vmatpush1.msra.mxu0 0.0
  %2279 = vmatprep.subr.mxu0 0.0
  %2280 = vmatpush1.msra.mxu0 0.0
  %2281 = vmatprep.subr.mxu0 0.0
  %2282 = vmatpush1.msra.mxu0 0.0
  %2283 = vmatprep.subr.mxu0 0.0
  %2284 = vmatpush1.msra.mxu0 0.0
  %2285 = vmatprep.subr.mxu0 0.0
  %2286 = vmatpush1.msra.mxu0 0.0
  %2287 = vmatprep.subr.mxu0 0.0
  %2288 = vmatpush1.msra.mxu0 0.0
  %2289 = vmatprep.subr.mxu0 0.0
  %2290 = vmatpush1.msra.mxu0 0.0
  %2291 = vmatprep.subr.mxu0 0.0
  %2292 = vmatpush1.msra.mxu0 0.0
  %2293 = vmatprep.subr.mxu0 0.0
  %2294 = vmatpush1.msra.mxu0 0.0
  %2295 = vmatprep.subr.mxu0 0.0
  %2296 = vmatpush1.msra.mxu0 0.0
  %2297 = vmatprep.subr.mxu0 0.0
  %2298 = vmatpush1.msra.mxu0 0.0
  %2299 = vmatprep.subr.mxu0 0.0
  %2300 = vmatpush1.msra.mxu0 0.0
  %2301 = vmatprep.subr.mxu0 0.0
  %2302 = vmatpush1.msra.mxu0 0.0
  %2303 = vmatprep.subr.mxu0 0.0
  %2304 = vmatpush1.msra.mxu0 0.0
  %2305 = vmatprep.subr.mxu0 0.0
  %2306 = vmatpush1.msra.mxu0 0.0
  %2307 = vmatprep.subr.mxu0 0.0
  %2308 = vmatpush1.msra.mxu0 0.0
  %2309 = vmatprep.subr.mxu0 0.0
  %2310 = vmatpush1.msra.mxu0 0.0
  %2311 = vmatprep.subr.mxu0 0.0
  %2312 = vmatpush1.msra.mxu0 0.0
  %2313 = vmatprep.mubr.f32.mxu0 0.0
  %2314 = vmatmul.mubr.f32.gmra.mrb[0].mxu0 %v2247
  %v2315 = vpop.f32.mrb[0].mxu0
  %v2316 = vadd.f32 %v52, %v2315
  %v2317 = vpop.f32.mrb[0].mxu0
  %2318 = vdwg.mxu0
  %v2319 = vxor.u32 %v2316, 2147483648
  %v2320 = vmul.f32 %v2319, 1.442695
  %v2321 = vpow.pop %v2320
  %v2322 = vadd.f32 %v2321, 1.0
  %v2323 = vrcp.pop %v2322
  %v2324 = vmul.f32 1.0, %v2323
  %v2325 = vtanh.pop %v2316
  %v2326 = vmul.f32 %v2324, %v2127
  %2328 = vrot.lane.b32.xlu0 %v2325, 64
  %v2329 = vpop.permute.xlu0 %2328
  %v2331 = vmul.f32 %v2324, %v2329
  %2333 = vrot.lane.b32.xlu0 %v2331, 32
  %v2334 = vpop.permute.xlu0 %2333
  %v2336 = vadd.f32 %v2326, %v2334
  %v2337 = vtanh.pop %v2336
  %2339 = vrot.lane.b32.xlu0 %v2337, 64
  %v2340 = vpop.permute.xlu0 %2339
  %v2342 = vmul.f32 %v2324, %v2340
  %2344 = vrot.lane.b32.xlu0 %v2342, 32
  %v2345 = vpop.permute.xlu0 %2344
  %2347 = vst.msk [vmem:[#allocation2 + $0x28] sm:$0xff] %vm59, %v2345
  %s2348 = scalar_lea.vmem %s0, 88
  %v2349 = vld [vmem:[%s2348] sm:$0xff]
  %v2350 = vsel %vm59, %v2240, 0
  %2352 = vmatprep.subr.mxu0 0.0
  %2353 = vmatpush1.msra.mxu0 %v35
  %2354 = vmatprep.subr.mxu0 0.0
  %2355 = vmatpush1.msra.mxu0 %v36
  %2356 = vmatprep.subr.mxu0 0.0
  %2357 = vmatpush1.msra.mxu0 %v37
  %2358 = vmatprep.subr.mxu0 0.0
  %2359 = vmatpush1.msra.mxu0 %v38
  %2360 = vmatprep.subr.mxu0 0.0
  %2361 = vmatpush1.msra.mxu0 0.0
  %2362 = vmatprep.subr.mxu0 0.0
  %2363 = vmatpush1.msra.mxu0 0.0
  %2364 = vmatprep.subr.mxu0 0.0
  %2365 = vmatpush1.msra.mxu0 0.0
  %2366 = vmatprep.subr.mxu0 0.0
  %2367 = vmatpush1.msra.mxu0 0.0
  %2368 = vmatprep.subr.mxu0 0.0
  %2369 = vmatpush1.msra.mxu0 0.0
  %2370 = vmatprep.subr.mxu0 0.0
  %2371 = vmatpush1.msra.mxu0 0.0
  %2372 = vmatprep.subr.mxu0 0.0
  %2373 = vmatpush1.msra.mxu0 0.0
  %2374 = vmatprep.subr.mxu0 0.0
  %2375 = vmatpush1.msra.mxu0 0.0
  %2376 = vmatprep.subr.mxu0 0.0
  %2377 = vmatpush1.msra.mxu0 0.0
  %2378 = vmatprep.subr.mxu0 0.0
  %2379 = vmatpush1.msra.mxu0 0.0
  %2380 = vmatprep.subr.mxu0 0.0
  %2381 = vmatpush1.msra.mxu0 0.0
  %2382 = vmatprep.subr.mxu0 0.0
  %2383 = vmatpush1.msra.mxu0 0.0
  %2384 = vmatprep.subr.mxu0 0.0
  %2385 = vmatpush1.msra.mxu0 0.0
  %2386 = vmatprep.subr.mxu0 0.0
  %2387 = vmatpush1.msra.mxu0 0.0
  %2388 = vmatprep.subr.mxu0 0.0
  %2389 = vmatpush1.msra.mxu0 0.0
  %2390 = vmatprep.subr.mxu0 0.0
  %2391 = vmatpush1.msra.mxu0 0.0
  %2392 = vmatprep.subr.mxu0 0.0
  %2393 = vmatpush1.msra.mxu0 0.0
  %2394 = vmatprep.subr.mxu0 0.0
  %2395 = vmatpush1.msra.mxu0 0.0
  %2396 = vmatprep.subr.mxu0 0.0
  %2397 = vmatpush1.msra.mxu0 0.0
  %2398 = vmatprep.subr.mxu0 0.0
  %2399 = vmatpush1.msra.mxu0 0.0
  %2400 = vmatprep.subr.mxu0 0.0
  %2401 = vmatpush1.msra.mxu0 0.0
  %2402 = vmatprep.subr.mxu0 0.0
  %2403 = vmatpush1.msra.mxu0 0.0
  %2404 = vmatprep.subr.mxu0 0.0
  %2405 = vmatpush1.msra.mxu0 0.0
  %2406 = vmatprep.subr.mxu0 0.0
  %2407 = vmatpush1.msra.mxu0 0.0
  %2408 = vmatprep.subr.mxu0 0.0
  %2409 = vmatpush1.msra.mxu0 0.0
  %2410 = vmatprep.subr.mxu0 0.0
  %2411 = vmatpush1.msra.mxu0 0.0
  %2412 = vmatprep.subr.mxu0 0.0
  %2413 = vmatpush1.msra.mxu0 0.0
  %2414 = vmatprep.subr.mxu0 0.0
  %2415 = vmatpush1.msra.mxu0 0.0
  %2416 = vmatprep.mubr.f32.mxu0 0.0
  %2417 = vmatmul.mubr.f32.gmra.mrb[0].mxu0 %v2350
  %v2418 = vpop.f32.mrb[0].mxu0
  %v2419 = vadd.f32 0.0, %v2418
  %v2420 = vpop.f32.mrb[0].mxu0
  %2421 = vdwg.mxu0
  %v2422 = vadd.f32 %v2349, %v2419
  %v2423 = vxor.u32 %v2422, 2147483648
  %v2424 = vmul.f32 %v2423, 1.442695
  %v2425 = vpow.pop %v2424
  %v2426 = vadd.f32 %v2425, 1.0
  %v2427 = vrcp.pop %v2426
  %v2428 = vmul.f32 1.0, %v2427
  %v2429 = vtanh.pop %v2422
  %v2430 = vmul.f32 %v2428, %v2231
  %2432 = vrot.lane.b32.xlu0 %v2429, 64
  %v2433 = vpop.permute.xlu0 %2432
  %v2435 = vmul.f32 %v2428, %v2433
  %2437 = vrot.lane.b32.xlu0 %v2435, 32
  %v2438 = vpop.permute.xlu0 %2437
  %v2440 = vadd.f32 %v2430, %v2438
  %v2441 = vtanh.pop %v2440
  %2443 = vrot.lane.b32.xlu0 %v2441, 64
  %v2444 = vpop.permute.xlu0 %2443
  %v2446 = vmul.f32 %v2428, %v2444
  %2448 = vrot.lane.b32.xlu0 %v2446, 32
  %v2449 = vpop.permute.xlu0 %2448
  %2451 = vrot.lane.b32.xlu0 %v2342, 64
  %v2452 = vpop.permute.xlu0 %2451
  %v2454 = vsel %vm59, %v2449, %v2452
  %v2456 = vsel %vm171, %v2454, 0
  %2458 = vmatprep.subr.mxu0 0.0
  %2459 = vmatpush1.msra.mxu0 %v39
  %2460 = vmatprep.subr.mxu0 0.0
  %2461 = vmatpush1.msra.mxu0 %v40
  %2462 = vmatprep.subr.mxu0 0.0
  %2463 = vmatpush1.msra.mxu0 %v41
  %2464 = vmatprep.subr.mxu0 0.0
  %2465 = vmatpush1.msra.mxu0 %v42
  %2466 = vmatprep.subr.mxu0 0.0
  %2467 = vmatpush1.msra.mxu0 %v43
  %2468 = vmatprep.subr.mxu0 0.0
  %2469 = vmatpush1.msra.mxu0 %v44
  %2470 = vmatprep.subr.mxu0 0.0
  %2471 = vmatpush1.msra.mxu0 %v45
  %2472 = vmatprep.subr.mxu0 0.0
  %2473 = vmatpush1.msra.mxu0 %v46
  %2474 = vmatprep.subr.mxu0 0.0
  %2475 = vmatpush1.msra.mxu0 0.0
  %2476 = vmatprep.subr.mxu0 0.0
  %2477 = vmatpush1.msra.mxu0 0.0
  %2478 = vmatprep.subr.mxu0 0.0
  %2479 = vmatpush1.msra.mxu0 0.0
  %2480 = vmatprep.subr.mxu0 0.0
  %2481 = vmatpush1.msra.mxu0 0.0
  %2482 = vmatprep.subr.mxu0 0.0
  %2483 = vmatpush1.msra.mxu0 0.0
  %2484 = vmatprep.subr.mxu0 0.0
  %2485 = vmatpush1.msra.mxu0 0.0
  %2486 = vmatprep.subr.mxu0 0.0
  %2487 = vmatpush1.msra.mxu0 0.0
  %2488 = vmatprep.subr.mxu0 0.0
  %2489 = vmatpush1.msra.mxu0 0.0
  %2490 = vmatprep.subr.mxu0 0.0
  %2491 = vmatpush1.msra.mxu0 0.0
  %2492 = vmatprep.subr.mxu0 0.0
  %2493 = vmatpush1.msra.mxu0 0.0
  %2494 = vmatprep.subr.mxu0 0.0
  %2495 = vmatpush1.msra.mxu0 0.0
  %2496 = vmatprep.subr.mxu0 0.0
  %2497 = vmatpush1.msra.mxu0 0.0
  %2498 = vmatprep.subr.mxu0 0.0
  %2499 = vmatpush1.msra.mxu0 0.0
  %2500 = vmatprep.subr.mxu0 0.0
  %2501 = vmatpush1.msra.mxu0 0.0
  %2502 = vmatprep.subr.mxu0 0.0
  %2503 = vmatpush1.msra.mxu0 0.0
  %2504 = vmatprep.subr.mxu0 0.0
  %2505 = vmatpush1.msra.mxu0 0.0
  %2506 = vmatprep.subr.mxu0 0.0
  %2507 = vmatpush1.msra.mxu0 0.0
  %2508 = vmatprep.subr.mxu0 0.0
  %2509 = vmatpush1.msra.mxu0 0.0
  %2510 = vmatprep.subr.mxu0 0.0
  %2511 = vmatpush1.msra.mxu0 0.0
  %2512 = vmatprep.subr.mxu0 0.0
  %2513 = vmatpush1.msra.mxu0 0.0
  %2514 = vmatprep.subr.mxu0 0.0
  %2515 = vmatpush1.msra.mxu0 0.0
  %2516 = vmatprep.subr.mxu0 0.0
  %2517 = vmatpush1.msra.mxu0 0.0
  %2518 = vmatprep.subr.mxu0 0.0
  %2519 = vmatpush1.msra.mxu0 0.0
  %2520 = vmatprep.subr.mxu0 0.0
  %2521 = vmatpush1.msra.mxu0 0.0
  %2522 = vmatprep.mubr.f32.mxu0 0.0
  %2523 = vmatmul.mubr.f32.gmra.mrb[0].mxu0 %v2456
  %v2524 = vpop.f32.mrb[0].mxu0
  %v2525 = vadd.f32 %v52, %v2524
  %v2526 = vpop.f32.mrb[0].mxu0
  %2527 = vdwg.mxu0
  %v2528 = vxor.u32 %v2525, 2147483648
  %v2529 = vmul.f32 %v2528, 1.442695
  %v2530 = vpow.pop %v2529
  %v2531 = vadd.f32 %v2530, 1.0
  %v2532 = vrcp.pop %v2531
  %v2533 = vmul.f32 1.0, %v2532
  %v2534 = vtanh.pop %v2525
  %v2535 = vmul.f32 %v2533, %v2336
  %2537 = vrot.lane.b32.xlu0 %v2534, 64
  %v2538 = vpop.permute.xlu0 %2537
  %v2540 = vmul.f32 %v2533, %v2538
  %2542 = vrot.lane.b32.xlu0 %v2540, 32
  %v2543 = vpop.permute.xlu0 %2542
  %v2545 = vadd.f32 %v2535, %v2543
  %v2546 = vtanh.pop %v2545
  %2548 = vrot.lane.b32.xlu0 %v2546, 64
  %v2549 = vpop.permute.xlu0 %2548
  %v2551 = vmul.f32 %v2533, %v2549
  %2553 = vrot.lane.b32.xlu0 %v2551, 32
  %v2554 = vpop.permute.xlu0 %2553
  %2556 = vst.msk [vmem:[#allocation2 + $0x30] sm:$0xff] %vm59, %v2554
  %v2557 = vld [vmem:[#allocation2] sm:$0xff]
  %v2558 = vld [vmem:[#allocation2 + $0x8] sm:$0xff]
  %v2559 = vld [vmem:[#allocation2 + $0x10] sm:$0xff]
  %v2560 = vld [vmem:[#allocation2 + $0x18] sm:$0xff]
  %v2561 = vld [vmem:[#allocation2 + $0x20] sm:$0xff]
  %v2562 = vld [vmem:[#allocation2 + $0x28] sm:$0xff]
  %v2563 = vld [vmem:[#allocation2 + $0x30] sm:$0xff]
  %v2564 = vld [vmem:[%s8] sm:$0xff]
  %v2565 = vld [vmem:[%s8 + $0x8] sm:$0xff]
  %v2566 = vld [vmem:[%s8 + $0x10] sm:$0xff]
  %v2567 = vld [vmem:[%s8 + $0x18] sm:$0xff]
  %v2568 = vld [vmem:[%s9] sm:$0x1]
  %v2570 = vlaneseq
  %v2571 = vshrl.u32 %v2570, 7
  %v2572 = vsub.s32 0, %v2571
  %v2573 = vrot.slane %v2568, %v2572
  %v2576 = vsel %vm59, %v2557, 0
  %v2579 = vsel %vm59, %v2558, 0
  %v2582 = vsel %vm59, %v2559, 0
  %v2585 = vsel %vm59, %v2560, 0
  %v2588 = vsel %vm59, %v2561, 0
  %v2591 = vsel %vm59, %v2562, 0
  %v2594 = vsel %vm59, %v2563, 0
  %2596 = vmatprep.subr.mxu0 0.0
  %2597 = vmatpush1.msra.mxu0 %v2564
  %2598 = vmatprep.subr.mxu0 0.0
  %2599 = vmatpush1.msra.mxu0 %v2565
  %2600 = vmatprep.subr.mxu0 0.0
  %2601 = vmatpush1.msra.mxu0 %v2566
  %2602 = vmatprep.subr.mxu0 0.0
  %2603 = vmatpush1.msra.mxu0 %v2567
  %2604 = vmatprep.subr.mxu0 0.0
  %2605 = vmatpush1.msra.mxu0 0.0
  %2606 = vmatprep.subr.mxu0 0.0
  %2607 = vmatpush1.msra.mxu0 0.0
  %2608 = vmatprep.subr.mxu0 0.0
  %2609 = vmatpush1.msra.mxu0 0.0
  %2610 = vmatprep.subr.mxu0 0.0
  %2611 = vmatpush1.msra.mxu0 0.0
  %2612 = vmatprep.subr.mxu0 0.0
  %2613 = vmatpush1.msra.mxu0 0.0
  %2614 = vmatprep.subr.mxu0 0.0
  %2615 = vmatpush1.msra.mxu0 0.0
  %2616 = vmatprep.subr.mxu0 0.0
  %2617 = vmatpush1.msra.mxu0 0.0
  %2618 = vmatprep.subr.mxu0 0.0
  %2619 = vmatpush1.msra.mxu0 0.0
  %2620 = vmatprep.subr.mxu0 0.0
  %2621 = vmatpush1.msra.mxu0 0.0
  %2622 = vmatprep.subr.mxu0 0.0
  %2623 = vmatpush1.msra.mxu0 0.0
  %2624 = vmatprep.subr.mxu0 0.0
  %2625 = vmatpush1.msra.mxu0 0.0
  %2626 = vmatprep.subr.mxu0 0.0
  %2627 = vmatpush1.msra.mxu0 0.0
  %2628 = vmatprep.subr.mxu0 0.0
  %2629 = vmatpush1.msra.mxu0 0.0
  %2630 = vmatprep.subr.mxu0 0.0
  %2631 = vmatpush1.msra.mxu0 0.0
  %2632 = vmatprep.subr.mxu0 0.0
  %2633 = vmatpush1.msra.mxu0 0.0
  %2634 = vmatprep.subr.mxu0 0.0
  %2635 = vmatpush1.msra.mxu0 0.0
  %2636 = vmatprep.subr.mxu0 0.0
  %2637 = vmatpush1.msra.mxu0 0.0
  %2638 = vmatprep.subr.mxu0 0.0
  %2639 = vmatpush1.msra.mxu0 0.0
  %2640 = vmatprep.subr.mxu0 0.0
  %2641 = vmatpush1.msra.mxu0 0.0
  %2642 = vmatprep.subr.mxu0 0.0
  %2643 = vmatpush1.msra.mxu0 0.0
  %2644 = vmatprep.subr.mxu0 0.0
  %2645 = vmatpush1.msra.mxu0 0.0
  %2646 = vmatprep.subr.mxu0 0.0
  %2647 = vmatpush1.msra.mxu0 0.0
  %2648 = vmatprep.subr.mxu0 0.0
  %2649 = vmatpush1.msra.mxu0 0.0
  %2650 = vmatprep.subr.mxu0 0.0
  %2651 = vmatpush1.msra.mxu0 0.0
  %2652 = vmatprep.subr.mxu0 0.0
  %2653 = vmatpush1.msra.mxu0 0.0
  %2654 = vmatprep.subr.mxu0 0.0
  %2655 = vmatpush1.msra.mxu0 0.0
  %2656 = vmatprep.subr.mxu0 0.0
  %2657 = vmatpush1.msra.mxu0 0.0
  %2658 = vmatprep.subr.mxu0 0.0
  %2659 = vmatpush1.msra.mxu0 0.0
  %2660 = vmatprep.mubr.f32.mxu0 0.0
  %2661 = vmatmul.mubr.f32.gmra.mrb[0].mxu0 %v2576
  %v2662 = vpop.f32.mrb[0].mxu0
  %v2663 = vadd.f32 %v2573, %v2662
  %v2664 = vpop.f32.mrb[0].mxu0
  %2665 = vmatprep.mubr.f32.mxu0 0.0
  %2666 = vmatmul.mubr.f32.gmra.mrb[0].mxu0 %v2579
  %v2667 = vpop.f32.mrb[0].mxu0
  %v2668 = vadd.f32 %v2573, %v2667
  %v2669 = vpop.f32.mrb[0].mxu0
  %2670 = vmatprep.mubr.f32.mxu0 0.0
  %2671 = vmatmul.mubr.f32.gmra.mrb[0].mxu0 %v2582
  %v2672 = vpop.f32.mrb[0].mxu0
  %v2673 = vadd.f32 %v2573, %v2672
  %v2674 = vpop.f32.mrb[0].mxu0
  %2675 = vmatprep.mubr.f32.mxu0 0.0
  %2676 = vmatmul.mubr.f32.gmra.mrb[0].mxu0 %v2585
  %v2677 = vpop.f32.mrb[0].mxu0
  %v2678 = vadd.f32 %v2573, %v2677
  %v2679 = vpop.f32.mrb[0].mxu0
  %2680 = vmatprep.mubr.f32.mxu0 0.0
  %2681 = vmatmul.mubr.f32.gmra.mrb[0].mxu0 %v2588
  %v2682 = vpop.f32.mrb[0].mxu0
  %v2683 = vadd.f32 %v2573, %v2682
  %v2684 = vpop.f32.mrb[0].mxu0
  %2685 = vmatprep.mubr.f32.mxu0 0.0
  %2686 = vmatmul.mubr.f32.gmra.mrb[0].mxu0 %v2591
  %v2687 = vpop.f32.mrb[0].mxu0
  %v2688 = vadd.f32 %v2573, %v2687
  %v2689 = vpop.f32.mrb[0].mxu0
  %2690 = vmatprep.mubr.f32.mxu0 0.0
  %2691 = vmatmul.mubr.f32.gmra.mrb[0].mxu0 %v2594
  %v2692 = vpop.f32.mrb[0].mxu0
  %v2693 = vadd.f32 %v2573, %v2692
  %v2694 = vpop.f32.mrb[0].mxu0
  %2695 = vdwg.mxu0
  %vm2696 = vcmask 15360
  %2697 = vst.msk [vmem:[%s10] sm:$0xff] %vm2696, %v2663
  %2698 = vst.msk [vmem:[%s10 + $0x8] sm:$0xff] %vm2696, %v2668
  %2699 = vst.msk [vmem:[%s10 + $0x10] sm:$0xff] %vm2696, %v2673
  %2700 = vst.msk [vmem:[%s10 + $0x18] sm:$0xff] %vm2696, %v2678
  %2701 = vst.msk [vmem:[%s10 + $0x20] sm:$0xff] %vm2696, %v2683
  %2702 = vst.msk [vmem:[%s10 + $0x28] sm:$0xff] %vm2696, %v2688
  %2703 = vst.msk [vmem:[%s10 + $0x30] sm:$0xff] %vm2696, %v2693
  // Predicated region
  $region42: #{lstm_stack_forward.1} parent=0 // pred_check
    _
  $region43: #{lstm_stack_forward.1} parent=0 // pred_check_branch
    %2705 = sbr.rel (0) target = $region45
  $region44: #{lstm_stack_forward.1} parent=0 // pred_region
    _
  $region45: #{lstm_stack_forward.1} parent=0 // pred_fallthru
    _
  // Predicated region
  $region46: #{lstm_stack_forward.1} parent=0 // pred_check
    _
  $region47: #{lstm_stack_forward.1} parent=0 // pred_check_branch
    %2707 = sbr.rel (0) target = $region49
  $region48: #{lstm_stack_forward.1} parent=0 // pred_region
    _
  $region49: #{lstm_stack_forward.1} parent=0 // pred_fallthru
    _

</llo_original>
